<compile_context>
chip_gen: v7x
topology: tpu7x:2x2x1
jax: 0.10.0
libtpu: 0.0.40
codegen_flags: <defaults>
</compile_context>

<pallas_src>
import jax
import jax.numpy as jnp
from jax.experimental import pallas as pl
from jax.experimental.pallas import tpu as pltpu

INPUT_SIZE = 10
HIDDEN = 20
NUM_LAYERS = 3
NUM_KEYS = 5

H_PAD = 128     # lane-aligned hidden width; each gate occupies its own 128-lane block
K_PAD = 128     # lane-aligned fc output width
SUBLANE = 8


def _sigmoid(x):
    # tanh-based sigmoid: one EUP op instead of exp + f32 divide (VALU Newton iters).
    return 0.5 * (jnp.tanh(0.5 * x) + 1.0)


def lstm_seq_kernel(x_ref, w_ref, b_ref, fcw_ref, fcb_ref, out_ref):
    """Whole-sequence 3-layer LSTM + final Linear in a single invocation.

    x_ref  : (T, B_PAD, H_PAD)        time-major, feature/batch zero-padded input
    w_ref  : (L, 2*H_PAD, 4*H_PAD)    fused [W_ih ; W_hh], gate blocks 128-lane aligned
    b_ref  : (L, B_PAD, 4*H_PAD)      pre-broadcast combined bias (b_ih + b_hh)
    fcw_ref: (H_PAD, K_PAD)           padded fc weight (transposed)
    fcb_ref: (B_PAD, K_PAD)           pre-broadcast padded fc bias
    out_ref: (B_PAD, K_PAD)
    """
    T = x_ref.shape[0]
    B = x_ref.shape[1]
    HP = H_PAD

    h = [jnp.zeros((B, HP), jnp.float32) for _ in range(NUM_LAYERS)]
    c = [jnp.zeros((B, HP), jnp.float32) for _ in range(NUM_LAYERS)]

    layer_in = x_ref[0]
    # T and NUM_LAYERS are small compile-time constants -> fully unrolled static loop
    # (same effect as lax.fori_loop(0, T, ..., unroll=True)); no per-step grid overhead.
    for t in range(T):
        layer_in = x_ref[t]                                       # (B_PAD, H_PAD)
        for l in range(NUM_LAYERS):
            # concat lands exactly on a 128-lane boundary -> cheap copy, no rotate
            xin = jnp.concatenate([layer_in, h[l]], axis=1)       # (B_PAD, 2*H_PAD)
            gates = (jnp.dot(xin, w_ref[l], preferred_element_type=jnp.float32)
                     + b_ref[l])                                  # (B_PAD, 4*H_PAD)
            i_g = _sigmoid(gates[:, 0 * HP:1 * HP])
            f_g = _sigmoid(gates[:, 1 * HP:2 * HP])
            g_g = jnp.tanh(gates[:, 2 * HP:3 * HP])
            o_g = _sigmoid(gates[:, 3 * HP:4 * HP])
            c[l] = f_g * c[l] + i_g * g_g
            h[l] = o_g * jnp.tanh(c[l])
            layer_in = h[l]

    out_ref[...] = (jnp.dot(layer_in, fcw_ref[...],
                            preferred_element_type=jnp.float32)
                    + fcb_ref[...])


def _gate_pack_cols(m):
    """(rows, 4*HIDDEN) -> (rows, 4*H_PAD); gate k placed at cols [k*H_PAD, k*H_PAD+HIDDEN)."""
    rows = m.shape[0]
    out = jnp.zeros((rows, 4 * H_PAD), m.dtype)
    for k in range(4):
        out = out.at[:, k * H_PAD:k * H_PAD + HIDDEN].set(
            m[:, k * HIDDEN:(k + 1) * HIDDEN])
    return out


def model_forward(x, params):
    """x: (B, T, INPUT_SIZE) float32 -> (B, NUM_KEYS) float32."""
    B, T, _ = x.shape
    B_PAD = max(SUBLANE, ((B + SUBLANE - 1) // SUBLANE) * SUBLANE)

    # Input: time-major, features padded to H_PAD lanes, batch padded to B_PAD sublanes.
    x_pad = jnp.zeros((T, B_PAD, H_PAD), jnp.float32)
    x_pad = x_pad.at[:, :B, :INPUT_SIZE].set(jnp.transpose(x, (1, 0, 2)))

    w_stack, b_stack = [], []
    for l in range(NUM_LAYERS):
        w_ih, w_hh, b_ih, b_hh = params["layers"][l]
        in_sz = w_ih.shape[1]
        # Fused weight: rows [0, H_PAD) consume the layer input, rows [H_PAD, 2*H_PAD)
        # consume h_prev. Zero-padded rows/cols contribute nothing.
        w_full = jnp.zeros((2 * H_PAD, 4 * H_PAD), jnp.float32)
        w_full = w_full.at[:in_sz, :].set(_gate_pack_cols(w_ih.T))
        w_full = w_full.at[H_PAD:H_PAD + HIDDEN, :].set(_gate_pack_cols(w_hh.T))
        w_stack.append(w_full)
        b = _gate_pack_cols((b_ih + b_hh)[None, :])                    # (1, 4*H_PAD)
        b_stack.append(jnp.broadcast_to(b, (B_PAD, 4 * H_PAD)))        # hoisted broadcast
    w_s = jnp.stack(w_stack)   # (L, 2*H_PAD, 4*H_PAD)
    b_s = jnp.stack(b_stack)   # (L, B_PAD, 4*H_PAD)

    fcw = jnp.zeros((H_PAD, K_PAD), jnp.float32)
    fcw = fcw.at[:HIDDEN, :NUM_KEYS].set(params["fc_w"].T)
    fcb = jnp.zeros((K_PAD,), jnp.float32).at[:NUM_KEYS].set(params["fc_b"])
    fcb = jnp.broadcast_to(fcb[None, :], (B_PAD, K_PAD))

    out_pad = pl.pallas_call(
        lstm_seq_kernel,
        out_shape=jax.ShapeDtypeStruct((B_PAD, K_PAD), jnp.float32),
        grid_spec=pltpu.PrefetchScalarGridSpec(
            num_scalar_prefetch=0,
            grid=(1,),   # single invocation; whole sequence handled inside the kernel
            in_specs=[
                pl.BlockSpec((T, B_PAD, H_PAD), lambda i: (0, 0, 0)),               # x
                pl.BlockSpec((NUM_LAYERS, 2 * H_PAD, 4 * H_PAD), lambda i: (0, 0, 0)),  # W fused
                pl.BlockSpec((NUM_LAYERS, B_PAD, 4 * H_PAD), lambda i: (0, 0, 0)),  # bias
                pl.BlockSpec((H_PAD, K_PAD), lambda i: (0, 0)),                     # fc W
                pl.BlockSpec((B_PAD, K_PAD), lambda i: (0, 0)),                     # fc b
            ],
            out_specs=pl.BlockSpec((B_PAD, K_PAD), lambda i: (0, 0)),
        ),
        compiler_params=pltpu.CompilerParams(
            dimension_semantics=("arbitrary",)),
    )(x_pad, w_s, b_s, fcw, fcb)
    return out_pad[:B, :NUM_KEYS]


def model_forward_ref(x, params):
    """Pure-JAX reference matching PyTorch nn.LSTM + nn.Linear semantics."""
    B, T, _ = x.shape
    H = HIDDEN
    out = x
    for l in range(NUM_LAYERS):
        w_ih, w_hh, b_ih, b_hh = params["layers"][l]
        h = jnp.zeros((B, H), jnp.float32)
        c = jnp.zeros((B, H), jnp.float32)
        hs = []
        for t in range(T):
            gates = out[:, t, :] @ w_ih.T + b_ih + h @ w_hh.T + b_hh
            i_g = jax.nn.sigmoid(gates[:, 0 * H:1 * H])
            f_g = jax.nn.sigmoid(gates[:, 1 * H:2 * H])
            g_g = jnp.tanh(gates[:, 2 * H:3 * H])
            o_g = jax.nn.sigmoid(gates[:, 3 * H:4 * H])
            c = f_g * c + i_g * g_g
            h = o_g * jnp.tanh(c)
            hs.append(h)
        out = jnp.stack(hs, axis=1)
    last = out[:, -1, :]
    return last @ params["fc_w"].T + params["fc_b"]


def init_params(key):
    bound = 1.0 / float(jnp.sqrt(jnp.float32(HIDDEN)))
    keys = jax.random.split(key, NUM_LAYERS * 4 + 2)
    idx = 0
    layers = []
    for l in range(NUM_LAYERS):
        in_sz = INPUT_SIZE if l == 0 else HIDDEN
        w_ih = jax.random.uniform(keys[idx], (4 * HIDDEN, in_sz),
                                  minval=-bound, maxval=bound, dtype=jnp.float32); idx += 1
        w_hh = jax.random.uniform(keys[idx], (4 * HIDDEN, HIDDEN),
                                  minval=-bound, maxval=bound, dtype=jnp.float32); idx += 1
        b_ih = jax.random.uniform(keys[idx], (4 * HIDDEN,),
                                  minval=-bound, maxval=bound, dtype=jnp.float32); idx += 1
        b_hh = jax.random.uniform(keys[idx], (4 * HIDDEN,),
                                  minval=-bound, maxval=bound, dtype=jnp.float32); idx += 1
        layers.append((w_ih, w_hh, b_ih, b_hh))
    fc_w = jax.random.uniform(keys[idx], (NUM_KEYS, HIDDEN),
                              minval=-bound, maxval=bound, dtype=jnp.float32); idx += 1
    fc_b = jax.random.uniform(keys[idx], (NUM_KEYS,),
                              minval=-bound, maxval=bound, dtype=jnp.float32)
    return {"layers": layers, "fc_w": fc_w, "fc_b": fc_b}


if __name__ == "__main__":
    key = jax.random.PRNGKey(0)
    k_param, k_x = jax.random.split(key)
    params = init_params(k_param)

    B, T = 2, 8
    x = jax.random.normal(k_x, (B, T, INPUT_SIZE), dtype=jnp.float32)

    out = model_forward(x, params)
    out = jax.block_until_ready(out)

    ref = jax.block_until_ready(model_forward_ref(x, params))
    assert out.shape == (B, NUM_KEYS)
    assert jnp.allclose(out, ref, rtol=1e-3, atol=1e-3), (out, ref)

    print("KERNEL_OK")
</pallas_src>

<mosaic_0001>
module attributes {stable_mosaic.version = 11 : i64} {
  func.func @lstm_seq_kernel(%arg0: i32, %arg1: memref<8x8x128xf32, #tpu.memory_space<vmem>>, %arg2: memref<3x256x512xf32, #tpu.memory_space<vmem>>, %arg3: memref<3x8x512xf32, #tpu.memory_space<vmem>>, %arg4: memref<128x128xf32, #tpu.memory_space<vmem>>, %arg5: memref<8x128xf32, #tpu.memory_space<vmem>>, %arg6: memref<8x128xf32, #tpu.memory_space<vmem>>) attributes {dimension_semantics = [#tpu.dimension_semantics<arbitrary>], iteration_bounds = array<i64: 1>, scalar_prefetch = 0 : i64, scratch_operands = 0 : i64, tpu.core_type = #tpu.core_type<tc>, window_params = [{pipeline_mode = #tpu.pipeline_mode<synchronous>, transform_indices = @transform_0, window_bounds = array<i64: 8, 8, 128>}, {pipeline_mode = #tpu.pipeline_mode<synchronous>, transform_indices = @transform_1, window_bounds = array<i64: 3, 256, 512>}, {pipeline_mode = #tpu.pipeline_mode<synchronous>, transform_indices = @transform_2, window_bounds = array<i64: 3, 8, 512>}, {pipeline_mode = #tpu.pipeline_mode<synchronous>, transform_indices = @transform_3, window_bounds = array<i64: 128, 128>}, {pipeline_mode = #tpu.pipeline_mode<synchronous>, transform_indices = @transform_4, window_bounds = array<i64: 8, 128>}, {pipeline_mode = #tpu.pipeline_mode<synchronous>, transform_indices = @transform_5, window_bounds = array<i64: 8, 128>}]} {
    %cst = arith.constant 0.000000e+00 : f32
    %0 = vector.broadcast %cst : f32 to vector<8x128xf32>
    %cst_0 = arith.constant 0.000000e+00 : f32
    %1 = vector.broadcast %cst_0 : f32 to vector<8x128xf32>
    %cst_1 = arith.constant 0.000000e+00 : f32
    %2 = vector.broadcast %cst_1 : f32 to vector<8x128xf32>
    %cst_2 = arith.constant 0.000000e+00 : f32
    %3 = vector.broadcast %cst_2 : f32 to vector<8x128xf32>
    %cst_3 = arith.constant 0.000000e+00 : f32
    %4 = vector.broadcast %cst_3 : f32 to vector<8x128xf32>
    %cst_4 = arith.constant 0.000000e+00 : f32
    %5 = vector.broadcast %cst_4 : f32 to vector<8x128xf32>
    %c0 = arith.constant 0 : index
    %c0_5 = arith.constant 0 : index
    %c0_6 = arith.constant 0 : index
    %6 = vector.load %arg1[%c0, %c0_5, %c0_6] : memref<8x8x128xf32, #tpu.memory_space<vmem>>, vector<1x8x128xf32>
    %7 = vector.shape_cast %6 : vector<1x8x128xf32> to vector<8x128xf32>
    %8 = tpu.concatenate %7, %0 in 1 : vector<8x128xf32>, vector<8x128xf32> -> vector<8x256xf32>
    %c0_7 = arith.constant 0 : index
    %c0_8 = arith.constant 0 : index
    %c0_9 = arith.constant 0 : index
    %9 = vector.load %arg2[%c0_7, %c0_8, %c0_9] : memref<3x256x512xf32, #tpu.memory_space<vmem>>, vector<1x256x512xf32>
    %10 = vector.shape_cast %9 : vector<1x256x512xf32> to vector<256x512xf32>
    %cst_10 = arith.constant dense<0.000000e+00> : vector<8x512xf32>
    %11 = tpu.matmul %8, %10, %cst_10 {dimension_numbers = #tpu.dot_dimension_numbers<[1], [0], [0], [1], [0, 0, 1, 1], [], []>} : vector<8x256xf32>, vector<256x512xf32>, vector<8x512xf32> -> vector<8x512xf32>
    %c0_11 = arith.constant 0 : index
    %c0_12 = arith.constant 0 : index
    %c0_13 = arith.constant 0 : index
    %12 = vector.load %arg3[%c0_11, %c0_12, %c0_13] : memref<3x8x512xf32, #tpu.memory_space<vmem>>, vector<1x8x512xf32>
    %13 = vector.shape_cast %12 : vector<1x8x512xf32> to vector<8x512xf32>
    %14 = arith.addf %11, %13 : vector<8x512xf32>
    %15 = vector.extract_strided_slice %14 {offsets = [0, 0], sizes = [8, 128], strides = [1, 1]} : vector<8x512xf32> to vector<8x128xf32>
    %cst_14 = arith.constant 5.000000e-01 : f32
    %16 = vector.broadcast %cst_14 : f32 to vector<8x128xf32>
    %17 = arith.mulf %16, %15 : vector<8x128xf32>
    %18 = math.tanh %17 : vector<8x128xf32>
    %cst_15 = arith.constant 1.000000e+00 : f32
    %19 = vector.broadcast %cst_15 : f32 to vector<8x128xf32>
    %20 = arith.addf %18, %19 : vector<8x128xf32>
    %cst_16 = arith.constant 5.000000e-01 : f32
    %21 = vector.broadcast %cst_16 : f32 to vector<8x128xf32>
    %22 = arith.mulf %21, %20 : vector<8x128xf32>
    %23 = vector.extract_strided_slice %14 {offsets = [0, 128], sizes = [8, 128], strides = [1, 1]} : vector<8x512xf32> to vector<8x128xf32>
    %cst_17 = arith.constant 5.000000e-01 : f32
    %24 = vector.broadcast %cst_17 : f32 to vector<8x128xf32>
    %25 = arith.mulf %24, %23 : vector<8x128xf32>
    %26 = math.tanh %25 : vector<8x128xf32>
    %cst_18 = arith.constant 1.000000e+00 : f32
    %27 = vector.broadcast %cst_18 : f32 to vector<8x128xf32>
    %28 = arith.addf %26, %27 : vector<8x128xf32>
    %cst_19 = arith.constant 5.000000e-01 : f32
    %29 = vector.broadcast %cst_19 : f32 to vector<8x128xf32>
    %30 = arith.mulf %29, %28 : vector<8x128xf32>
    %31 = vector.extract_strided_slice %14 {offsets = [0, 256], sizes = [8, 128], strides = [1, 1]} : vector<8x512xf32> to vector<8x128xf32>
    %32 = math.tanh %31 : vector<8x128xf32>
    %33 = vector.extract_strided_slice %14 {offsets = [0, 384], sizes = [8, 128], strides = [1, 1]} : vector<8x512xf32> to vector<8x128xf32>
    %cst_20 = arith.constant 5.000000e-01 : f32
    %34 = vector.broadcast %cst_20 : f32 to vector<8x128xf32>
    %35 = arith.mulf %34, %33 : vector<8x128xf32>
    %36 = math.tanh %35 : vector<8x128xf32>
    %cst_21 = arith.constant 1.000000e+00 : f32
    %37 = vector.broadcast %cst_21 : f32 to vector<8x128xf32>
    %38 = arith.addf %36, %37 : vector<8x128xf32>
    %cst_22 = arith.constant 5.000000e-01 : f32
    %39 = vector.broadcast %cst_22 : f32 to vector<8x128xf32>
    %40 = arith.mulf %39, %38 : vector<8x128xf32>
    %41 = arith.mulf %30, %3 : vector<8x128xf32>
    %42 = arith.mulf %22, %32 : vector<8x128xf32>
    %43 = arith.addf %41, %42 : vector<8x128xf32>
    %44 = math.tanh %43 : vector<8x128xf32>
    %45 = arith.mulf %40, %44 : vector<8x128xf32>
    %46 = tpu.concatenate %45, %1 in 1 : vector<8x128xf32>, vector<8x128xf32> -> vector<8x256xf32>
    %c1 = arith.constant 1 : index
    %c0_23 = arith.constant 0 : index
    %c0_24 = arith.constant 0 : index
    %47 = vector.load %arg2[%c1, %c0_23, %c0_24] : memref<3x256x512xf32, #tpu.memory_space<vmem>>, vector<1x256x512xf32>
    %48 = vector.shape_cast %47 : vector<1x256x512xf32> to vector<256x512xf32>
    %cst_25 = arith.constant dense<0.000000e+00> : vector<8x512xf32>
    %49 = tpu.matmul %46, %48, %cst_25 {dimension_numbers = #tpu.dot_dimension_numbers<[1], [0], [0], [1], [0, 0, 1, 1], [], []>} : vector<8x256xf32>, vector<256x512xf32>, vector<8x512xf32> -> vector<8x512xf32>
    %c1_26 = arith.constant 1 : index
    %c0_27 = arith.constant 0 : index
    %c0_28 = arith.constant 0 : index
    %50 = vector.load %arg3[%c1_26, %c0_27, %c0_28] : memref<3x8x512xf32, #tpu.memory_space<vmem>>, vector<1x8x512xf32>
    %51 = vector.shape_cast %50 : vector<1x8x512xf32> to vector<8x512xf32>
    %52 = arith.addf %49, %51 : vector<8x512xf32>
    %53 = vector.extract_strided_slice %52 {offsets = [0, 0], sizes = [8, 128], strides = [1, 1]} : vector<8x512xf32> to vector<8x128xf32>
    %cst_29 = arith.constant 5.000000e-01 : f32
    %54 = vector.broadcast %cst_29 : f32 to vector<8x128xf32>
    %55 = arith.mulf %54, %53 : vector<8x128xf32>
    %56 = math.tanh %55 : vector<8x128xf32>
    %cst_30 = arith.constant 1.000000e+00 : f32
    %57 = vector.broadcast %cst_30 : f32 to vector<8x128xf32>
    %58 = arith.addf %56, %57 : vector<8x128xf32>
    %cst_31 = arith.constant 5.000000e-01 : f32
    %59 = vector.broadcast %cst_31 : f32 to vector<8x128xf32>
    %60 = arith.mulf %59, %58 : vector<8x128xf32>
    %61 = vector.extract_strided_slice %52 {offsets = [0, 128], sizes = [8, 128], strides = [1, 1]} : vector<8x512xf32> to vector<8x128xf32>
    %cst_32 = arith.constant 5.000000e-01 : f32
    %62 = vector.broadcast %cst_32 : f32 to vector<8x128xf32>
    %63 = arith.mulf %62, %61 : vector<8x128xf32>
    %64 = math.tanh %63 : vector<8x128xf32>
    %cst_33 = arith.constant 1.000000e+00 : f32
    %65 = vector.broadcast %cst_33 : f32 to vector<8x128xf32>
    %66 = arith.addf %64, %65 : vector<8x128xf32>
    %cst_34 = arith.constant 5.000000e-01 : f32
    %67 = vector.broadcast %cst_34 : f32 to vector<8x128xf32>
    %68 = arith.mulf %67, %66 : vector<8x128xf32>
    %69 = vector.extract_strided_slice %52 {offsets = [0, 256], sizes = [8, 128], strides = [1, 1]} : vector<8x512xf32> to vector<8x128xf32>
    %70 = math.tanh %69 : vector<8x128xf32>
    %71 = vector.extract_strided_slice %52 {offsets = [0, 384], sizes = [8, 128], strides = [1, 1]} : vector<8x512xf32> to vector<8x128xf32>
    %cst_35 = arith.constant 5.000000e-01 : f32
    %72 = vector.broadcast %cst_35 : f32 to vector<8x128xf32>
    %73 = arith.mulf %72, %71 : vector<8x128xf32>
    %74 = math.tanh %73 : vector<8x128xf32>
    %cst_36 = arith.constant 1.000000e+00 : f32
    %75 = vector.broadcast %cst_36 : f32 to vector<8x128xf32>
    %76 = arith.addf %74, %75 : vector<8x128xf32>
    %cst_37 = arith.constant 5.000000e-01 : f32
    %77 = vector.broadcast %cst_37 : f32 to vector<8x128xf32>
    %78 = arith.mulf %77, %76 : vector<8x128xf32>
    %79 = arith.mulf %68, %4 : vector<8x128xf32>
    %80 = arith.mulf %60, %70 : vector<8x128xf32>
    %81 = arith.addf %79, %80 : vector<8x128xf32>
    %82 = math.tanh %81 : vector<8x128xf32>
    %83 = arith.mulf %78, %82 : vector<8x128xf32>
    %84 = tpu.concatenate %83, %2 in 1 : vector<8x128xf32>, vector<8x128xf32> -> vector<8x256xf32>
    %c2 = arith.constant 2 : index
    %c0_38 = arith.constant 0 : index
    %c0_39 = arith.constant 0 : index
    %85 = vector.load %arg2[%c2, %c0_38, %c0_39] : memref<3x256x512xf32, #tpu.memory_space<vmem>>, vector<1x256x512xf32>
    %86 = vector.shape_cast %85 : vector<1x256x512xf32> to vector<256x512xf32>
    %cst_40 = arith.constant dense<0.000000e+00> : vector<8x512xf32>
    %87 = tpu.matmul %84, %86, %cst_40 {dimension_numbers = #tpu.dot_dimension_numbers<[1], [0], [0], [1], [0, 0, 1, 1], [], []>} : vector<8x256xf32>, vector<256x512xf32>, vector<8x512xf32> -> vector<8x512xf32>
    %c2_41 = arith.constant 2 : index
    %c0_42 = arith.constant 0 : index
    %c0_43 = arith.constant 0 : index
    %88 = vector.load %arg3[%c2_41, %c0_42, %c0_43] : memref<3x8x512xf32, #tpu.memory_space<vmem>>, vector<1x8x512xf32>
    %89 = vector.shape_cast %88 : vector<1x8x512xf32> to vector<8x512xf32>
    %90 = arith.addf %87, %89 : vector<8x512xf32>
    %91 = vector.extract_strided_slice %90 {offsets = [0, 0], sizes = [8, 128], strides = [1, 1]} : vector<8x512xf32> to vector<8x128xf32>
    %cst_44 = arith.constant 5.000000e-01 : f32
    %92 = vector.broadcast %cst_44 : f32 to vector<8x128xf32>
    %93 = arith.mulf %92, %91 : vector<8x128xf32>
    %94 = math.tanh %93 : vector<8x128xf32>
    %cst_45 = arith.constant 1.000000e+00 : f32
    %95 = vector.broadcast %cst_45 : f32 to vector<8x128xf32>
    %96 = arith.addf %94, %95 : vector<8x128xf32>
    %cst_46 = arith.constant 5.000000e-01 : f32
    %97 = vector.broadcast %cst_46 : f32 to vector<8x128xf32>
    %98 = arith.mulf %97, %96 : vector<8x128xf32>
    %99 = vector.extract_strided_slice %90 {offsets = [0, 128], sizes = [8, 128], strides = [1, 1]} : vector<8x512xf32> to vector<8x128xf32>
    %cst_47 = arith.constant 5.000000e-01 : f32
    %100 = vector.broadcast %cst_47 : f32 to vector<8x128xf32>
    %101 = arith.mulf %100, %99 : vector<8x128xf32>
    %102 = math.tanh %101 : vector<8x128xf32>
    %cst_48 = arith.constant 1.000000e+00 : f32
    %103 = vector.broadcast %cst_48 : f32 to vector<8x128xf32>
    %104 = arith.addf %102, %103 : vector<8x128xf32>
    %cst_49 = arith.constant 5.000000e-01 : f32
    %105 = vector.broadcast %cst_49 : f32 to vector<8x128xf32>
    %106 = arith.mulf %105, %104 : vector<8x128xf32>
    %107 = vector.extract_strided_slice %90 {offsets = [0, 256], sizes = [8, 128], strides = [1, 1]} : vector<8x512xf32> to vector<8x128xf32>
    %108 = math.tanh %107 : vector<8x128xf32>
    %109 = vector.extract_strided_slice %90 {offsets = [0, 384], sizes = [8, 128], strides = [1, 1]} : vector<8x512xf32> to vector<8x128xf32>
    %cst_50 = arith.constant 5.000000e-01 : f32
    %110 = vector.broadcast %cst_50 : f32 to vector<8x128xf32>
    %111 = arith.mulf %110, %109 : vector<8x128xf32>
    %112 = math.tanh %111 : vector<8x128xf32>
    %cst_51 = arith.constant 1.000000e+00 : f32
    %113 = vector.broadcast %cst_51 : f32 to vector<8x128xf32>
    %114 = arith.addf %112, %113 : vector<8x128xf32>
    %cst_52 = arith.constant 5.000000e-01 : f32
    %115 = vector.broadcast %cst_52 : f32 to vector<8x128xf32>
    %116 = arith.mulf %115, %114 : vector<8x128xf32>
    %117 = arith.mulf %106, %5 : vector<8x128xf32>
    %118 = arith.mulf %98, %108 : vector<8x128xf32>
    %119 = arith.addf %117, %118 : vector<8x128xf32>
    %120 = math.tanh %119 : vector<8x128xf32>
    %121 = arith.mulf %116, %120 : vector<8x128xf32>
    %c1_53 = arith.constant 1 : index
    %c0_54 = arith.constant 0 : index
    %c0_55 = arith.constant 0 : index
    %122 = vector.load %arg1[%c1_53, %c0_54, %c0_55] : memref<8x8x128xf32, #tpu.memory_space<vmem>>, vector<1x8x128xf32>
    %123 = vector.shape_cast %122 : vector<1x8x128xf32> to vector<8x128xf32>
    %124 = tpu.concatenate %123, %45 in 1 : vector<8x128xf32>, vector<8x128xf32> -> vector<8x256xf32>
    %c0_56 = arith.constant 0 : index
    %c0_57 = arith.constant 0 : index
    %c0_58 = arith.constant 0 : index
    %125 = vector.load %arg2[%c0_56, %c0_57, %c0_58] : memref<3x256x512xf32, #tpu.memory_space<vmem>>, vector<1x256x512xf32>
    %126 = vector.shape_cast %125 : vector<1x256x512xf32> to vector<256x512xf32>
    %cst_59 = arith.constant dense<0.000000e+00> : vector<8x512xf32>
    %127 = tpu.matmul %124, %126, %cst_59 {dimension_numbers = #tpu.dot_dimension_numbers<[1], [0], [0], [1], [0, 0, 1, 1], [], []>} : vector<8x256xf32>, vector<256x512xf32>, vector<8x512xf32> -> vector<8x512xf32>
    %c0_60 = arith.constant 0 : index
    %c0_61 = arith.constant 0 : index
    %c0_62 = arith.constant 0 : index
    %128 = vector.load %arg3[%c0_60, %c0_61, %c0_62] : memref<3x8x512xf32, #tpu.memory_space<vmem>>, vector<1x8x512xf32>
    %129 = vector.shape_cast %128 : vector<1x8x512xf32> to vector<8x512xf32>
    %130 = arith.addf %127, %129 : vector<8x512xf32>
    %131 = vector.extract_strided_slice %130 {offsets = [0, 0], sizes = [8, 128], strides = [1, 1]} : vector<8x512xf32> to vector<8x128xf32>
    %cst_63 = arith.constant 5.000000e-01 : f32
    %132 = vector.broadcast %cst_63 : f32 to vector<8x128xf32>
    %133 = arith.mulf %132, %131 : vector<8x128xf32>
    %134 = math.tanh %133 : vector<8x128xf32>
    %cst_64 = arith.constant 1.000000e+00 : f32
    %135 = vector.broadcast %cst_64 : f32 to vector<8x128xf32>
    %136 = arith.addf %134, %135 : vector<8x128xf32>
    %cst_65 = arith.constant 5.000000e-01 : f32
    %137 = vector.broadcast %cst_65 : f32 to vector<8x128xf32>
    %138 = arith.mulf %137, %136 : vector<8x128xf32>
    %139 = vector.extract_strided_slice %130 {offsets = [0, 128], sizes = [8, 128], strides = [1, 1]} : vector<8x512xf32> to vector<8x128xf32>
    %cst_66 = arith.constant 5.000000e-01 : f32
    %140 = vector.broadcast %cst_66 : f32 to vector<8x128xf32>
    %141 = arith.mulf %140, %139 : vector<8x128xf32>
    %142 = math.tanh %141 : vector<8x128xf32>
    %cst_67 = arith.constant 1.000000e+00 : f32
    %143 = vector.broadcast %cst_67 : f32 to vector<8x128xf32>
    %144 = arith.addf %142, %143 : vector<8x128xf32>
    %cst_68 = arith.constant 5.000000e-01 : f32
    %145 = vector.broadcast %cst_68 : f32 to vector<8x128xf32>
    %146 = arith.mulf %145, %144 : vector<8x128xf32>
    %147 = vector.extract_strided_slice %130 {offsets = [0, 256], sizes = [8, 128], strides = [1, 1]} : vector<8x512xf32> to vector<8x128xf32>
    %148 = math.tanh %147 : vector<8x128xf32>
    %149 = vector.extract_strided_slice %130 {offsets = [0, 384], sizes = [8, 128], strides = [1, 1]} : vector<8x512xf32> to vector<8x128xf32>
    %cst_69 = arith.constant 5.000000e-01 : f32
    %150 = vector.broadcast %cst_69 : f32 to vector<8x128xf32>
    %151 = arith.mulf %150, %149 : vector<8x128xf32>
    %152 = math.tanh %151 : vector<8x128xf32>
    %cst_70 = arith.constant 1.000000e+00 : f32
    %153 = vector.broadcast %cst_70 : f32 to vector<8x128xf32>
    %154 = arith.addf %152, %153 : vector<8x128xf32>
    %cst_71 = arith.constant 5.000000e-01 : f32
    %155 = vector.broadcast %cst_71 : f32 to vector<8x128xf32>
    %156 = arith.mulf %155, %154 : vector<8x128xf32>
    %157 = arith.mulf %146, %43 : vector<8x128xf32>
    %158 = arith.mulf %138, %148 : vector<8x128xf32>
    %159 = arith.addf %157, %158 : vector<8x128xf32>
    %160 = math.tanh %159 : vector<8x128xf32>
    %161 = arith.mulf %156, %160 : vector<8x128xf32>
    %162 = tpu.concatenate %161, %83 in 1 : vector<8x128xf32>, vector<8x128xf32> -> vector<8x256xf32>
    %c1_72 = arith.constant 1 : index
    %c0_73 = arith.constant 0 : index
    %c0_74 = arith.constant 0 : index
    %163 = vector.load %arg2[%c1_72, %c0_73, %c0_74] : memref<3x256x512xf32, #tpu.memory_space<vmem>>, vector<1x256x512xf32>
    %164 = vector.shape_cast %163 : vector<1x256x512xf32> to vector<256x512xf32>
    %cst_75 = arith.constant dense<0.000000e+00> : vector<8x512xf32>
    %165 = tpu.matmul %162, %164, %cst_75 {dimension_numbers = #tpu.dot_dimension_numbers<[1], [0], [0], [1], [0, 0, 1, 1], [], []>} : vector<8x256xf32>, vector<256x512xf32>, vector<8x512xf32> -> vector<8x512xf32>
    %c1_76 = arith.constant 1 : index
    %c0_77 = arith.constant 0 : index
    %c0_78 = arith.constant 0 : index
    %166 = vector.load %arg3[%c1_76, %c0_77, %c0_78] : memref<3x8x512xf32, #tpu.memory_space<vmem>>, vector<1x8x512xf32>
    %167 = vector.shape_cast %166 : vector<1x8x512xf32> to vector<8x512xf32>
    %168 = arith.addf %165, %167 : vector<8x512xf32>
    %169 = vector.extract_strided_slice %168 {offsets = [0, 0], sizes = [8, 128], strides = [1, 1]} : vector<8x512xf32> to vector<8x128xf32>
    %cst_79 = arith.constant 5.000000e-01 : f32
    %170 = vector.broadcast %cst_79 : f32 to vector<8x128xf32>
    %171 = arith.mulf %170, %169 : vector<8x128xf32>
    %172 = math.tanh %171 : vector<8x128xf32>
    %cst_80 = arith.constant 1.000000e+00 : f32
    %173 = vector.broadcast %cst_80 : f32 to vector<8x128xf32>
    %174 = arith.addf %172, %173 : vector<8x128xf32>
    %cst_81 = arith.constant 5.000000e-01 : f32
    %175 = vector.broadcast %cst_81 : f32 to vector<8x128xf32>
    %176 = arith.mulf %175, %174 : vector<8x128xf32>
    %177 = vector.extract_strided_slice %168 {offsets = [0, 128], sizes = [8, 128], strides = [1, 1]} : vector<8x512xf32> to vector<8x128xf32>
    %cst_82 = arith.constant 5.000000e-01 : f32
    %178 = vector.broadcast %cst_82 : f32 to vector<8x128xf32>
    %179 = arith.mulf %178, %177 : vector<8x128xf32>
    %180 = math.tanh %179 : vector<8x128xf32>
    %cst_83 = arith.constant 1.000000e+00 : f32
    %181 = vector.broadcast %cst_83 : f32 to vector<8x128xf32>
    %182 = arith.addf %180, %181 : vector<8x128xf32>
    %cst_84 = arith.constant 5.000000e-01 : f32
    %183 = vector.broadcast %cst_84 : f32 to vector<8x128xf32>
    %184 = arith.mulf %183, %182 : vector<8x128xf32>
    %185 = vector.extract_strided_slice %168 {offsets = [0, 256], sizes = [8, 128], strides = [1, 1]} : vector<8x512xf32> to vector<8x128xf32>
    %186 = math.tanh %185 : vector<8x128xf32>
    %187 = vector.extract_strided_slice %168 {offsets = [0, 384], sizes = [8, 128], strides = [1, 1]} : vector<8x512xf32> to vector<8x128xf32>
    %cst_85 = arith.constant 5.000000e-01 : f32
    %188 = vector.broadcast %cst_85 : f32 to vector<8x128xf32>
    %189 = arith.mulf %188, %187 : vector<8x128xf32>
    %190 = math.tanh %189 : vector<8x128xf32>
    %cst_86 = arith.constant 1.000000e+00 : f32
    %191 = vector.broadcast %cst_86 : f32 to vector<8x128xf32>
    %192 = arith.addf %190, %191 : vector<8x128xf32>
    %cst_87 = arith.constant 5.000000e-01 : f32
    %193 = vector.broadcast %cst_87 : f32 to vector<8x128xf32>
    %194 = arith.mulf %193, %192 : vector<8x128xf32>
    %195 = arith.mulf %184, %81 : vector<8x128xf32>
    %196 = arith.mulf %176, %186 : vector<8x128xf32>
    %197 = arith.addf %195, %196 : vector<8x128xf32>
    %198 = math.tanh %197 : vector<8x128xf32>
    %199 = arith.mulf %194, %198 : vector<8x128xf32>
    %200 = tpu.concatenate %199, %121 in 1 : vector<8x128xf32>, vector<8x128xf32> -> vector<8x256xf32>
    %c2_88 = arith.constant 2 : index
    %c0_89 = arith.constant 0 : index
    %c0_90 = arith.constant 0 : index
    %201 = vector.load %arg2[%c2_88, %c0_89, %c0_90] : memref<3x256x512xf32, #tpu.memory_space<vmem>>, vector<1x256x512xf32>
    %202 = vector.shape_cast %201 : vector<1x256x512xf32> to vector<256x512xf32>
    %cst_91 = arith.constant dense<0.000000e+00> : vector<8x512xf32>
    %203 = tpu.matmul %200, %202, %cst_91 {dimension_numbers = #tpu.dot_dimension_numbers<[1], [0], [0], [1], [0, 0, 1, 1], [], []>} : vector<8x256xf32>, vector<256x512xf32>, vector<8x512xf32> -> vector<8x512xf32>
    %c2_92 = arith.constant 2 : index
    %c0_93 = arith.constant 0 : index
    %c0_94 = arith.constant 0 : index
    %204 = vector.load %arg3[%c2_92, %c0_93, %c0_94] : memref<3x8x512xf32, #tpu.memory_space<vmem>>, vector<1x8x512xf32>
    %205 = vector.shape_cast %204 : vector<1x8x512xf32> to vector<8x512xf32>
    %206 = arith.addf %203, %205 : vector<8x512xf32>
    %207 = vector.extract_strided_slice %206 {offsets = [0, 0], sizes = [8, 128], strides = [1, 1]} : vector<8x512xf32> to vector<8x128xf32>
    %cst_95 = arith.constant 5.000000e-01 : f32
    %208 = vector.broadcast %cst_95 : f32 to vector<8x128xf32>
    %209 = arith.mulf %208, %207 : vector<8x128xf32>
    %210 = math.tanh %209 : vector<8x128xf32>
    %cst_96 = arith.constant 1.000000e+00 : f32
    %211 = vector.broadcast %cst_96 : f32 to vector<8x128xf32>
    %212 = arith.addf %210, %211 : vector<8x128xf32>
    %cst_97 = arith.constant 5.000000e-01 : f32
    %213 = vector.broadcast %cst_97 : f32 to vector<8x128xf32>
    %214 = arith.mulf %213, %212 : vector<8x128xf32>
    %215 = vector.extract_strided_slice %206 {offsets = [0, 128], sizes = [8, 128], strides = [1, 1]} : vector<8x512xf32> to vector<8x128xf32>
    %cst_98 = arith.constant 5.000000e-01 : f32
    %216 = vector.broadcast %cst_98 : f32 to vector<8x128xf32>
    %217 = arith.mulf %216, %215 : vector<8x128xf32>
    %218 = math.tanh %217 : vector<8x128xf32>
    %cst_99 = arith.constant 1.000000e+00 : f32
    %219 = vector.broadcast %cst_99 : f32 to vector<8x128xf32>
    %220 = arith.addf %218, %219 : vector<8x128xf32>
    %cst_100 = arith.constant 5.000000e-01 : f32
    %221 = vector.broadcast %cst_100 : f32 to vector<8x128xf32>
    %222 = arith.mulf %221, %220 : vector<8x128xf32>
    %223 = vector.extract_strided_slice %206 {offsets = [0, 256], sizes = [8, 128], strides = [1, 1]} : vector<8x512xf32> to vector<8x128xf32>
    %224 = math.tanh %223 : vector<8x128xf32>
    %225 = vector.extract_strided_slice %206 {offsets = [0, 384], sizes = [8, 128], strides = [1, 1]} : vector<8x512xf32> to vector<8x128xf32>
    %cst_101 = arith.constant 5.000000e-01 : f32
    %226 = vector.broadcast %cst_101 : f32 to vector<8x128xf32>
    %227 = arith.mulf %226, %225 : vector<8x128xf32>
    %228 = math.tanh %227 : vector<8x128xf32>
    %cst_102 = arith.constant 1.000000e+00 : f32
    %229 = vector.broadcast %cst_102 : f32 to vector<8x128xf32>
    %230 = arith.addf %228, %229 : vector<8x128xf32>
    %cst_103 = arith.constant 5.000000e-01 : f32
    %231 = vector.broadcast %cst_103 : f32 to vector<8x128xf32>
    %232 = arith.mulf %231, %230 : vector<8x128xf32>
    %233 = arith.mulf %222, %119 : vector<8x128xf32>
    %234 = arith.mulf %214, %224 : vector<8x128xf32>
    %235 = arith.addf %233, %234 : vector<8x128xf32>
    %236 = math.tanh %235 : vector<8x128xf32>
    %237 = arith.mulf %232, %236 : vector<8x128xf32>
    %c2_104 = arith.constant 2 : index
    %c0_105 = arith.constant 0 : index
    %c0_106 = arith.constant 0 : index
    %238 = vector.load %arg1[%c2_104, %c0_105, %c0_106] : memref<8x8x128xf32, #tpu.memory_space<vmem>>, vector<1x8x128xf32>
    %239 = vector.shape_cast %238 : vector<1x8x128xf32> to vector<8x128xf32>
    %240 = tpu.concatenate %239, %161 in 1 : vector<8x128xf32>, vector<8x128xf32> -> vector<8x256xf32>
    %c0_107 = arith.constant 0 : index
    %c0_108 = arith.constant 0 : index
    %c0_109 = arith.constant 0 : index
    %241 = vector.load %arg2[%c0_107, %c0_108, %c0_109] : memref<3x256x512xf32, #tpu.memory_space<vmem>>, vector<1x256x512xf32>
    %242 = vector.shape_cast %241 : vector<1x256x512xf32> to vector<256x512xf32>
    %cst_110 = arith.constant dense<0.000000e+00> : vector<8x512xf32>
    %243 = tpu.matmul %240, %242, %cst_110 {dimension_numbers = #tpu.dot_dimension_numbers<[1], [0], [0], [1], [0, 0, 1, 1], [], []>} : vector<8x256xf32>, vector<256x512xf32>, vector<8x512xf32> -> vector<8x512xf32>
    %c0_111 = arith.constant 0 : index
    %c0_112 = arith.constant 0 : index
    %c0_113 = arith.constant 0 : index
    %244 = vector.load %arg3[%c0_111, %c0_112, %c0_113] : memref<3x8x512xf32, #tpu.memory_space<vmem>>, vector<1x8x512xf32>
    %245 = vector.shape_cast %244 : vector<1x8x512xf32> to vector<8x512xf32>
    %246 = arith.addf %243, %245 : vector<8x512xf32>
    %247 = vector.extract_strided_slice %246 {offsets = [0, 0], sizes = [8, 128], strides = [1, 1]} : vector<8x512xf32> to vector<8x128xf32>
    %cst_114 = arith.constant 5.000000e-01 : f32
    %248 = vector.broadcast %cst_114 : f32 to vector<8x128xf32>
    %249 = arith.mulf %248, %247 : vector<8x128xf32>
    %250 = math.tanh %249 : vector<8x128xf32>
    %cst_115 = arith.constant 1.000000e+00 : f32
    %251 = vector.broadcast %cst_115 : f32 to vector<8x128xf32>
    %252 = arith.addf %250, %251 : vector<8x128xf32>
    %cst_116 = arith.constant 5.000000e-01 : f32
    %253 = vector.broadcast %cst_116 : f32 to vector<8x128xf32>
    %254 = arith.mulf %253, %252 : vector<8x128xf32>
    %255 = vector.extract_strided_slice %246 {offsets = [0, 128], sizes = [8, 128], strides = [1, 1]} : vector<8x512xf32> to vector<8x128xf32>
    %cst_117 = arith.constant 5.000000e-01 : f32
    %256 = vector.broadcast %cst_117 : f32 to vector<8x128xf32>
    %257 = arith.mulf %256, %255 : vector<8x128xf32>
    %258 = math.tanh %257 : vector<8x128xf32>
    %cst_118 = arith.constant 1.000000e+00 : f32
    %259 = vector.broadcast %cst_118 : f32 to vector<8x128xf32>
    %260 = arith.addf %258, %259 : vector<8x128xf32>
    %cst_119 = arith.constant 5.000000e-01 : f32
    %261 = vector.broadcast %cst_119 : f32 to vector<8x128xf32>
    %262 = arith.mulf %261, %260 : vector<8x128xf32>
    %263 = vector.extract_strided_slice %246 {offsets = [0, 256], sizes = [8, 128], strides = [1, 1]} : vector<8x512xf32> to vector<8x128xf32>
    %264 = math.tanh %263 : vector<8x128xf32>
    %265 = vector.extract_strided_slice %246 {offsets = [0, 384], sizes = [8, 128], strides = [1, 1]} : vector<8x512xf32> to vector<8x128xf32>
    %cst_120 = arith.constant 5.000000e-01 : f32
    %266 = vector.broadcast %cst_120 : f32 to vector<8x128xf32>
    %267 = arith.mulf %266, %265 : vector<8x128xf32>
    %268 = math.tanh %267 : vector<8x128xf32>
    %cst_121 = arith.constant 1.000000e+00 : f32
    %269 = vector.broadcast %cst_121 : f32 to vector<8x128xf32>
    %270 = arith.addf %268, %269 : vector<8x128xf32>
    %cst_122 = arith.constant 5.000000e-01 : f32
    %271 = vector.broadcast %cst_122 : f32 to vector<8x128xf32>
    %272 = arith.mulf %271, %270 : vector<8x128xf32>
    %273 = arith.mulf %262, %159 : vector<8x128xf32>
    %274 = arith.mulf %254, %264 : vector<8x128xf32>
    %275 = arith.addf %273, %274 : vector<8x128xf32>
    %276 = math.tanh %275 : vector<8x128xf32>
    %277 = arith.mulf %272, %276 : vector<8x128xf32>
    %278 = tpu.concatenate %277, %199 in 1 : vector<8x128xf32>, vector<8x128xf32> -> vector<8x256xf32>
    %c1_123 = arith.constant 1 : index
    %c0_124 = arith.constant 0 : index
    %c0_125 = arith.constant 0 : index
    %279 = vector.load %arg2[%c1_123, %c0_124, %c0_125] : memref<3x256x512xf32, #tpu.memory_space<vmem>>, vector<1x256x512xf32>
    %280 = vector.shape_cast %279 : vector<1x256x512xf32> to vector<256x512xf32>
    %cst_126 = arith.constant dense<0.000000e+00> : vector<8x512xf32>
    %281 = tpu.matmul %278, %280, %cst_126 {dimension_numbers = #tpu.dot_dimension_numbers<[1], [0], [0], [1], [0, 0, 1, 1], [], []>} : vector<8x256xf32>, vector<256x512xf32>, vector<8x512xf32> -> vector<8x512xf32>
    %c1_127 = arith.constant 1 : index
    %c0_128 = arith.constant 0 : index
    %c0_129 = arith.constant 0 : index
    %282 = vector.load %arg3[%c1_127, %c0_128, %c0_129] : memref<3x8x512xf32, #tpu.memory_space<vmem>>, vector<1x8x512xf32>
    %283 = vector.shape_cast %282 : vector<1x8x512xf32> to vector<8x512xf32>
    %284 = arith.addf %281, %283 : vector<8x512xf32>
    %285 = vector.extract_strided_slice %284 {offsets = [0, 0], sizes = [8, 128], strides = [1, 1]} : vector<8x512xf32> to vector<8x128xf32>
    %cst_130 = arith.constant 5.000000e-01 : f32
    %286 = vector.broadcast %cst_130 : f32 to vector<8x128xf32>
    %287 = arith.mulf %286, %285 : vector<8x128xf32>
    %288 = math.tanh %287 : vector<8x128xf32>
    %cst_131 = arith.constant 1.000000e+00 : f32
    %289 = vector.broadcast %cst_131 : f32 to vector<8x128xf32>
    %290 = arith.addf %288, %289 : vector<8x128xf32>
    %cst_132 = arith.constant 5.000000e-01 : f32
    %291 = vector.broadcast %cst_132 : f32 to vector<8x128xf32>
    %292 = arith.mulf %291, %290 : vector<8x128xf32>
    %293 = vector.extract_strided_slice %284 {offsets = [0, 128], sizes = [8, 128], strides = [1, 1]} : vector<8x512xf32> to vector<8x128xf32>
    %cst_133 = arith.constant 5.000000e-01 : f32
    %294 = vector.broadcast %cst_133 : f32 to vector<8x128xf32>
    %295 = arith.mulf %294, %293 : vector<8x128xf32>
    %296 = math.tanh %295 : vector<8x128xf32>
    %cst_134 = arith.constant 1.000000e+00 : f32
    %297 = vector.broadcast %cst_134 : f32 to vector<8x128xf32>
    %298 = arith.addf %296, %297 : vector<8x128xf32>
    %cst_135 = arith.constant 5.000000e-01 : f32
    %299 = vector.broadcast %cst_135 : f32 to vector<8x128xf32>
    %300 = arith.mulf %299, %298 : vector<8x128xf32>
    %301 = vector.extract_strided_slice %284 {offsets = [0, 256], sizes = [8, 128], strides = [1, 1]} : vector<8x512xf32> to vector<8x128xf32>
    %302 = math.tanh %301 : vector<8x128xf32>
    %303 = vector.extract_strided_slice %284 {offsets = [0, 384], sizes = [8, 128], strides = [1, 1]} : vector<8x512xf32> to vector<8x128xf32>
    %cst_136 = arith.constant 5.000000e-01 : f32
    %304 = vector.broadcast %cst_136 : f32 to vector<8x128xf32>
    %305 = arith.mulf %304, %303 : vector<8x128xf32>
    %306 = math.tanh %305 : vector<8x128xf32>
    %cst_137 = arith.constant 1.000000e+00 : f32
    %307 = vector.broadcast %cst_137 : f32 to vector<8x128xf32>
    %308 = arith.addf %306, %307 : vector<8x128xf32>
    %cst_138 = arith.constant 5.000000e-01 : f32
    %309 = vector.broadcast %cst_138 : f32 to vector<8x128xf32>
    %310 = arith.mulf %309, %308 : vector<8x128xf32>
    %311 = arith.mulf %300, %197 : vector<8x128xf32>
    %312 = arith.mulf %292, %302 : vector<8x128xf32>
    %313 = arith.addf %311, %312 : vector<8x128xf32>
    %314 = math.tanh %313 : vector<8x128xf32>
    %315 = arith.mulf %310, %314 : vector<8x128xf32>
    %316 = tpu.concatenate %315, %237 in 1 : vector<8x128xf32>, vector<8x128xf32> -> vector<8x256xf32>
    %c2_139 = arith.constant 2 : index
    %c0_140 = arith.constant 0 : index
    %c0_141 = arith.constant 0 : index
    %317 = vector.load %arg2[%c2_139, %c0_140, %c0_141] : memref<3x256x512xf32, #tpu.memory_space<vmem>>, vector<1x256x512xf32>
    %318 = vector.shape_cast %317 : vector<1x256x512xf32> to vector<256x512xf32>
    %cst_142 = arith.constant dense<0.000000e+00> : vector<8x512xf32>
    %319 = tpu.matmul %316, %318, %cst_142 {dimension_numbers = #tpu.dot_dimension_numbers<[1], [0], [0], [1], [0, 0, 1, 1], [], []>} : vector<8x256xf32>, vector<256x512xf32>, vector<8x512xf32> -> vector<8x512xf32>
    %c2_143 = arith.constant 2 : index
    %c0_144 = arith.constant 0 : index
    %c0_145 = arith.constant 0 : index
    %320 = vector.load %arg3[%c2_143, %c0_144, %c0_145] : memref<3x8x512xf32, #tpu.memory_space<vmem>>, vector<1x8x512xf32>
    %321 = vector.shape_cast %320 : vector<1x8x512xf32> to vector<8x512xf32>
    %322 = arith.addf %319, %321 : vector<8x512xf32>
    %323 = vector.extract_strided_slice %322 {offsets = [0, 0], sizes = [8, 128], strides = [1, 1]} : vector<8x512xf32> to vector<8x128xf32>
    %cst_146 = arith.constant 5.000000e-01 : f32
    %324 = vector.broadcast %cst_146 : f32 to vector<8x128xf32>
    %325 = arith.mulf %324, %323 : vector<8x128xf32>
    %326 = math.tanh %325 : vector<8x128xf32>
    %cst_147 = arith.constant 1.000000e+00 : f32
    %327 = vector.broadcast %cst_147 : f32 to vector<8x128xf32>
    %328 = arith.addf %326, %327 : vector<8x128xf32>
    %cst_148 = arith.constant 5.000000e-01 : f32
    %329 = vector.broadcast %cst_148 : f32 to vector<8x128xf32>
    %330 = arith.mulf %329, %328 : vector<8x128xf32>
    %331 = vector.extract_strided_slice %322 {offsets = [0, 128], sizes = [8, 128], strides = [1, 1]} : vector<8x512xf32> to vector<8x128xf32>
    %cst_149 = arith.constant 5.000000e-01 : f32
    %332 = vector.broadcast %cst_149 : f32 to vector<8x128xf32>
    %333 = arith.mulf %332, %331 : vector<8x128xf32>
    %334 = math.tanh %333 : vector<8x128xf32>
    %cst_150 = arith.constant 1.000000e+00 : f32
    %335 = vector.broadcast %cst_150 : f32 to vector<8x128xf32>
    %336 = arith.addf %334, %335 : vector<8x128xf32>
    %cst_151 = arith.constant 5.000000e-01 : f32
    %337 = vector.broadcast %cst_151 : f32 to vector<8x128xf32>
    %338 = arith.mulf %337, %336 : vector<8x128xf32>
    %339 = vector.extract_strided_slice %322 {offsets = [0, 256], sizes = [8, 128], strides = [1, 1]} : vector<8x512xf32> to vector<8x128xf32>
    %340 = math.tanh %339 : vector<8x128xf32>
    %341 = vector.extract_strided_slice %322 {offsets = [0, 384], sizes = [8, 128], strides = [1, 1]} : vector<8x512xf32> to vector<8x128xf32>
    %cst_152 = arith.constant 5.000000e-01 : f32
    %342 = vector.broadcast %cst_152 : f32 to vector<8x128xf32>
    %343 = arith.mulf %342, %341 : vector<8x128xf32>
    %344 = math.tanh %343 : vector<8x128xf32>
    %cst_153 = arith.constant 1.000000e+00 : f32
    %345 = vector.broadcast %cst_153 : f32 to vector<8x128xf32>
    %346 = arith.addf %344, %345 : vector<8x128xf32>
    %cst_154 = arith.constant 5.000000e-01 : f32
    %347 = vector.broadcast %cst_154 : f32 to vector<8x128xf32>
    %348 = arith.mulf %347, %346 : vector<8x128xf32>
    %349 = arith.mulf %338, %235 : vector<8x128xf32>
    %350 = arith.mulf %330, %340 : vector<8x128xf32>
    %351 = arith.addf %349, %350 : vector<8x128xf32>
    %352 = math.tanh %351 : vector<8x128xf32>
    %353 = arith.mulf %348, %352 : vector<8x128xf32>
    %c3 = arith.constant 3 : index
    %c0_155 = arith.constant 0 : index
    %c0_156 = arith.constant 0 : index
    %354 = vector.load %arg1[%c3, %c0_155, %c0_156] : memref<8x8x128xf32, #tpu.memory_space<vmem>>, vector<1x8x128xf32>
    %355 = vector.shape_cast %354 : vector<1x8x128xf32> to vector<8x128xf32>
    %356 = tpu.concatenate %355, %277 in 1 : vector<8x128xf32>, vector<8x128xf32> -> vector<8x256xf32>
    %c0_157 = arith.constant 0 : index
    %c0_158 = arith.constant 0 : index
    %c0_159 = arith.constant 0 : index
    %357 = vector.load %arg2[%c0_157, %c0_158, %c0_159] : memref<3x256x512xf32, #tpu.memory_space<vmem>>, vector<1x256x512xf32>
    %358 = vector.shape_cast %357 : vector<1x256x512xf32> to vector<256x512xf32>
    %cst_160 = arith.constant dense<0.000000e+00> : vector<8x512xf32>
    %359 = tpu.matmul %356, %358, %cst_160 {dimension_numbers = #tpu.dot_dimension_numbers<[1], [0], [0], [1], [0, 0, 1, 1], [], []>} : vector<8x256xf32>, vector<256x512xf32>, vector<8x512xf32> -> vector<8x512xf32>
    %c0_161 = arith.constant 0 : index
    %c0_162 = arith.constant 0 : index
    %c0_163 = arith.constant 0 : index
    %360 = vector.load %arg3[%c0_161, %c0_162, %c0_163] : memref<3x8x512xf32, #tpu.memory_space<vmem>>, vector<1x8x512xf32>
    %361 = vector.shape_cast %360 : vector<1x8x512xf32> to vector<8x512xf32>
    %362 = arith.addf %359, %361 : vector<8x512xf32>
    %363 = vector.extract_strided_slice %362 {offsets = [0, 0], sizes = [8, 128], strides = [1, 1]} : vector<8x512xf32> to vector<8x128xf32>
    %cst_164 = arith.constant 5.000000e-01 : f32
    %364 = vector.broadcast %cst_164 : f32 to vector<8x128xf32>
    %365 = arith.mulf %364, %363 : vector<8x128xf32>
    %366 = math.tanh %365 : vector<8x128xf32>
    %cst_165 = arith.constant 1.000000e+00 : f32
    %367 = vector.broadcast %cst_165 : f32 to vector<8x128xf32>
    %368 = arith.addf %366, %367 : vector<8x128xf32>
    %cst_166 = arith.constant 5.000000e-01 : f32
    %369 = vector.broadcast %cst_166 : f32 to vector<8x128xf32>
    %370 = arith.mulf %369, %368 : vector<8x128xf32>
    %371 = vector.extract_strided_slice %362 {offsets = [0, 128], sizes = [8, 128], strides = [1, 1]} : vector<8x512xf32> to vector<8x128xf32>
    %cst_167 = arith.constant 5.000000e-01 : f32
    %372 = vector.broadcast %cst_167 : f32 to vector<8x128xf32>
    %373 = arith.mulf %372, %371 : vector<8x128xf32>
    %374 = math.tanh %373 : vector<8x128xf32>
    %cst_168 = arith.constant 1.000000e+00 : f32
    %375 = vector.broadcast %cst_168 : f32 to vector<8x128xf32>
    %376 = arith.addf %374, %375 : vector<8x128xf32>
    %cst_169 = arith.constant 5.000000e-01 : f32
    %377 = vector.broadcast %cst_169 : f32 to vector<8x128xf32>
    %378 = arith.mulf %377, %376 : vector<8x128xf32>
    %379 = vector.extract_strided_slice %362 {offsets = [0, 256], sizes = [8, 128], strides = [1, 1]} : vector<8x512xf32> to vector<8x128xf32>
    %380 = math.tanh %379 : vector<8x128xf32>
    %381 = vector.extract_strided_slice %362 {offsets = [0, 384], sizes = [8, 128], strides = [1, 1]} : vector<8x512xf32> to vector<8x128xf32>
    %cst_170 = arith.constant 5.000000e-01 : f32
    %382 = vector.broadcast %cst_170 : f32 to vector<8x128xf32>
    %383 = arith.mulf %382, %381 : vector<8x128xf32>
    %384 = math.tanh %383 : vector<8x128xf32>
    %cst_171 = arith.constant 1.000000e+00 : f32
    %385 = vector.broadcast %cst_171 : f32 to vector<8x128xf32>
    %386 = arith.addf %384, %385 : vector<8x128xf32>
    %cst_172 = arith.constant 5.000000e-01 : f32
    %387 = vector.broadcast %cst_172 : f32 to vector<8x128xf32>
    %388 = arith.mulf %387, %386 : vector<8x128xf32>
    %389 = arith.mulf %378, %275 : vector<8x128xf32>
    %390 = arith.mulf %370, %380 : vector<8x128xf32>
    %391 = arith.addf %389, %390 : vector<8x128xf32>
    %392 = math.tanh %391 : vector<8x128xf32>
    %393 = arith.mulf %388, %392 : vector<8x128xf32>
    %394 = tpu.concatenate %393, %315 in 1 : vector<8x128xf32>, vector<8x128xf32> -> vector<8x256xf32>
    %c1_173 = arith.constant 1 : index
    %c0_174 = arith.constant 0 : index
    %c0_175 = arith.constant 0 : index
    %395 = vector.load %arg2[%c1_173, %c0_174, %c0_175] : memref<3x256x512xf32, #tpu.memory_space<vmem>>, vector<1x256x512xf32>
    %396 = vector.shape_cast %395 : vector<1x256x512xf32> to vector<256x512xf32>
    %cst_176 = arith.constant dense<0.000000e+00> : vector<8x512xf32>
    %397 = tpu.matmul %394, %396, %cst_176 {dimension_numbers = #tpu.dot_dimension_numbers<[1], [0], [0], [1], [0, 0, 1, 1], [], []>} : vector<8x256xf32>, vector<256x512xf32>, vector<8x512xf32> -> vector<8x512xf32>
    %c1_177 = arith.constant 1 : index
    %c0_178 = arith.constant 0 : index
    %c0_179 = arith.constant 0 : index
    %398 = vector.load %arg3[%c1_177, %c0_178, %c0_179] : memref<3x8x512xf32, #tpu.memory_space<vmem>>, vector<1x8x512xf32>
    %399 = vector.shape_cast %398 : vector<1x8x512xf32> to vector<8x512xf32>
    %400 = arith.addf %397, %399 : vector<8x512xf32>
    %401 = vector.extract_strided_slice %400 {offsets = [0, 0], sizes = [8, 128], strides = [1, 1]} : vector<8x512xf32> to vector<8x128xf32>
    %cst_180 = arith.constant 5.000000e-01 : f32
    %402 = vector.broadcast %cst_180 : f32 to vector<8x128xf32>
    %403 = arith.mulf %402, %401 : vector<8x128xf32>
    %404 = math.tanh %403 : vector<8x128xf32>
    %cst_181 = arith.constant 1.000000e+00 : f32
    %405 = vector.broadcast %cst_181 : f32 to vector<8x128xf32>
    %406 = arith.addf %404, %405 : vector<8x128xf32>
    %cst_182 = arith.constant 5.000000e-01 : f32
    %407 = vector.broadcast %cst_182 : f32 to vector<8x128xf32>
    %408 = arith.mulf %407, %406 : vector<8x128xf32>
    %409 = vector.extract_strided_slice %400 {offsets = [0, 128], sizes = [8, 128], strides = [1, 1]} : vector<8x512xf32> to vector<8x128xf32>
    %cst_183 = arith.constant 5.000000e-01 : f32
    %410 = vector.broadcast %cst_183 : f32 to vector<8x128xf32>
    %411 = arith.mulf %410, %409 : vector<8x128xf32>
    %412 = math.tanh %411 : vector<8x128xf32>
    %cst_184 = arith.constant 1.000000e+00 : f32
    %413 = vector.broadcast %cst_184 : f32 to vector<8x128xf32>
    %414 = arith.addf %412, %413 : vector<8x128xf32>
    %cst_185 = arith.constant 5.000000e-01 : f32
    %415 = vector.broadcast %cst_185 : f32 to vector<8x128xf32>
    %416 = arith.mulf %415, %414 : vector<8x128xf32>
    %417 = vector.extract_strided_slice %400 {offsets = [0, 256], sizes = [8, 128], strides = [1, 1]} : vector<8x512xf32> to vector<8x128xf32>
    %418 = math.tanh %417 : vector<8x128xf32>
    %419 = vector.extract_strided_slice %400 {offsets = [0, 384], sizes = [8, 128], strides = [1, 1]} : vector<8x512xf32> to vector<8x128xf32>
    %cst_186 = arith.constant 5.000000e-01 : f32
    %420 = vector.broadcast %cst_186 : f32 to vector<8x128xf32>
    %421 = arith.mulf %420, %419 : vector<8x128xf32>
    %422 = math.tanh %421 : vector<8x128xf32>
    %cst_187 = arith.constant 1.000000e+00 : f32
    %423 = vector.broadcast %cst_187 : f32 to vector<8x128xf32>
    %424 = arith.addf %422, %423 : vector<8x128xf32>
    %cst_188 = arith.constant 5.000000e-01 : f32
    %425 = vector.broadcast %cst_188 : f32 to vector<8x128xf32>
    %426 = arith.mulf %425, %424 : vector<8x128xf32>
    %427 = arith.mulf %416, %313 : vector<8x128xf32>
    %428 = arith.mulf %408, %418 : vector<8x128xf32>
    %429 = arith.addf %427, %428 : vector<8x128xf32>
    %430 = math.tanh %429 : vector<8x128xf32>
    %431 = arith.mulf %426, %430 : vector<8x128xf32>
    %432 = tpu.concatenate %431, %353 in 1 : vector<8x128xf32>, vector<8x128xf32> -> vector<8x256xf32>
    %c2_189 = arith.constant 2 : index
    %c0_190 = arith.constant 0 : index
    %c0_191 = arith.constant 0 : index
    %433 = vector.load %arg2[%c2_189, %c0_190, %c0_191] : memref<3x256x512xf32, #tpu.memory_space<vmem>>, vector<1x256x512xf32>
    %434 = vector.shape_cast %433 : vector<1x256x512xf32> to vector<256x512xf32>
    %cst_192 = arith.constant dense<0.000000e+00> : vector<8x512xf32>
    %435 = tpu.matmul %432, %434, %cst_192 {dimension_numbers = #tpu.dot_dimension_numbers<[1], [0], [0], [1], [0, 0, 1, 1], [], []>} : vector<8x256xf32>, vector<256x512xf32>, vector<8x512xf32> -> vector<8x512xf32>
    %c2_193 = arith.constant 2 : index
    %c0_194 = arith.constant 0 : index
    %c0_195 = arith.constant 0 : index
    %436 = vector.load %arg3[%c2_193, %c0_194, %c0_195] : memref<3x8x512xf32, #tpu.memory_space<vmem>>, vector<1x8x512xf32>
    %437 = vector.shape_cast %436 : vector<1x8x512xf32> to vector<8x512xf32>
    %438 = arith.addf %435, %437 : vector<8x512xf32>
    %439 = vector.extract_strided_slice %438 {offsets = [0, 0], sizes = [8, 128], strides = [1, 1]} : vector<8x512xf32> to vector<8x128xf32>
    %cst_196 = arith.constant 5.000000e-01 : f32
    %440 = vector.broadcast %cst_196 : f32 to vector<8x128xf32>
    %441 = arith.mulf %440, %439 : vector<8x128xf32>
    %442 = math.tanh %441 : vector<8x128xf32>
    %cst_197 = arith.constant 1.000000e+00 : f32
    %443 = vector.broadcast %cst_197 : f32 to vector<8x128xf32>
    %444 = arith.addf %442, %443 : vector<8x128xf32>
    %cst_198 = arith.constant 5.000000e-01 : f32
    %445 = vector.broadcast %cst_198 : f32 to vector<8x128xf32>
    %446 = arith.mulf %445, %444 : vector<8x128xf32>
    %447 = vector.extract_strided_slice %438 {offsets = [0, 128], sizes = [8, 128], strides = [1, 1]} : vector<8x512xf32> to vector<8x128xf32>
    %cst_199 = arith.constant 5.000000e-01 : f32
    %448 = vector.broadcast %cst_199 : f32 to vector<8x128xf32>
    %449 = arith.mulf %448, %447 : vector<8x128xf32>
    %450 = math.tanh %449 : vector<8x128xf32>
    %cst_200 = arith.constant 1.000000e+00 : f32
    %451 = vector.broadcast %cst_200 : f32 to vector<8x128xf32>
    %452 = arith.addf %450, %451 : vector<8x128xf32>
    %cst_201 = arith.constant 5.000000e-01 : f32
    %453 = vector.broadcast %cst_201 : f32 to vector<8x128xf32>
    %454 = arith.mulf %453, %452 : vector<8x128xf32>
    %455 = vector.extract_strided_slice %438 {offsets = [0, 256], sizes = [8, 128], strides = [1, 1]} : vector<8x512xf32> to vector<8x128xf32>
    %456 = math.tanh %455 : vector<8x128xf32>
    %457 = vector.extract_strided_slice %438 {offsets = [0, 384], sizes = [8, 128], strides = [1, 1]} : vector<8x512xf32> to vector<8x128xf32>
    %cst_202 = arith.constant 5.000000e-01 : f32
    %458 = vector.broadcast %cst_202 : f32 to vector<8x128xf32>
    %459 = arith.mulf %458, %457 : vector<8x128xf32>
    %460 = math.tanh %459 : vector<8x128xf32>
    %cst_203 = arith.constant 1.000000e+00 : f32
    %461 = vector.broadcast %cst_203 : f32 to vector<8x128xf32>
    %462 = arith.addf %460, %461 : vector<8x128xf32>
    %cst_204 = arith.constant 5.000000e-01 : f32
    %463 = vector.broadcast %cst_204 : f32 to vector<8x128xf32>
    %464 = arith.mulf %463, %462 : vector<8x128xf32>
    %465 = arith.mulf %454, %351 : vector<8x128xf32>
    %466 = arith.mulf %446, %456 : vector<8x128xf32>
    %467 = arith.addf %465, %466 : vector<8x128xf32>
    %468 = math.tanh %467 : vector<8x128xf32>
    %469 = arith.mulf %464, %468 : vector<8x128xf32>
    %c4 = arith.constant 4 : index
    %c0_205 = arith.constant 0 : index
    %c0_206 = arith.constant 0 : index
    %470 = vector.load %arg1[%c4, %c0_205, %c0_206] : memref<8x8x128xf32, #tpu.memory_space<vmem>>, vector<1x8x128xf32>
    %471 = vector.shape_cast %470 : vector<1x8x128xf32> to vector<8x128xf32>
    %472 = tpu.concatenate %471, %393 in 1 : vector<8x128xf32>, vector<8x128xf32> -> vector<8x256xf32>
    %c0_207 = arith.constant 0 : index
    %c0_208 = arith.constant 0 : index
    %c0_209 = arith.constant 0 : index
    %473 = vector.load %arg2[%c0_207, %c0_208, %c0_209] : memref<3x256x512xf32, #tpu.memory_space<vmem>>, vector<1x256x512xf32>
    %474 = vector.shape_cast %473 : vector<1x256x512xf32> to vector<256x512xf32>
    %cst_210 = arith.constant dense<0.000000e+00> : vector<8x512xf32>
    %475 = tpu.matmul %472, %474, %cst_210 {dimension_numbers = #tpu.dot_dimension_numbers<[1], [0], [0], [1], [0, 0, 1, 1], [], []>} : vector<8x256xf32>, vector<256x512xf32>, vector<8x512xf32> -> vector<8x512xf32>
    %c0_211 = arith.constant 0 : index
    %c0_212 = arith.constant 0 : index
    %c0_213 = arith.constant 0 : index
    %476 = vector.load %arg3[%c0_211, %c0_212, %c0_213] : memref<3x8x512xf32, #tpu.memory_space<vmem>>, vector<1x8x512xf32>
    %477 = vector.shape_cast %476 : vector<1x8x512xf32> to vector<8x512xf32>
    %478 = arith.addf %475, %477 : vector<8x512xf32>
    %479 = vector.extract_strided_slice %478 {offsets = [0, 0], sizes = [8, 128], strides = [1, 1]} : vector<8x512xf32> to vector<8x128xf32>
    %cst_214 = arith.constant 5.000000e-01 : f32
    %480 = vector.broadcast %cst_214 : f32 to vector<8x128xf32>
    %481 = arith.mulf %480, %479 : vector<8x128xf32>
    %482 = math.tanh %481 : vector<8x128xf32>
    %cst_215 = arith.constant 1.000000e+00 : f32
    %483 = vector.broadcast %cst_215 : f32 to vector<8x128xf32>
    %484 = arith.addf %482, %483 : vector<8x128xf32>
    %cst_216 = arith.constant 5.000000e-01 : f32
    %485 = vector.broadcast %cst_216 : f32 to vector<8x128xf32>
    %486 = arith.mulf %485, %484 : vector<8x128xf32>
    %487 = vector.extract_strided_slice %478 {offsets = [0, 128], sizes = [8, 128], strides = [1, 1]} : vector<8x512xf32> to vector<8x128xf32>
    %cst_217 = arith.constant 5.000000e-01 : f32
    %488 = vector.broadcast %cst_217 : f32 to vector<8x128xf32>
    %489 = arith.mulf %488, %487 : vector<8x128xf32>
    %490 = math.tanh %489 : vector<8x128xf32>
    %cst_218 = arith.constant 1.000000e+00 : f32
    %491 = vector.broadcast %cst_218 : f32 to vector<8x128xf32>
    %492 = arith.addf %490, %491 : vector<8x128xf32>
    %cst_219 = arith.constant 5.000000e-01 : f32
    %493 = vector.broadcast %cst_219 : f32 to vector<8x128xf32>
    %494 = arith.mulf %493, %492 : vector<8x128xf32>
    %495 = vector.extract_strided_slice %478 {offsets = [0, 256], sizes = [8, 128], strides = [1, 1]} : vector<8x512xf32> to vector<8x128xf32>
    %496 = math.tanh %495 : vector<8x128xf32>
    %497 = vector.extract_strided_slice %478 {offsets = [0, 384], sizes = [8, 128], strides = [1, 1]} : vector<8x512xf32> to vector<8x128xf32>
    %cst_220 = arith.constant 5.000000e-01 : f32
    %498 = vector.broadcast %cst_220 : f32 to vector<8x128xf32>
    %499 = arith.mulf %498, %497 : vector<8x128xf32>
    %500 = math.tanh %499 : vector<8x128xf32>
    %cst_221 = arith.constant 1.000000e+00 : f32
    %501 = vector.broadcast %cst_221 : f32 to vector<8x128xf32>
    %502 = arith.addf %500, %501 : vector<8x128xf32>
    %cst_222 = arith.constant 5.000000e-01 : f32
    %503 = vector.broadcast %cst_222 : f32 to vector<8x128xf32>
    %504 = arith.mulf %503, %502 : vector<8x128xf32>
    %505 = arith.mulf %494, %391 : vector<8x128xf32>
    %506 = arith.mulf %486, %496 : vector<8x128xf32>
    %507 = arith.addf %505, %506 : vector<8x128xf32>
    %508 = math.tanh %507 : vector<8x128xf32>
    %509 = arith.mulf %504, %508 : vector<8x128xf32>
    %510 = tpu.concatenate %509, %431 in 1 : vector<8x128xf32>, vector<8x128xf32> -> vector<8x256xf32>
    %c1_223 = arith.constant 1 : index
    %c0_224 = arith.constant 0 : index
    %c0_225 = arith.constant 0 : index
    %511 = vector.load %arg2[%c1_223, %c0_224, %c0_225] : memref<3x256x512xf32, #tpu.memory_space<vmem>>, vector<1x256x512xf32>
    %512 = vector.shape_cast %511 : vector<1x256x512xf32> to vector<256x512xf32>
    %cst_226 = arith.constant dense<0.000000e+00> : vector<8x512xf32>
    %513 = tpu.matmul %510, %512, %cst_226 {dimension_numbers = #tpu.dot_dimension_numbers<[1], [0], [0], [1], [0, 0, 1, 1], [], []>} : vector<8x256xf32>, vector<256x512xf32>, vector<8x512xf32> -> vector<8x512xf32>
    %c1_227 = arith.constant 1 : index
    %c0_228 = arith.constant 0 : index
    %c0_229 = arith.constant 0 : index
    %514 = vector.load %arg3[%c1_227, %c0_228, %c0_229] : memref<3x8x512xf32, #tpu.memory_space<vmem>>, vector<1x8x512xf32>
    %515 = vector.shape_cast %514 : vector<1x8x512xf32> to vector<8x512xf32>
    %516 = arith.addf %513, %515 : vector<8x512xf32>
    %517 = vector.extract_strided_slice %516 {offsets = [0, 0], sizes = [8, 128], strides = [1, 1]} : vector<8x512xf32> to vector<8x128xf32>
    %cst_230 = arith.constant 5.000000e-01 : f32
    %518 = vector.broadcast %cst_230 : f32 to vector<8x128xf32>
    %519 = arith.mulf %518, %517 : vector<8x128xf32>
    %520 = math.tanh %519 : vector<8x128xf32>
    %cst_231 = arith.constant 1.000000e+00 : f32
    %521 = vector.broadcast %cst_231 : f32 to vector<8x128xf32>
    %522 = arith.addf %520, %521 : vector<8x128xf32>
    %cst_232 = arith.constant 5.000000e-01 : f32
    %523 = vector.broadcast %cst_232 : f32 to vector<8x128xf32>
    %524 = arith.mulf %523, %522 : vector<8x128xf32>
    %525 = vector.extract_strided_slice %516 {offsets = [0, 128], sizes = [8, 128], strides = [1, 1]} : vector<8x512xf32> to vector<8x128xf32>
    %cst_233 = arith.constant 5.000000e-01 : f32
    %526 = vector.broadcast %cst_233 : f32 to vector<8x128xf32>
    %527 = arith.mulf %526, %525 : vector<8x128xf32>
    %528 = math.tanh %527 : vector<8x128xf32>
    %cst_234 = arith.constant 1.000000e+00 : f32
    %529 = vector.broadcast %cst_234 : f32 to vector<8x128xf32>
    %530 = arith.addf %528, %529 : vector<8x128xf32>
    %cst_235 = arith.constant 5.000000e-01 : f32
    %531 = vector.broadcast %cst_235 : f32 to vector<8x128xf32>
    %532 = arith.mulf %531, %530 : vector<8x128xf32>
    %533 = vector.extract_strided_slice %516 {offsets = [0, 256], sizes = [8, 128], strides = [1, 1]} : vector<8x512xf32> to vector<8x128xf32>
    %534 = math.tanh %533 : vector<8x128xf32>
    %535 = vector.extract_strided_slice %516 {offsets = [0, 384], sizes = [8, 128], strides = [1, 1]} : vector<8x512xf32> to vector<8x128xf32>
    %cst_236 = arith.constant 5.000000e-01 : f32
    %536 = vector.broadcast %cst_236 : f32 to vector<8x128xf32>
    %537 = arith.mulf %536, %535 : vector<8x128xf32>
    %538 = math.tanh %537 : vector<8x128xf32>
    %cst_237 = arith.constant 1.000000e+00 : f32
    %539 = vector.broadcast %cst_237 : f32 to vector<8x128xf32>
    %540 = arith.addf %538, %539 : vector<8x128xf32>
    %cst_238 = arith.constant 5.000000e-01 : f32
    %541 = vector.broadcast %cst_238 : f32 to vector<8x128xf32>
    %542 = arith.mulf %541, %540 : vector<8x128xf32>
    %543 = arith.mulf %532, %429 : vector<8x128xf32>
    %544 = arith.mulf %524, %534 : vector<8x128xf32>
    %545 = arith.addf %543, %544 : vector<8x128xf32>
    %546 = math.tanh %545 : vector<8x128xf32>
    %547 = arith.mulf %542, %546 : vector<8x128xf32>
    %548 = tpu.concatenate %547, %469 in 1 : vector<8x128xf32>, vector<8x128xf32> -> vector<8x256xf32>
    %c2_239 = arith.constant 2 : index
    %c0_240 = arith.constant 0 : index
    %c0_241 = arith.constant 0 : index
    %549 = vector.load %arg2[%c2_239, %c0_240, %c0_241] : memref<3x256x512xf32, #tpu.memory_space<vmem>>, vector<1x256x512xf32>
    %550 = vector.shape_cast %549 : vector<1x256x512xf32> to vector<256x512xf32>
    %cst_242 = arith.constant dense<0.000000e+00> : vector<8x512xf32>
    %551 = tpu.matmul %548, %550, %cst_242 {dimension_numbers = #tpu.dot_dimension_numbers<[1], [0], [0], [1], [0, 0, 1, 1], [], []>} : vector<8x256xf32>, vector<256x512xf32>, vector<8x512xf32> -> vector<8x512xf32>
    %c2_243 = arith.constant 2 : index
    %c0_244 = arith.constant 0 : index
    %c0_245 = arith.constant 0 : index
    %552 = vector.load %arg3[%c2_243, %c0_244, %c0_245] : memref<3x8x512xf32, #tpu.memory_space<vmem>>, vector<1x8x512xf32>
    %553 = vector.shape_cast %552 : vector<1x8x512xf32> to vector<8x512xf32>
    %554 = arith.addf %551, %553 : vector<8x512xf32>
    %555 = vector.extract_strided_slice %554 {offsets = [0, 0], sizes = [8, 128], strides = [1, 1]} : vector<8x512xf32> to vector<8x128xf32>
    %cst_246 = arith.constant 5.000000e-01 : f32
    %556 = vector.broadcast %cst_246 : f32 to vector<8x128xf32>
    %557 = arith.mulf %556, %555 : vector<8x128xf32>
    %558 = math.tanh %557 : vector<8x128xf32>
    %cst_247 = arith.constant 1.000000e+00 : f32
    %559 = vector.broadcast %cst_247 : f32 to vector<8x128xf32>
    %560 = arith.addf %558, %559 : vector<8x128xf32>
    %cst_248 = arith.constant 5.000000e-01 : f32
    %561 = vector.broadcast %cst_248 : f32 to vector<8x128xf32>
    %562 = arith.mulf %561, %560 : vector<8x128xf32>
    %563 = vector.extract_strided_slice %554 {offsets = [0, 128], sizes = [8, 128], strides = [1, 1]} : vector<8x512xf32> to vector<8x128xf32>
    %cst_249 = arith.constant 5.000000e-01 : f32
    %564 = vector.broadcast %cst_249 : f32 to vector<8x128xf32>
    %565 = arith.mulf %564, %563 : vector<8x128xf32>
    %566 = math.tanh %565 : vector<8x128xf32>
    %cst_250 = arith.constant 1.000000e+00 : f32
    %567 = vector.broadcast %cst_250 : f32 to vector<8x128xf32>
    %568 = arith.addf %566, %567 : vector<8x128xf32>
    %cst_251 = arith.constant 5.000000e-01 : f32
    %569 = vector.broadcast %cst_251 : f32 to vector<8x128xf32>
    %570 = arith.mulf %569, %568 : vector<8x128xf32>
    %571 = vector.extract_strided_slice %554 {offsets = [0, 256], sizes = [8, 128], strides = [1, 1]} : vector<8x512xf32> to vector<8x128xf32>
    %572 = math.tanh %571 : vector<8x128xf32>
    %573 = vector.extract_strided_slice %554 {offsets = [0, 384], sizes = [8, 128], strides = [1, 1]} : vector<8x512xf32> to vector<8x128xf32>
    %cst_252 = arith.constant 5.000000e-01 : f32
    %574 = vector.broadcast %cst_252 : f32 to vector<8x128xf32>
    %575 = arith.mulf %574, %573 : vector<8x128xf32>
    %576 = math.tanh %575 : vector<8x128xf32>
    %cst_253 = arith.constant 1.000000e+00 : f32
    %577 = vector.broadcast %cst_253 : f32 to vector<8x128xf32>
    %578 = arith.addf %576, %577 : vector<8x128xf32>
    %cst_254 = arith.constant 5.000000e-01 : f32
    %579 = vector.broadcast %cst_254 : f32 to vector<8x128xf32>
    %580 = arith.mulf %579, %578 : vector<8x128xf32>
    %581 = arith.mulf %570, %467 : vector<8x128xf32>
    %582 = arith.mulf %562, %572 : vector<8x128xf32>
    %583 = arith.addf %581, %582 : vector<8x128xf32>
    %584 = math.tanh %583 : vector<8x128xf32>
    %585 = arith.mulf %580, %584 : vector<8x128xf32>
    %c5 = arith.constant 5 : index
    %c0_255 = arith.constant 0 : index
    %c0_256 = arith.constant 0 : index
    %586 = vector.load %arg1[%c5, %c0_255, %c0_256] : memref<8x8x128xf32, #tpu.memory_space<vmem>>, vector<1x8x128xf32>
    %587 = vector.shape_cast %586 : vector<1x8x128xf32> to vector<8x128xf32>
    %588 = tpu.concatenate %587, %509 in 1 : vector<8x128xf32>, vector<8x128xf32> -> vector<8x256xf32>
    %c0_257 = arith.constant 0 : index
    %c0_258 = arith.constant 0 : index
    %c0_259 = arith.constant 0 : index
    %589 = vector.load %arg2[%c0_257, %c0_258, %c0_259] : memref<3x256x512xf32, #tpu.memory_space<vmem>>, vector<1x256x512xf32>
    %590 = vector.shape_cast %589 : vector<1x256x512xf32> to vector<256x512xf32>
    %cst_260 = arith.constant dense<0.000000e+00> : vector<8x512xf32>
    %591 = tpu.matmul %588, %590, %cst_260 {dimension_numbers = #tpu.dot_dimension_numbers<[1], [0], [0], [1], [0, 0, 1, 1], [], []>} : vector<8x256xf32>, vector<256x512xf32>, vector<8x512xf32> -> vector<8x512xf32>
    %c0_261 = arith.constant 0 : index
    %c0_262 = arith.constant 0 : index
    %c0_263 = arith.constant 0 : index
    %592 = vector.load %arg3[%c0_261, %c0_262, %c0_263] : memref<3x8x512xf32, #tpu.memory_space<vmem>>, vector<1x8x512xf32>
    %593 = vector.shape_cast %592 : vector<1x8x512xf32> to vector<8x512xf32>
    %594 = arith.addf %591, %593 : vector<8x512xf32>
    %595 = vector.extract_strided_slice %594 {offsets = [0, 0], sizes = [8, 128], strides = [1, 1]} : vector<8x512xf32> to vector<8x128xf32>
    %cst_264 = arith.constant 5.000000e-01 : f32
    %596 = vector.broadcast %cst_264 : f32 to vector<8x128xf32>
    %597 = arith.mulf %596, %595 : vector<8x128xf32>
    %598 = math.tanh %597 : vector<8x128xf32>
    %cst_265 = arith.constant 1.000000e+00 : f32
    %599 = vector.broadcast %cst_265 : f32 to vector<8x128xf32>
    %600 = arith.addf %598, %599 : vector<8x128xf32>
    %cst_266 = arith.constant 5.000000e-01 : f32
    %601 = vector.broadcast %cst_266 : f32 to vector<8x128xf32>
    %602 = arith.mulf %601, %600 : vector<8x128xf32>
    %603 = vector.extract_strided_slice %594 {offsets = [0, 128], sizes = [8, 128], strides = [1, 1]} : vector<8x512xf32> to vector<8x128xf32>
    %cst_267 = arith.constant 5.000000e-01 : f32
    %604 = vector.broadcast %cst_267 : f32 to vector<8x128xf32>
    %605 = arith.mulf %604, %603 : vector<8x128xf32>
    %606 = math.tanh %605 : vector<8x128xf32>
    %cst_268 = arith.constant 1.000000e+00 : f32
    %607 = vector.broadcast %cst_268 : f32 to vector<8x128xf32>
    %608 = arith.addf %606, %607 : vector<8x128xf32>
    %cst_269 = arith.constant 5.000000e-01 : f32
    %609 = vector.broadcast %cst_269 : f32 to vector<8x128xf32>
    %610 = arith.mulf %609, %608 : vector<8x128xf32>
    %611 = vector.extract_strided_slice %594 {offsets = [0, 256], sizes = [8, 128], strides = [1, 1]} : vector<8x512xf32> to vector<8x128xf32>
    %612 = math.tanh %611 : vector<8x128xf32>
    %613 = vector.extract_strided_slice %594 {offsets = [0, 384], sizes = [8, 128], strides = [1, 1]} : vector<8x512xf32> to vector<8x128xf32>
    %cst_270 = arith.constant 5.000000e-01 : f32
    %614 = vector.broadcast %cst_270 : f32 to vector<8x128xf32>
    %615 = arith.mulf %614, %613 : vector<8x128xf32>
    %616 = math.tanh %615 : vector<8x128xf32>
    %cst_271 = arith.constant 1.000000e+00 : f32
    %617 = vector.broadcast %cst_271 : f32 to vector<8x128xf32>
    %618 = arith.addf %616, %617 : vector<8x128xf32>
    %cst_272 = arith.constant 5.000000e-01 : f32
    %619 = vector.broadcast %cst_272 : f32 to vector<8x128xf32>
    %620 = arith.mulf %619, %618 : vector<8x128xf32>
    %621 = arith.mulf %610, %507 : vector<8x128xf32>
    %622 = arith.mulf %602, %612 : vector<8x128xf32>
    %623 = arith.addf %621, %622 : vector<8x128xf32>
    %624 = math.tanh %623 : vector<8x128xf32>
    %625 = arith.mulf %620, %624 : vector<8x128xf32>
    %626 = tpu.concatenate %625, %547 in 1 : vector<8x128xf32>, vector<8x128xf32> -> vector<8x256xf32>
    %c1_273 = arith.constant 1 : index
    %c0_274 = arith.constant 0 : index
    %c0_275 = arith.constant 0 : index
    %627 = vector.load %arg2[%c1_273, %c0_274, %c0_275] : memref<3x256x512xf32, #tpu.memory_space<vmem>>, vector<1x256x512xf32>
    %628 = vector.shape_cast %627 : vector<1x256x512xf32> to vector<256x512xf32>
    %cst_276 = arith.constant dense<0.000000e+00> : vector<8x512xf32>
    %629 = tpu.matmul %626, %628, %cst_276 {dimension_numbers = #tpu.dot_dimension_numbers<[1], [0], [0], [1], [0, 0, 1, 1], [], []>} : vector<8x256xf32>, vector<256x512xf32>, vector<8x512xf32> -> vector<8x512xf32>
    %c1_277 = arith.constant 1 : index
    %c0_278 = arith.constant 0 : index
    %c0_279 = arith.constant 0 : index
    %630 = vector.load %arg3[%c1_277, %c0_278, %c0_279] : memref<3x8x512xf32, #tpu.memory_space<vmem>>, vector<1x8x512xf32>
    %631 = vector.shape_cast %630 : vector<1x8x512xf32> to vector<8x512xf32>
    %632 = arith.addf %629, %631 : vector<8x512xf32>
    %633 = vector.extract_strided_slice %632 {offsets = [0, 0], sizes = [8, 128], strides = [1, 1]} : vector<8x512xf32> to vector<8x128xf32>
    %cst_280 = arith.constant 5.000000e-01 : f32
    %634 = vector.broadcast %cst_280 : f32 to vector<8x128xf32>
    %635 = arith.mulf %634, %633 : vector<8x128xf32>
    %636 = math.tanh %635 : vector<8x128xf32>
    %cst_281 = arith.constant 1.000000e+00 : f32
    %637 = vector.broadcast %cst_281 : f32 to vector<8x128xf32>
    %638 = arith.addf %636, %637 : vector<8x128xf32>
    %cst_282 = arith.constant 5.000000e-01 : f32
    %639 = vector.broadcast %cst_282 : f32 to vector<8x128xf32>
    %640 = arith.mulf %639, %638 : vector<8x128xf32>
    %641 = vector.extract_strided_slice %632 {offsets = [0, 128], sizes = [8, 128], strides = [1, 1]} : vector<8x512xf32> to vector<8x128xf32>
    %cst_283 = arith.constant 5.000000e-01 : f32
    %642 = vector.broadcast %cst_283 : f32 to vector<8x128xf32>
    %643 = arith.mulf %642, %641 : vector<8x128xf32>
    %644 = math.tanh %643 : vector<8x128xf32>
    %cst_284 = arith.constant 1.000000e+00 : f32
    %645 = vector.broadcast %cst_284 : f32 to vector<8x128xf32>
    %646 = arith.addf %644, %645 : vector<8x128xf32>
    %cst_285 = arith.constant 5.000000e-01 : f32
    %647 = vector.broadcast %cst_285 : f32 to vector<8x128xf32>
    %648 = arith.mulf %647, %646 : vector<8x128xf32>
    %649 = vector.extract_strided_slice %632 {offsets = [0, 256], sizes = [8, 128], strides = [1, 1]} : vector<8x512xf32> to vector<8x128xf32>
    %650 = math.tanh %649 : vector<8x128xf32>
    %651 = vector.extract_strided_slice %632 {offsets = [0, 384], sizes = [8, 128], strides = [1, 1]} : vector<8x512xf32> to vector<8x128xf32>
    %cst_286 = arith.constant 5.000000e-01 : f32
    %652 = vector.broadcast %cst_286 : f32 to vector<8x128xf32>
    %653 = arith.mulf %652, %651 : vector<8x128xf32>
    %654 = math.tanh %653 : vector<8x128xf32>
    %cst_287 = arith.constant 1.000000e+00 : f32
    %655 = vector.broadcast %cst_287 : f32 to vector<8x128xf32>
    %656 = arith.addf %654, %655 : vector<8x128xf32>
    %cst_288 = arith.constant 5.000000e-01 : f32
    %657 = vector.broadcast %cst_288 : f32 to vector<8x128xf32>
    %658 = arith.mulf %657, %656 : vector<8x128xf32>
    %659 = arith.mulf %648, %545 : vector<8x128xf32>
    %660 = arith.mulf %640, %650 : vector<8x128xf32>
    %661 = arith.addf %659, %660 : vector<8x128xf32>
    %662 = math.tanh %661 : vector<8x128xf32>
    %663 = arith.mulf %658, %662 : vector<8x128xf32>
    %664 = tpu.concatenate %663, %585 in 1 : vector<8x128xf32>, vector<8x128xf32> -> vector<8x256xf32>
    %c2_289 = arith.constant 2 : index
    %c0_290 = arith.constant 0 : index
    %c0_291 = arith.constant 0 : index
    %665 = vector.load %arg2[%c2_289, %c0_290, %c0_291] : memref<3x256x512xf32, #tpu.memory_space<vmem>>, vector<1x256x512xf32>
    %666 = vector.shape_cast %665 : vector<1x256x512xf32> to vector<256x512xf32>
    %cst_292 = arith.constant dense<0.000000e+00> : vector<8x512xf32>
    %667 = tpu.matmul %664, %666, %cst_292 {dimension_numbers = #tpu.dot_dimension_numbers<[1], [0], [0], [1], [0, 0, 1, 1], [], []>} : vector<8x256xf32>, vector<256x512xf32>, vector<8x512xf32> -> vector<8x512xf32>
    %c2_293 = arith.constant 2 : index
    %c0_294 = arith.constant 0 : index
    %c0_295 = arith.constant 0 : index
    %668 = vector.load %arg3[%c2_293, %c0_294, %c0_295] : memref<3x8x512xf32, #tpu.memory_space<vmem>>, vector<1x8x512xf32>
    %669 = vector.shape_cast %668 : vector<1x8x512xf32> to vector<8x512xf32>
    %670 = arith.addf %667, %669 : vector<8x512xf32>
    %671 = vector.extract_strided_slice %670 {offsets = [0, 0], sizes = [8, 128], strides = [1, 1]} : vector<8x512xf32> to vector<8x128xf32>
    %cst_296 = arith.constant 5.000000e-01 : f32
    %672 = vector.broadcast %cst_296 : f32 to vector<8x128xf32>
    %673 = arith.mulf %672, %671 : vector<8x128xf32>
    %674 = math.tanh %673 : vector<8x128xf32>
    %cst_297 = arith.constant 1.000000e+00 : f32
    %675 = vector.broadcast %cst_297 : f32 to vector<8x128xf32>
    %676 = arith.addf %674, %675 : vector<8x128xf32>
    %cst_298 = arith.constant 5.000000e-01 : f32
    %677 = vector.broadcast %cst_298 : f32 to vector<8x128xf32>
    %678 = arith.mulf %677, %676 : vector<8x128xf32>
    %679 = vector.extract_strided_slice %670 {offsets = [0, 128], sizes = [8, 128], strides = [1, 1]} : vector<8x512xf32> to vector<8x128xf32>
    %cst_299 = arith.constant 5.000000e-01 : f32
    %680 = vector.broadcast %cst_299 : f32 to vector<8x128xf32>
    %681 = arith.mulf %680, %679 : vector<8x128xf32>
    %682 = math.tanh %681 : vector<8x128xf32>
    %cst_300 = arith.constant 1.000000e+00 : f32
    %683 = vector.broadcast %cst_300 : f32 to vector<8x128xf32>
    %684 = arith.addf %682, %683 : vector<8x128xf32>
    %cst_301 = arith.constant 5.000000e-01 : f32
    %685 = vector.broadcast %cst_301 : f32 to vector<8x128xf32>
    %686 = arith.mulf %685, %684 : vector<8x128xf32>
    %687 = vector.extract_strided_slice %670 {offsets = [0, 256], sizes = [8, 128], strides = [1, 1]} : vector<8x512xf32> to vector<8x128xf32>
    %688 = math.tanh %687 : vector<8x128xf32>
    %689 = vector.extract_strided_slice %670 {offsets = [0, 384], sizes = [8, 128], strides = [1, 1]} : vector<8x512xf32> to vector<8x128xf32>
    %cst_302 = arith.constant 5.000000e-01 : f32
    %690 = vector.broadcast %cst_302 : f32 to vector<8x128xf32>
    %691 = arith.mulf %690, %689 : vector<8x128xf32>
    %692 = math.tanh %691 : vector<8x128xf32>
    %cst_303 = arith.constant 1.000000e+00 : f32
    %693 = vector.broadcast %cst_303 : f32 to vector<8x128xf32>
    %694 = arith.addf %692, %693 : vector<8x128xf32>
    %cst_304 = arith.constant 5.000000e-01 : f32
    %695 = vector.broadcast %cst_304 : f32 to vector<8x128xf32>
    %696 = arith.mulf %695, %694 : vector<8x128xf32>
    %697 = arith.mulf %686, %583 : vector<8x128xf32>
    %698 = arith.mulf %678, %688 : vector<8x128xf32>
    %699 = arith.addf %697, %698 : vector<8x128xf32>
    %700 = math.tanh %699 : vector<8x128xf32>
    %701 = arith.mulf %696, %700 : vector<8x128xf32>
    %c6 = arith.constant 6 : index
    %c0_305 = arith.constant 0 : index
    %c0_306 = arith.constant 0 : index
    %702 = vector.load %arg1[%c6, %c0_305, %c0_306] : memref<8x8x128xf32, #tpu.memory_space<vmem>>, vector<1x8x128xf32>
    %703 = vector.shape_cast %702 : vector<1x8x128xf32> to vector<8x128xf32>
    %704 = tpu.concatenate %703, %625 in 1 : vector<8x128xf32>, vector<8x128xf32> -> vector<8x256xf32>
    %c0_307 = arith.constant 0 : index
    %c0_308 = arith.constant 0 : index
    %c0_309 = arith.constant 0 : index
    %705 = vector.load %arg2[%c0_307, %c0_308, %c0_309] : memref<3x256x512xf32, #tpu.memory_space<vmem>>, vector<1x256x512xf32>
    %706 = vector.shape_cast %705 : vector<1x256x512xf32> to vector<256x512xf32>
    %cst_310 = arith.constant dense<0.000000e+00> : vector<8x512xf32>
    %707 = tpu.matmul %704, %706, %cst_310 {dimension_numbers = #tpu.dot_dimension_numbers<[1], [0], [0], [1], [0, 0, 1, 1], [], []>} : vector<8x256xf32>, vector<256x512xf32>, vector<8x512xf32> -> vector<8x512xf32>
    %c0_311 = arith.constant 0 : index
    %c0_312 = arith.constant 0 : index
    %c0_313 = arith.constant 0 : index
    %708 = vector.load %arg3[%c0_311, %c0_312, %c0_313] : memref<3x8x512xf32, #tpu.memory_space<vmem>>, vector<1x8x512xf32>
    %709 = vector.shape_cast %708 : vector<1x8x512xf32> to vector<8x512xf32>
    %710 = arith.addf %707, %709 : vector<8x512xf32>
    %711 = vector.extract_strided_slice %710 {offsets = [0, 0], sizes = [8, 128], strides = [1, 1]} : vector<8x512xf32> to vector<8x128xf32>
    %cst_314 = arith.constant 5.000000e-01 : f32
    %712 = vector.broadcast %cst_314 : f32 to vector<8x128xf32>
    %713 = arith.mulf %712, %711 : vector<8x128xf32>
    %714 = math.tanh %713 : vector<8x128xf32>
    %cst_315 = arith.constant 1.000000e+00 : f32
    %715 = vector.broadcast %cst_315 : f32 to vector<8x128xf32>
    %716 = arith.addf %714, %715 : vector<8x128xf32>
    %cst_316 = arith.constant 5.000000e-01 : f32
    %717 = vector.broadcast %cst_316 : f32 to vector<8x128xf32>
    %718 = arith.mulf %717, %716 : vector<8x128xf32>
    %719 = vector.extract_strided_slice %710 {offsets = [0, 128], sizes = [8, 128], strides = [1, 1]} : vector<8x512xf32> to vector<8x128xf32>
    %cst_317 = arith.constant 5.000000e-01 : f32
    %720 = vector.broadcast %cst_317 : f32 to vector<8x128xf32>
    %721 = arith.mulf %720, %719 : vector<8x128xf32>
    %722 = math.tanh %721 : vector<8x128xf32>
    %cst_318 = arith.constant 1.000000e+00 : f32
    %723 = vector.broadcast %cst_318 : f32 to vector<8x128xf32>
    %724 = arith.addf %722, %723 : vector<8x128xf32>
    %cst_319 = arith.constant 5.000000e-01 : f32
    %725 = vector.broadcast %cst_319 : f32 to vector<8x128xf32>
    %726 = arith.mulf %725, %724 : vector<8x128xf32>
    %727 = vector.extract_strided_slice %710 {offsets = [0, 256], sizes = [8, 128], strides = [1, 1]} : vector<8x512xf32> to vector<8x128xf32>
    %728 = math.tanh %727 : vector<8x128xf32>
    %729 = vector.extract_strided_slice %710 {offsets = [0, 384], sizes = [8, 128], strides = [1, 1]} : vector<8x512xf32> to vector<8x128xf32>
    %cst_320 = arith.constant 5.000000e-01 : f32
    %730 = vector.broadcast %cst_320 : f32 to vector<8x128xf32>
    %731 = arith.mulf %730, %729 : vector<8x128xf32>
    %732 = math.tanh %731 : vector<8x128xf32>
    %cst_321 = arith.constant 1.000000e+00 : f32
    %733 = vector.broadcast %cst_321 : f32 to vector<8x128xf32>
    %734 = arith.addf %732, %733 : vector<8x128xf32>
    %cst_322 = arith.constant 5.000000e-01 : f32
    %735 = vector.broadcast %cst_322 : f32 to vector<8x128xf32>
    %736 = arith.mulf %735, %734 : vector<8x128xf32>
    %737 = arith.mulf %726, %623 : vector<8x128xf32>
    %738 = arith.mulf %718, %728 : vector<8x128xf32>
    %739 = arith.addf %737, %738 : vector<8x128xf32>
    %740 = math.tanh %739 : vector<8x128xf32>
    %741 = arith.mulf %736, %740 : vector<8x128xf32>
    %742 = tpu.concatenate %741, %663 in 1 : vector<8x128xf32>, vector<8x128xf32> -> vector<8x256xf32>
    %c1_323 = arith.constant 1 : index
    %c0_324 = arith.constant 0 : index
    %c0_325 = arith.constant 0 : index
    %743 = vector.load %arg2[%c1_323, %c0_324, %c0_325] : memref<3x256x512xf32, #tpu.memory_space<vmem>>, vector<1x256x512xf32>
    %744 = vector.shape_cast %743 : vector<1x256x512xf32> to vector<256x512xf32>
    %cst_326 = arith.constant dense<0.000000e+00> : vector<8x512xf32>
    %745 = tpu.matmul %742, %744, %cst_326 {dimension_numbers = #tpu.dot_dimension_numbers<[1], [0], [0], [1], [0, 0, 1, 1], [], []>} : vector<8x256xf32>, vector<256x512xf32>, vector<8x512xf32> -> vector<8x512xf32>
    %c1_327 = arith.constant 1 : index
    %c0_328 = arith.constant 0 : index
    %c0_329 = arith.constant 0 : index
    %746 = vector.load %arg3[%c1_327, %c0_328, %c0_329] : memref<3x8x512xf32, #tpu.memory_space<vmem>>, vector<1x8x512xf32>
    %747 = vector.shape_cast %746 : vector<1x8x512xf32> to vector<8x512xf32>
    %748 = arith.addf %745, %747 : vector<8x512xf32>
    %749 = vector.extract_strided_slice %748 {offsets = [0, 0], sizes = [8, 128], strides = [1, 1]} : vector<8x512xf32> to vector<8x128xf32>
    %cst_330 = arith.constant 5.000000e-01 : f32
    %750 = vector.broadcast %cst_330 : f32 to vector<8x128xf32>
    %751 = arith.mulf %750, %749 : vector<8x128xf32>
    %752 = math.tanh %751 : vector<8x128xf32>
    %cst_331 = arith.constant 1.000000e+00 : f32
    %753 = vector.broadcast %cst_331 : f32 to vector<8x128xf32>
    %754 = arith.addf %752, %753 : vector<8x128xf32>
    %cst_332 = arith.constant 5.000000e-01 : f32
    %755 = vector.broadcast %cst_332 : f32 to vector<8x128xf32>
    %756 = arith.mulf %755, %754 : vector<8x128xf32>
    %757 = vector.extract_strided_slice %748 {offsets = [0, 128], sizes = [8, 128], strides = [1, 1]} : vector<8x512xf32> to vector<8x128xf32>
    %cst_333 = arith.constant 5.000000e-01 : f32
    %758 = vector.broadcast %cst_333 : f32 to vector<8x128xf32>
    %759 = arith.mulf %758, %757 : vector<8x128xf32>
    %760 = math.tanh %759 : vector<8x128xf32>
    %cst_334 = arith.constant 1.000000e+00 : f32
    %761 = vector.broadcast %cst_334 : f32 to vector<8x128xf32>
    %762 = arith.addf %760, %761 : vector<8x128xf32>
    %cst_335 = arith.constant 5.000000e-01 : f32
    %763 = vector.broadcast %cst_335 : f32 to vector<8x128xf32>
    %764 = arith.mulf %763, %762 : vector<8x128xf32>
    %765 = vector.extract_strided_slice %748 {offsets = [0, 256], sizes = [8, 128], strides = [1, 1]} : vector<8x512xf32> to vector<8x128xf32>
    %766 = math.tanh %765 : vector<8x128xf32>
    %767 = vector.extract_strided_slice %748 {offsets = [0, 384], sizes = [8, 128], strides = [1, 1]} : vector<8x512xf32> to vector<8x128xf32>
    %cst_336 = arith.constant 5.000000e-01 : f32
    %768 = vector.broadcast %cst_336 : f32 to vector<8x128xf32>
    %769 = arith.mulf %768, %767 : vector<8x128xf32>
    %770 = math.tanh %769 : vector<8x128xf32>
    %cst_337 = arith.constant 1.000000e+00 : f32
    %771 = vector.broadcast %cst_337 : f32 to vector<8x128xf32>
    %772 = arith.addf %770, %771 : vector<8x128xf32>
    %cst_338 = arith.constant 5.000000e-01 : f32
    %773 = vector.broadcast %cst_338 : f32 to vector<8x128xf32>
    %774 = arith.mulf %773, %772 : vector<8x128xf32>
    %775 = arith.mulf %764, %661 : vector<8x128xf32>
    %776 = arith.mulf %756, %766 : vector<8x128xf32>
    %777 = arith.addf %775, %776 : vector<8x128xf32>
    %778 = math.tanh %777 : vector<8x128xf32>
    %779 = arith.mulf %774, %778 : vector<8x128xf32>
    %780 = tpu.concatenate %779, %701 in 1 : vector<8x128xf32>, vector<8x128xf32> -> vector<8x256xf32>
    %c2_339 = arith.constant 2 : index
    %c0_340 = arith.constant 0 : index
    %c0_341 = arith.constant 0 : index
    %781 = vector.load %arg2[%c2_339, %c0_340, %c0_341] : memref<3x256x512xf32, #tpu.memory_space<vmem>>, vector<1x256x512xf32>
    %782 = vector.shape_cast %781 : vector<1x256x512xf32> to vector<256x512xf32>
    %cst_342 = arith.constant dense<0.000000e+00> : vector<8x512xf32>
    %783 = tpu.matmul %780, %782, %cst_342 {dimension_numbers = #tpu.dot_dimension_numbers<[1], [0], [0], [1], [0, 0, 1, 1], [], []>} : vector<8x256xf32>, vector<256x512xf32>, vector<8x512xf32> -> vector<8x512xf32>
    %c2_343 = arith.constant 2 : index
    %c0_344 = arith.constant 0 : index
    %c0_345 = arith.constant 0 : index
    %784 = vector.load %arg3[%c2_343, %c0_344, %c0_345] : memref<3x8x512xf32, #tpu.memory_space<vmem>>, vector<1x8x512xf32>
    %785 = vector.shape_cast %784 : vector<1x8x512xf32> to vector<8x512xf32>
    %786 = arith.addf %783, %785 : vector<8x512xf32>
    %787 = vector.extract_strided_slice %786 {offsets = [0, 0], sizes = [8, 128], strides = [1, 1]} : vector<8x512xf32> to vector<8x128xf32>
    %cst_346 = arith.constant 5.000000e-01 : f32
    %788 = vector.broadcast %cst_346 : f32 to vector<8x128xf32>
    %789 = arith.mulf %788, %787 : vector<8x128xf32>
    %790 = math.tanh %789 : vector<8x128xf32>
    %cst_347 = arith.constant 1.000000e+00 : f32
    %791 = vector.broadcast %cst_347 : f32 to vector<8x128xf32>
    %792 = arith.addf %790, %791 : vector<8x128xf32>
    %cst_348 = arith.constant 5.000000e-01 : f32
    %793 = vector.broadcast %cst_348 : f32 to vector<8x128xf32>
    %794 = arith.mulf %793, %792 : vector<8x128xf32>
    %795 = vector.extract_strided_slice %786 {offsets = [0, 128], sizes = [8, 128], strides = [1, 1]} : vector<8x512xf32> to vector<8x128xf32>
    %cst_349 = arith.constant 5.000000e-01 : f32
    %796 = vector.broadcast %cst_349 : f32 to vector<8x128xf32>
    %797 = arith.mulf %796, %795 : vector<8x128xf32>
    %798 = math.tanh %797 : vector<8x128xf32>
    %cst_350 = arith.constant 1.000000e+00 : f32
    %799 = vector.broadcast %cst_350 : f32 to vector<8x128xf32>
    %800 = arith.addf %798, %799 : vector<8x128xf32>
    %cst_351 = arith.constant 5.000000e-01 : f32
    %801 = vector.broadcast %cst_351 : f32 to vector<8x128xf32>
    %802 = arith.mulf %801, %800 : vector<8x128xf32>
    %803 = vector.extract_strided_slice %786 {offsets = [0, 256], sizes = [8, 128], strides = [1, 1]} : vector<8x512xf32> to vector<8x128xf32>
    %804 = math.tanh %803 : vector<8x128xf32>
    %805 = vector.extract_strided_slice %786 {offsets = [0, 384], sizes = [8, 128], strides = [1, 1]} : vector<8x512xf32> to vector<8x128xf32>
    %cst_352 = arith.constant 5.000000e-01 : f32
    %806 = vector.broadcast %cst_352 : f32 to vector<8x128xf32>
    %807 = arith.mulf %806, %805 : vector<8x128xf32>
    %808 = math.tanh %807 : vector<8x128xf32>
    %cst_353 = arith.constant 1.000000e+00 : f32
    %809 = vector.broadcast %cst_353 : f32 to vector<8x128xf32>
    %810 = arith.addf %808, %809 : vector<8x128xf32>
    %cst_354 = arith.constant 5.000000e-01 : f32
    %811 = vector.broadcast %cst_354 : f32 to vector<8x128xf32>
    %812 = arith.mulf %811, %810 : vector<8x128xf32>
    %813 = arith.mulf %802, %699 : vector<8x128xf32>
    %814 = arith.mulf %794, %804 : vector<8x128xf32>
    %815 = arith.addf %813, %814 : vector<8x128xf32>
    %816 = math.tanh %815 : vector<8x128xf32>
    %817 = arith.mulf %812, %816 : vector<8x128xf32>
    %c7 = arith.constant 7 : index
    %c0_355 = arith.constant 0 : index
    %c0_356 = arith.constant 0 : index
    %818 = vector.load %arg1[%c7, %c0_355, %c0_356] : memref<8x8x128xf32, #tpu.memory_space<vmem>>, vector<1x8x128xf32>
    %819 = vector.shape_cast %818 : vector<1x8x128xf32> to vector<8x128xf32>
    %820 = tpu.concatenate %819, %741 in 1 : vector<8x128xf32>, vector<8x128xf32> -> vector<8x256xf32>
    %c0_357 = arith.constant 0 : index
    %c0_358 = arith.constant 0 : index
    %c0_359 = arith.constant 0 : index
    %821 = vector.load %arg2[%c0_357, %c0_358, %c0_359] : memref<3x256x512xf32, #tpu.memory_space<vmem>>, vector<1x256x512xf32>
    %822 = vector.shape_cast %821 : vector<1x256x512xf32> to vector<256x512xf32>
    %cst_360 = arith.constant dense<0.000000e+00> : vector<8x512xf32>
    %823 = tpu.matmul %820, %822, %cst_360 {dimension_numbers = #tpu.dot_dimension_numbers<[1], [0], [0], [1], [0, 0, 1, 1], [], []>} : vector<8x256xf32>, vector<256x512xf32>, vector<8x512xf32> -> vector<8x512xf32>
    %c0_361 = arith.constant 0 : index
    %c0_362 = arith.constant 0 : index
    %c0_363 = arith.constant 0 : index
    %824 = vector.load %arg3[%c0_361, %c0_362, %c0_363] : memref<3x8x512xf32, #tpu.memory_space<vmem>>, vector<1x8x512xf32>
    %825 = vector.shape_cast %824 : vector<1x8x512xf32> to vector<8x512xf32>
    %826 = arith.addf %823, %825 : vector<8x512xf32>
    %827 = vector.extract_strided_slice %826 {offsets = [0, 0], sizes = [8, 128], strides = [1, 1]} : vector<8x512xf32> to vector<8x128xf32>
    %cst_364 = arith.constant 5.000000e-01 : f32
    %828 = vector.broadcast %cst_364 : f32 to vector<8x128xf32>
    %829 = arith.mulf %828, %827 : vector<8x128xf32>
    %830 = math.tanh %829 : vector<8x128xf32>
    %cst_365 = arith.constant 1.000000e+00 : f32
    %831 = vector.broadcast %cst_365 : f32 to vector<8x128xf32>
    %832 = arith.addf %830, %831 : vector<8x128xf32>
    %cst_366 = arith.constant 5.000000e-01 : f32
    %833 = vector.broadcast %cst_366 : f32 to vector<8x128xf32>
    %834 = arith.mulf %833, %832 : vector<8x128xf32>
    %835 = vector.extract_strided_slice %826 {offsets = [0, 128], sizes = [8, 128], strides = [1, 1]} : vector<8x512xf32> to vector<8x128xf32>
    %cst_367 = arith.constant 5.000000e-01 : f32
    %836 = vector.broadcast %cst_367 : f32 to vector<8x128xf32>
    %837 = arith.mulf %836, %835 : vector<8x128xf32>
    %838 = math.tanh %837 : vector<8x128xf32>
    %cst_368 = arith.constant 1.000000e+00 : f32
    %839 = vector.broadcast %cst_368 : f32 to vector<8x128xf32>
    %840 = arith.addf %838, %839 : vector<8x128xf32>
    %cst_369 = arith.constant 5.000000e-01 : f32
    %841 = vector.broadcast %cst_369 : f32 to vector<8x128xf32>
    %842 = arith.mulf %841, %840 : vector<8x128xf32>
    %843 = vector.extract_strided_slice %826 {offsets = [0, 256], sizes = [8, 128], strides = [1, 1]} : vector<8x512xf32> to vector<8x128xf32>
    %844 = math.tanh %843 : vector<8x128xf32>
    %845 = vector.extract_strided_slice %826 {offsets = [0, 384], sizes = [8, 128], strides = [1, 1]} : vector<8x512xf32> to vector<8x128xf32>
    %cst_370 = arith.constant 5.000000e-01 : f32
    %846 = vector.broadcast %cst_370 : f32 to vector<8x128xf32>
    %847 = arith.mulf %846, %845 : vector<8x128xf32>
    %848 = math.tanh %847 : vector<8x128xf32>
    %cst_371 = arith.constant 1.000000e+00 : f32
    %849 = vector.broadcast %cst_371 : f32 to vector<8x128xf32>
    %850 = arith.addf %848, %849 : vector<8x128xf32>
    %cst_372 = arith.constant 5.000000e-01 : f32
    %851 = vector.broadcast %cst_372 : f32 to vector<8x128xf32>
    %852 = arith.mulf %851, %850 : vector<8x128xf32>
    %853 = arith.mulf %842, %739 : vector<8x128xf32>
    %854 = arith.mulf %834, %844 : vector<8x128xf32>
    %855 = arith.addf %853, %854 : vector<8x128xf32>
    %856 = math.tanh %855 : vector<8x128xf32>
    %857 = arith.mulf %852, %856 : vector<8x128xf32>
    %858 = tpu.concatenate %857, %779 in 1 : vector<8x128xf32>, vector<8x128xf32> -> vector<8x256xf32>
    %c1_373 = arith.constant 1 : index
    %c0_374 = arith.constant 0 : index
    %c0_375 = arith.constant 0 : index
    %859 = vector.load %arg2[%c1_373, %c0_374, %c0_375] : memref<3x256x512xf32, #tpu.memory_space<vmem>>, vector<1x256x512xf32>
    %860 = vector.shape_cast %859 : vector<1x256x512xf32> to vector<256x512xf32>
    %cst_376 = arith.constant dense<0.000000e+00> : vector<8x512xf32>
    %861 = tpu.matmul %858, %860, %cst_376 {dimension_numbers = #tpu.dot_dimension_numbers<[1], [0], [0], [1], [0, 0, 1, 1], [], []>} : vector<8x256xf32>, vector<256x512xf32>, vector<8x512xf32> -> vector<8x512xf32>
    %c1_377 = arith.constant 1 : index
    %c0_378 = arith.constant 0 : index
    %c0_379 = arith.constant 0 : index
    %862 = vector.load %arg3[%c1_377, %c0_378, %c0_379] : memref<3x8x512xf32, #tpu.memory_space<vmem>>, vector<1x8x512xf32>
    %863 = vector.shape_cast %862 : vector<1x8x512xf32> to vector<8x512xf32>
    %864 = arith.addf %861, %863 : vector<8x512xf32>
    %865 = vector.extract_strided_slice %864 {offsets = [0, 0], sizes = [8, 128], strides = [1, 1]} : vector<8x512xf32> to vector<8x128xf32>
    %cst_380 = arith.constant 5.000000e-01 : f32
    %866 = vector.broadcast %cst_380 : f32 to vector<8x128xf32>
    %867 = arith.mulf %866, %865 : vector<8x128xf32>
    %868 = math.tanh %867 : vector<8x128xf32>
    %cst_381 = arith.constant 1.000000e+00 : f32
    %869 = vector.broadcast %cst_381 : f32 to vector<8x128xf32>
    %870 = arith.addf %868, %869 : vector<8x128xf32>
    %cst_382 = arith.constant 5.000000e-01 : f32
    %871 = vector.broadcast %cst_382 : f32 to vector<8x128xf32>
    %872 = arith.mulf %871, %870 : vector<8x128xf32>
    %873 = vector.extract_strided_slice %864 {offsets = [0, 128], sizes = [8, 128], strides = [1, 1]} : vector<8x512xf32> to vector<8x128xf32>
    %cst_383 = arith.constant 5.000000e-01 : f32
    %874 = vector.broadcast %cst_383 : f32 to vector<8x128xf32>
    %875 = arith.mulf %874, %873 : vector<8x128xf32>
    %876 = math.tanh %875 : vector<8x128xf32>
    %cst_384 = arith.constant 1.000000e+00 : f32
    %877 = vector.broadcast %cst_384 : f32 to vector<8x128xf32>
    %878 = arith.addf %876, %877 : vector<8x128xf32>
    %cst_385 = arith.constant 5.000000e-01 : f32
    %879 = vector.broadcast %cst_385 : f32 to vector<8x128xf32>
    %880 = arith.mulf %879, %878 : vector<8x128xf32>
    %881 = vector.extract_strided_slice %864 {offsets = [0, 256], sizes = [8, 128], strides = [1, 1]} : vector<8x512xf32> to vector<8x128xf32>
    %882 = math.tanh %881 : vector<8x128xf32>
    %883 = vector.extract_strided_slice %864 {offsets = [0, 384], sizes = [8, 128], strides = [1, 1]} : vector<8x512xf32> to vector<8x128xf32>
    %cst_386 = arith.constant 5.000000e-01 : f32
    %884 = vector.broadcast %cst_386 : f32 to vector<8x128xf32>
    %885 = arith.mulf %884, %883 : vector<8x128xf32>
    %886 = math.tanh %885 : vector<8x128xf32>
    %cst_387 = arith.constant 1.000000e+00 : f32
    %887 = vector.broadcast %cst_387 : f32 to vector<8x128xf32>
    %888 = arith.addf %886, %887 : vector<8x128xf32>
    %cst_388 = arith.constant 5.000000e-01 : f32
    %889 = vector.broadcast %cst_388 : f32 to vector<8x128xf32>
    %890 = arith.mulf %889, %888 : vector<8x128xf32>
    %891 = arith.mulf %880, %777 : vector<8x128xf32>
    %892 = arith.mulf %872, %882 : vector<8x128xf32>
    %893 = arith.addf %891, %892 : vector<8x128xf32>
    %894 = math.tanh %893 : vector<8x128xf32>
    %895 = arith.mulf %890, %894 : vector<8x128xf32>
    %896 = tpu.concatenate %895, %817 in 1 : vector<8x128xf32>, vector<8x128xf32> -> vector<8x256xf32>
    %c2_389 = arith.constant 2 : index
    %c0_390 = arith.constant 0 : index
    %c0_391 = arith.constant 0 : index
    %897 = vector.load %arg2[%c2_389, %c0_390, %c0_391] : memref<3x256x512xf32, #tpu.memory_space<vmem>>, vector<1x256x512xf32>
    %898 = vector.shape_cast %897 : vector<1x256x512xf32> to vector<256x512xf32>
    %cst_392 = arith.constant dense<0.000000e+00> : vector<8x512xf32>
    %899 = tpu.matmul %896, %898, %cst_392 {dimension_numbers = #tpu.dot_dimension_numbers<[1], [0], [0], [1], [0, 0, 1, 1], [], []>} : vector<8x256xf32>, vector<256x512xf32>, vector<8x512xf32> -> vector<8x512xf32>
    %c2_393 = arith.constant 2 : index
    %c0_394 = arith.constant 0 : index
    %c0_395 = arith.constant 0 : index
    %900 = vector.load %arg3[%c2_393, %c0_394, %c0_395] : memref<3x8x512xf32, #tpu.memory_space<vmem>>, vector<1x8x512xf32>
    %901 = vector.shape_cast %900 : vector<1x8x512xf32> to vector<8x512xf32>
    %902 = arith.addf %899, %901 : vector<8x512xf32>
    %903 = vector.extract_strided_slice %902 {offsets = [0, 0], sizes = [8, 128], strides = [1, 1]} : vector<8x512xf32> to vector<8x128xf32>
    %cst_396 = arith.constant 5.000000e-01 : f32
    %904 = vector.broadcast %cst_396 : f32 to vector<8x128xf32>
    %905 = arith.mulf %904, %903 : vector<8x128xf32>
    %906 = math.tanh %905 : vector<8x128xf32>
    %cst_397 = arith.constant 1.000000e+00 : f32
    %907 = vector.broadcast %cst_397 : f32 to vector<8x128xf32>
    %908 = arith.addf %906, %907 : vector<8x128xf32>
    %cst_398 = arith.constant 5.000000e-01 : f32
    %909 = vector.broadcast %cst_398 : f32 to vector<8x128xf32>
    %910 = arith.mulf %909, %908 : vector<8x128xf32>
    %911 = vector.extract_strided_slice %902 {offsets = [0, 128], sizes = [8, 128], strides = [1, 1]} : vector<8x512xf32> to vector<8x128xf32>
    %cst_399 = arith.constant 5.000000e-01 : f32
    %912 = vector.broadcast %cst_399 : f32 to vector<8x128xf32>
    %913 = arith.mulf %912, %911 : vector<8x128xf32>
    %914 = math.tanh %913 : vector<8x128xf32>
    %cst_400 = arith.constant 1.000000e+00 : f32
    %915 = vector.broadcast %cst_400 : f32 to vector<8x128xf32>
    %916 = arith.addf %914, %915 : vector<8x128xf32>
    %cst_401 = arith.constant 5.000000e-01 : f32
    %917 = vector.broadcast %cst_401 : f32 to vector<8x128xf32>
    %918 = arith.mulf %917, %916 : vector<8x128xf32>
    %919 = vector.extract_strided_slice %902 {offsets = [0, 256], sizes = [8, 128], strides = [1, 1]} : vector<8x512xf32> to vector<8x128xf32>
    %920 = math.tanh %919 : vector<8x128xf32>
    %921 = vector.extract_strided_slice %902 {offsets = [0, 384], sizes = [8, 128], strides = [1, 1]} : vector<8x512xf32> to vector<8x128xf32>
    %cst_402 = arith.constant 5.000000e-01 : f32
    %922 = vector.broadcast %cst_402 : f32 to vector<8x128xf32>
    %923 = arith.mulf %922, %921 : vector<8x128xf32>
    %924 = math.tanh %923 : vector<8x128xf32>
    %cst_403 = arith.constant 1.000000e+00 : f32
    %925 = vector.broadcast %cst_403 : f32 to vector<8x128xf32>
    %926 = arith.addf %924, %925 : vector<8x128xf32>
    %cst_404 = arith.constant 5.000000e-01 : f32
    %927 = vector.broadcast %cst_404 : f32 to vector<8x128xf32>
    %928 = arith.mulf %927, %926 : vector<8x128xf32>
    %929 = arith.mulf %918, %815 : vector<8x128xf32>
    %930 = arith.mulf %910, %920 : vector<8x128xf32>
    %931 = arith.addf %929, %930 : vector<8x128xf32>
    %932 = math.tanh %931 : vector<8x128xf32>
    %933 = arith.mulf %928, %932 : vector<8x128xf32>
    %c0_405 = arith.constant 0 : index
    %c0_406 = arith.constant 0 : index
    %934 = vector.load %arg4[%c0_405, %c0_406] : memref<128x128xf32, #tpu.memory_space<vmem>>, vector<128x128xf32>
    %cst_407 = arith.constant dense<0.000000e+00> : vector<8x128xf32>
    %935 = tpu.matmul %933, %934, %cst_407 {dimension_numbers = #tpu.dot_dimension_numbers<[1], [0], [0], [1], [0, 0, 1, 1], [], []>} : vector<8x128xf32>, vector<128x128xf32>, vector<8x128xf32> -> vector<8x128xf32>
    %c0_408 = arith.constant 0 : index
    %c0_409 = arith.constant 0 : index
    %936 = vector.load %arg5[%c0_408, %c0_409] : memref<8x128xf32, #tpu.memory_space<vmem>>, vector<8x128xf32>
    %937 = arith.addf %935, %936 : vector<8x128xf32>
    %c0_410 = arith.constant 0 : index
    %c0_411 = arith.constant 0 : index
    %938 = vector.load %arg6[%c0_410, %c0_411] : memref<8x128xf32, #tpu.memory_space<vmem>>, vector<8x128xf32>
    tpu.vector_store %arg6[%c0_410, %c0_411], %937 {strides = array<i32>} : memref<8x128xf32, #tpu.memory_space<vmem>>, vector<8x128xf32>,
    return
  }
  func.func @transform_0(%arg0: i32) -> (i32, i32, i32) {
    %c0_i32 = arith.constant 0 : i32
    %c0_i32_0 = arith.constant 0 : i32
    %c0_i32_1 = arith.constant 0 : i32
    %c0_i32_2 = arith.constant 0 : i32
    return %c0_i32, %c0_i32_0, %c0_i32_1 : i32, i32, i32
  }
  func.func @transform_1(%arg0: i32) -> (i32, i32, i32) {
    %c0_i32 = arith.constant 0 : i32
    %c0_i32_0 = arith.constant 0 : i32
    %c0_i32_1 = arith.constant 0 : i32
    %c0_i32_2 = arith.constant 0 : i32
    return %c0_i32, %c0_i32_0, %c0_i32_1 : i32, i32, i32
  }
  func.func @transform_2(%arg0: i32) -> (i32, i32, i32) {
    %c0_i32 = arith.constant 0 : i32
    %c0_i32_0 = arith.constant 0 : i32
    %c0_i32_1 = arith.constant 0 : i32
    %c0_i32_2 = arith.constant 0 : i32
    return %c0_i32, %c0_i32_0, %c0_i32_1 : i32, i32, i32
  }
  func.func @transform_3(%arg0: i32) -> (i32, i32) {
    %c0_i32 = arith.constant 0 : i32
    %c0_i32_0 = arith.constant 0 : i32
    %c0_i32_1 = arith.constant 0 : i32
    return %c0_i32, %c0_i32_0 : i32, i32
  }
  func.func @transform_4(%arg0: i32) -> (i32, i32) {
    %c0_i32 = arith.constant 0 : i32
    %c0_i32_0 = arith.constant 0 : i32
    %c0_i32_1 = arith.constant 0 : i32
    return %c0_i32, %c0_i32_0 : i32, i32
  }
  func.func @transform_5(%arg0: i32) -> (i32, i32) {
    %c0_i32 = arith.constant 0 : i32
    %c0_i32_0 = arith.constant 0 : i32
    %c0_i32_1 = arith.constant 0 : i32
    return %c0_i32, %c0_i32_0 : i32, i32
  }
}

</mosaic_0001>

<llo_original>
// kernel: tpu_custom_call.1
$region0: #{tpu_custom_call.1}
  #allocation0 [shape = 'u32[]', space=smem, size = 0x4, offset = 0x4, fixed_abs, tag = 'smem constant byte address 0x4 - core index']
  #allocation1 [shape = 'u32[144,128]{1,0:T(1,128)}', space=vmem, size = 0x12000, scoped, tag = 'internal scratch']
  %s0 = inlined_call_operand.hbm [shape: f32[8,8,128], index: 0, kind: input, shape index: {}]
  %s1 = inlined_call_operand.hbm [shape: f32[3,256,512], index: 1, kind: input, shape index: {}]
  %s2 = inlined_call_operand.hbm [shape: f32[3,8,512], index: 2, kind: input, shape index: {}]
  %s3 = inlined_call_operand.hbm [shape: f32[128,128], index: 3, kind: input, shape index: {}]
  %s4 = inlined_call_operand.hbm [shape: f32[8,128], index: 4, kind: input, shape index: {}]
  %s5 = inlined_call_operand.hbm [shape: f32[8,128], index: 5, kind: output, shape index: {}]
  %s6 = sld [smem:[#allocation0]]
  $region50: #{tpu_custom_call.1} parent=0
    _
  %s8 = ssub.s32 1, %s6
  %s9 = scalar_select 0, %s8, %s6
  $region1: #{tpu_custom_call.1} parent=0
    #allocation2 [shape = 'u8[32768]{0}', space=vmem, size = 0x8000, scoped, tag = 'input window, operand 0, single buffered']
    #allocation3 [shape = 's32[1]{0}', space=sflag, size = 0x4, scoped, tag = 'scoped memory for tpu_custom_call.1']
    #allocation4 [shape = 's32[1]{0}', space=sflag, size = 0x4, scoped, tag = 'scoped memory for tpu_custom_call.1']
    #allocation5 [shape = 'u8[1572864]{0}', space=vmem, size = 0x180000, scoped, tag = 'input window, operand 1, single buffered']
    #allocation6 [shape = 's32[1]{0}', space=sflag, size = 0x4, scoped, tag = 'scoped memory for tpu_custom_call.1']
    #allocation7 [shape = 'u8[49152]{0}', space=vmem, size = 0xc000, scoped, tag = 'input window, operand 2, single buffered']
    #allocation8 [shape = 'u8[65536]{0}', space=vmem, size = 0x10000, scoped, tag = 'input window, operand 3, single buffered']
    #allocation9 [shape = 's32[1]{0}', space=sflag, size = 0x4, scoped, tag = 'scoped memory for tpu_custom_call.1']
    #allocation10 [shape = 'u8[4096]{0}', space=vmem, size = 0x1000, scoped, tag = 'input window, operand 4, single buffered']
    #allocation11 [shape = 'u8[4096]{0}', space=vmem, size = 0x1000, scoped, tag = 'output window, operand 0, single buffered']
    %10 = vsyncpa [#allocation3], 0
    %11 = vsyncpa [#allocation6], 0
    %12 = vsyncpa [#allocation9], 0
    %13 = vsyncpa [#allocation4], 0
    // Predicated region
    $region2: #{tpu_custom_call.1} parent=1 // pred_check
      _
    $region3: #{tpu_custom_call.1} parent=1 // pred_check_branch
      %15 = sbr.rel (0) target = $region5
    $region4: #{tpu_custom_call.1} parent=1 // pred_region
      %s17 = ssub.s32 1024, 1024
      %18 = vsyncadd [#allocation3], %s17
      %s19 = sshll.u32 [#allocation2], 4
      %s20 = int_to_ptr.vmem [resolvable:$true] %s19
      %25 = dma.hbm_to_vmem [thread:$0]  %s0, 1024, %s20, [#allocation3], 128, 128, 8
    $region5: #{tpu_custom_call.1} parent=1 // pred_fallthru
      _
    // Predicated region
    $region6: #{tpu_custom_call.1} parent=1 // pred_check
      _
    $region7: #{tpu_custom_call.1} parent=1 // pred_check_branch
      %27 = sbr.rel (0) target = $region9
    $region8: #{tpu_custom_call.1} parent=1 // pred_region
      %s29 = ssub.s32 49152, 49152
      %30 = vsyncadd [#allocation6], %s29
      %s31 = sshll.u32 [#allocation5], 4
      %s32 = int_to_ptr.vmem [resolvable:$true] %s31
      %37 = dma.hbm_to_vmem [thread:$0]  %s1, 49152, %s32, [#allocation6], 512, 512, 32
    $region9: #{tpu_custom_call.1} parent=1 // pred_fallthru
      _
    // Predicated region
    $region10: #{tpu_custom_call.1} parent=1 // pred_check
      _
    $region11: #{tpu_custom_call.1} parent=1 // pred_check_branch
      %39 = sbr.rel (0) target = $region13
    $region12: #{tpu_custom_call.1} parent=1 // pred_region
      %s41 = ssub.s32 1536, 1536
      %42 = vsyncadd [#allocation6], %s41
      %s43 = sshll.u32 [#allocation7], 4
      %s44 = int_to_ptr.vmem [resolvable:$true] %s43
      %49 = dma.hbm_to_vmem [thread:$0]  %s2, 1536, %s44, [#allocation6], 512, 512, 32
    $region13: #{tpu_custom_call.1} parent=1 // pred_fallthru
      _
    // Predicated region
    $region14: #{tpu_custom_call.1} parent=1 // pred_check
      _
    $region15: #{tpu_custom_call.1} parent=1 // pred_check_branch
      %51 = sbr.rel (0) target = $region17
    $region16: #{tpu_custom_call.1} parent=1 // pred_region
      %s53 = ssub.s32 2048, 2048
      %54 = vsyncadd [#allocation9], %s53
      %s55 = sshll.u32 [#allocation8], 4
      %s56 = int_to_ptr.vmem [resolvable:$true] %s55
      %61 = dma.hbm_to_vmem [thread:$0]  %s3, 2048, %s56, [#allocation9], 128, 128, 8
    $region17: #{tpu_custom_call.1} parent=1 // pred_fallthru
      _
    // Predicated region
    $region18: #{tpu_custom_call.1} parent=1 // pred_check
      _
    $region19: #{tpu_custom_call.1} parent=1 // pred_check_branch
      %63 = sbr.rel (0) target = $region21
    $region20: #{tpu_custom_call.1} parent=1 // pred_region
      %s65 = ssub.s32 128, 128
      %66 = vsyncadd [#allocation9], %s65
      %s68 = sshll.u32 [#allocation10], 4
      %s69 = int_to_ptr.vmem [resolvable:$true] %s68
      %71 = dma.hbm_to_vmem [thread:$0]  %s4, 128, %s69, [#allocation9]
    $region21: #{tpu_custom_call.1} parent=1 // pred_fallthru
      _
    // Predicated region
    $region22: #{tpu_custom_call.1} parent=1 // pred_check
      _
    $region23: #{tpu_custom_call.1} parent=1 // pred_check_branch
      %73 = sbr.rel (0) target = $region25
    $region24: #{tpu_custom_call.1} parent=1 // pred_region
      %74 = dma.done [#allocation3], 1024
    $region25: #{tpu_custom_call.1} parent=1 // pred_fallthru
      _
    // Predicated region
    $region26: #{tpu_custom_call.1} parent=1 // pred_check
      _
    $region27: #{tpu_custom_call.1} parent=1 // pred_check_branch
      %76 = sbr.rel (0) target = $region29
    $region28: #{tpu_custom_call.1} parent=1 // pred_region
      %77 = dma.done [#allocation6], 49152
    $region29: #{tpu_custom_call.1} parent=1 // pred_fallthru
      _
    // Predicated region
    $region30: #{tpu_custom_call.1} parent=1 // pred_check
      _
    $region31: #{tpu_custom_call.1} parent=1 // pred_check_branch
      %79 = sbr.rel (0) target = $region33
    $region32: #{tpu_custom_call.1} parent=1 // pred_region
      %80 = dma.done [#allocation6], 1536
    $region33: #{tpu_custom_call.1} parent=1 // pred_fallthru
      _
    // Predicated region
    $region34: #{tpu_custom_call.1} parent=1 // pred_check
      _
    $region35: #{tpu_custom_call.1} parent=1 // pred_check_branch
      %82 = sbr.rel (0) target = $region37
    $region36: #{tpu_custom_call.1} parent=1 // pred_region
      %83 = dma.done [#allocation9], 2048
    $region37: #{tpu_custom_call.1} parent=1 // pred_fallthru
      _
    // Predicated region
    $region38: #{tpu_custom_call.1} parent=1 // pred_check
      _
    $region39: #{tpu_custom_call.1} parent=1 // pred_check_branch
      %85 = sbr.rel (0) target = $region41
    $region40: #{tpu_custom_call.1} parent=1 // pred_region
      %86 = dma.done [#allocation9], 128
    $region41: #{tpu_custom_call.1} parent=1 // pred_fallthru
      _
    %v87 = vld [vmem:[#allocation2] sm:$0xff]
    %v88 = vld [vmem:[#allocation5] sm:$0xff]
    %v89 = vld [vmem:[#allocation5 + $0x8] sm:$0xff]
    %v90 = vld [vmem:[#allocation5 + $0x10] sm:$0xff]
    %v91 = vld [vmem:[#allocation5 + $0x18] sm:$0xff]
    %v92 = vld [vmem:[#allocation5 + $0x20] sm:$0xff]
    %v93 = vld [vmem:[#allocation5 + $0x28] sm:$0xff]
    %v94 = vld [vmem:[#allocation5 + $0x30] sm:$0xff]
    %v95 = vld [vmem:[#allocation5 + $0x38] sm:$0xff]
    %v96 = vld [vmem:[#allocation5 + $0x40] sm:$0xff]
    %v97 = vld [vmem:[#allocation5 + $0x48] sm:$0xff]
    %v98 = vld [vmem:[#allocation5 + $0x50] sm:$0xff]
    %v99 = vld [vmem:[#allocation5 + $0x58] sm:$0xff]
    %v100 = vld [vmem:[#allocation5 + $0x60] sm:$0xff]
    %v101 = vld [vmem:[#allocation5 + $0x68] sm:$0xff]
    %v102 = vld [vmem:[#allocation5 + $0x70] sm:$0xff]
    %v103 = vld [vmem:[#allocation5 + $0x78] sm:$0xff]
    %v104 = vld [vmem:[#allocation5 + $0x80] sm:$0xff]
    %v105 = vld [vmem:[#allocation5 + $0x88] sm:$0xff]
    %v106 = vld [vmem:[#allocation5 + $0x90] sm:$0xff]
    %v107 = vld [vmem:[#allocation5 + $0x98] sm:$0xff]
    %v108 = vld [vmem:[#allocation5 + $0xa0] sm:$0xff]
    %v109 = vld [vmem:[#allocation5 + $0xa8] sm:$0xff]
    %v110 = vld [vmem:[#allocation5 + $0xb0] sm:$0xff]
    %v111 = vld [vmem:[#allocation5 + $0xb8] sm:$0xff]
    %v112 = vld [vmem:[#allocation5 + $0xc0] sm:$0xff]
    %v113 = vld [vmem:[#allocation5 + $0xc8] sm:$0xff]
    %v114 = vld [vmem:[#allocation5 + $0xd0] sm:$0xff]
    %v115 = vld [vmem:[#allocation5 + $0xd8] sm:$0xff]
    %v116 = vld [vmem:[#allocation5 + $0xe0] sm:$0xff]
    %v117 = vld [vmem:[#allocation5 + $0xe8] sm:$0xff]
    %v118 = vld [vmem:[#allocation5 + $0xf0] sm:$0xff]
    %v119 = vld [vmem:[#allocation5 + $0xf8] sm:$0xff]
    %v120 = vld [vmem:[#allocation5 + $0x100] sm:$0xff]
    %v121 = vld [vmem:[#allocation5 + $0x108] sm:$0xff]
    %v122 = vld [vmem:[#allocation5 + $0x110] sm:$0xff]
    %v123 = vld [vmem:[#allocation5 + $0x118] sm:$0xff]
    %v124 = vld [vmem:[#allocation5 + $0x120] sm:$0xff]
    %v125 = vld [vmem:[#allocation5 + $0x128] sm:$0xff]
    %v126 = vld [vmem:[#allocation5 + $0x130] sm:$0xff]
    %v127 = vld [vmem:[#allocation5 + $0x138] sm:$0xff]
    %v128 = vld [vmem:[#allocation5 + $0x140] sm:$0xff]
    %v129 = vld [vmem:[#allocation5 + $0x148] sm:$0xff]
    %v130 = vld [vmem:[#allocation5 + $0x150] sm:$0xff]
    %v131 = vld [vmem:[#allocation5 + $0x158] sm:$0xff]
    %v132 = vld [vmem:[#allocation5 + $0x160] sm:$0xff]
    %v133 = vld [vmem:[#allocation5 + $0x168] sm:$0xff]
    %v134 = vld [vmem:[#allocation5 + $0x170] sm:$0xff]
    %v135 = vld [vmem:[#allocation5 + $0x178] sm:$0xff]
    %v136 = vld [vmem:[#allocation5 + $0x180] sm:$0xff]
    %v137 = vld [vmem:[#allocation5 + $0x188] sm:$0xff]
    %v138 = vld [vmem:[#allocation5 + $0x190] sm:$0xff]
    %v139 = vld [vmem:[#allocation5 + $0x198] sm:$0xff]
    %v140 = vld [vmem:[#allocation5 + $0x1a0] sm:$0xff]
    %v141 = vld [vmem:[#allocation5 + $0x1a8] sm:$0xff]
    %v142 = vld [vmem:[#allocation5 + $0x1b0] sm:$0xff]
    %v143 = vld [vmem:[#allocation5 + $0x1b8] sm:$0xff]
    %v144 = vld [vmem:[#allocation5 + $0x1c0] sm:$0xff]
    %v145 = vld [vmem:[#allocation5 + $0x1c8] sm:$0xff]
    %v146 = vld [vmem:[#allocation5 + $0x1d0] sm:$0xff]
    %v147 = vld [vmem:[#allocation5 + $0x1d8] sm:$0xff]
    %v148 = vld [vmem:[#allocation5 + $0x1e0] sm:$0xff]
    %v149 = vld [vmem:[#allocation5 + $0x1e8] sm:$0xff]
    %v150 = vld [vmem:[#allocation5 + $0x1f0] sm:$0xff]
    %v151 = vld [vmem:[#allocation5 + $0x1f8] sm:$0xff]
    %v152 = vld [vmem:[#allocation5 + $0x200] sm:$0xff]
    %v153 = vld [vmem:[#allocation5 + $0x208] sm:$0xff]
    %v154 = vld [vmem:[#allocation5 + $0x210] sm:$0xff]
    %v155 = vld [vmem:[#allocation5 + $0x218] sm:$0xff]
    %v156 = vld [vmem:[#allocation5 + $0x220] sm:$0xff]
    %v157 = vld [vmem:[#allocation5 + $0x228] sm:$0xff]
    %v158 = vld [vmem:[#allocation5 + $0x230] sm:$0xff]
    %v159 = vld [vmem:[#allocation5 + $0x238] sm:$0xff]
    %v160 = vld [vmem:[#allocation5 + $0x240] sm:$0xff]
    %v161 = vld [vmem:[#allocation5 + $0x248] sm:$0xff]
    %v162 = vld [vmem:[#allocation5 + $0x250] sm:$0xff]
    %v163 = vld [vmem:[#allocation5 + $0x258] sm:$0xff]
    %v164 = vld [vmem:[#allocation5 + $0x260] sm:$0xff]
    %v165 = vld [vmem:[#allocation5 + $0x268] sm:$0xff]
    %v166 = vld [vmem:[#allocation5 + $0x270] sm:$0xff]
    %v167 = vld [vmem:[#allocation5 + $0x278] sm:$0xff]
    %v168 = vld [vmem:[#allocation5 + $0x280] sm:$0xff]
    %v169 = vld [vmem:[#allocation5 + $0x288] sm:$0xff]
    %v170 = vld [vmem:[#allocation5 + $0x290] sm:$0xff]
    %v171 = vld [vmem:[#allocation5 + $0x298] sm:$0xff]
    %v172 = vld [vmem:[#allocation5 + $0x2a0] sm:$0xff]
    %v173 = vld [vmem:[#allocation5 + $0x2a8] sm:$0xff]
    %v174 = vld [vmem:[#allocation5 + $0x2b0] sm:$0xff]
    %v175 = vld [vmem:[#allocation5 + $0x2b8] sm:$0xff]
    %v176 = vld [vmem:[#allocation5 + $0x2c0] sm:$0xff]
    %v177 = vld [vmem:[#allocation5 + $0x2c8] sm:$0xff]
    %v178 = vld [vmem:[#allocation5 + $0x2d0] sm:$0xff]
    %v179 = vld [vmem:[#allocation5 + $0x2d8] sm:$0xff]
    %v180 = vld [vmem:[#allocation5 + $0x2e0] sm:$0xff]
    %v181 = vld [vmem:[#allocation5 + $0x2e8] sm:$0xff]
    %v182 = vld [vmem:[#allocation5 + $0x2f0] sm:$0xff]
    %v183 = vld [vmem:[#allocation5 + $0x2f8] sm:$0xff]
    %v184 = vld [vmem:[#allocation5 + $0x300] sm:$0xff]
    %v185 = vld [vmem:[#allocation5 + $0x308] sm:$0xff]
    %v186 = vld [vmem:[#allocation5 + $0x310] sm:$0xff]
    %v187 = vld [vmem:[#allocation5 + $0x318] sm:$0xff]
    %v188 = vld [vmem:[#allocation5 + $0x320] sm:$0xff]
    %v189 = vld [vmem:[#allocation5 + $0x328] sm:$0xff]
    %v190 = vld [vmem:[#allocation5 + $0x330] sm:$0xff]
    %v191 = vld [vmem:[#allocation5 + $0x338] sm:$0xff]
    %v192 = vld [vmem:[#allocation5 + $0x340] sm:$0xff]
    %v193 = vld [vmem:[#allocation5 + $0x348] sm:$0xff]
    %v194 = vld [vmem:[#allocation5 + $0x350] sm:$0xff]
    %v195 = vld [vmem:[#allocation5 + $0x358] sm:$0xff]
    %v196 = vld [vmem:[#allocation5 + $0x360] sm:$0xff]
    %v197 = vld [vmem:[#allocation5 + $0x368] sm:$0xff]
    %v198 = vld [vmem:[#allocation5 + $0x370] sm:$0xff]
    %v199 = vld [vmem:[#allocation5 + $0x378] sm:$0xff]
    %v200 = vld [vmem:[#allocation5 + $0x380] sm:$0xff]
    %v201 = vld [vmem:[#allocation5 + $0x388] sm:$0xff]
    %v202 = vld [vmem:[#allocation5 + $0x390] sm:$0xff]
    %v203 = vld [vmem:[#allocation5 + $0x398] sm:$0xff]
    %v204 = vld [vmem:[#allocation5 + $0x3a0] sm:$0xff]
    %v205 = vld [vmem:[#allocation5 + $0x3a8] sm:$0xff]
    %v206 = vld [vmem:[#allocation5 + $0x3b0] sm:$0xff]
    %v207 = vld [vmem:[#allocation5 + $0x3b8] sm:$0xff]
    %v208 = vld [vmem:[#allocation5 + $0x3c0] sm:$0xff]
    %v209 = vld [vmem:[#allocation5 + $0x3c8] sm:$0xff]
    %v210 = vld [vmem:[#allocation5 + $0x3d0] sm:$0xff]
    %v211 = vld [vmem:[#allocation5 + $0x3d8] sm:$0xff]
    %v212 = vld [vmem:[#allocation5 + $0x3e0] sm:$0xff]
    %v213 = vld [vmem:[#allocation5 + $0x3e8] sm:$0xff]
    %v214 = vld [vmem:[#allocation5 + $0x3f0] sm:$0xff]
    %v215 = vld [vmem:[#allocation5 + $0x3f8] sm:$0xff]
    %v216 = vld [vmem:[#allocation7] sm:$0xff]
    %v217 = vld [vmem:[#allocation7 + $0x8] sm:$0xff]
    %v218 = vld [vmem:[#allocation7 + $0x10] sm:$0xff]
    %v219 = vld [vmem:[#allocation7 + $0x18] sm:$0xff]
    %220 = vmatprep.subr.mxu0 %v89
    %221 = vmatpush1.msra.mxu0 %v88
    %222 = vmatprep.subr.mxu0 %v93
    %223 = vmatpush1.msra.mxu0 %v92
    %224 = vmatprep.subr.mxu0 %v97
    %225 = vmatpush1.msra.mxu0 %v96
    %226 = vmatprep.subr.mxu0 %v101
    %227 = vmatpush1.msra.mxu0 %v100
    %228 = vmatprep.subr.mxu0 %v105
    %229 = vmatpush1.msra.mxu0 %v104
    %230 = vmatprep.subr.mxu0 %v109
    %231 = vmatpush1.msra.mxu0 %v108
    %232 = vmatprep.subr.mxu0 %v113
    %233 = vmatpush1.msra.mxu0 %v112
    %234 = vmatprep.subr.mxu0 %v117
    %235 = vmatpush1.msra.mxu0 %v116
    %236 = vmatprep.subr.mxu0 %v121
    %237 = vmatpush1.msra.mxu0 %v120
    %238 = vmatprep.subr.mxu0 %v125
    %239 = vmatpush1.msra.mxu0 %v124
    %240 = vmatprep.subr.mxu0 %v129
    %241 = vmatpush1.msra.mxu0 %v128
    %242 = vmatprep.subr.mxu0 %v133
    %243 = vmatpush1.msra.mxu0 %v132
    %244 = vmatprep.subr.mxu0 %v137
    %245 = vmatpush1.msra.mxu0 %v136
    %246 = vmatprep.subr.mxu0 %v141
    %247 = vmatpush1.msra.mxu0 %v140
    %248 = vmatprep.subr.mxu0 %v145
    %249 = vmatpush1.msra.mxu0 %v144
    %250 = vmatprep.subr.mxu0 %v149
    %251 = vmatpush1.msra.mxu0 %v148
    %252 = vmatprep.subr.mxu0 %v153
    %253 = vmatpush1.msra.mxu0 %v152
    %254 = vmatprep.subr.mxu0 %v157
    %255 = vmatpush1.msra.mxu0 %v156
    %256 = vmatprep.subr.mxu0 %v161
    %257 = vmatpush1.msra.mxu0 %v160
    %258 = vmatprep.subr.mxu0 %v165
    %259 = vmatpush1.msra.mxu0 %v164
    %260 = vmatprep.subr.mxu0 %v169
    %261 = vmatpush1.msra.mxu0 %v168
    %262 = vmatprep.subr.mxu0 %v173
    %263 = vmatpush1.msra.mxu0 %v172
    %264 = vmatprep.subr.mxu0 %v177
    %265 = vmatpush1.msra.mxu0 %v176
    %266 = vmatprep.subr.mxu0 %v181
    %267 = vmatpush1.msra.mxu0 %v180
    %268 = vmatprep.subr.mxu0 %v185
    %269 = vmatpush1.msra.mxu0 %v184
    %270 = vmatprep.subr.mxu0 %v189
    %271 = vmatpush1.msra.mxu0 %v188
    %272 = vmatprep.subr.mxu0 %v193
    %273 = vmatpush1.msra.mxu0 %v192
    %274 = vmatprep.subr.mxu0 %v197
    %275 = vmatpush1.msra.mxu0 %v196
    %276 = vmatprep.subr.mxu0 %v201
    %277 = vmatpush1.msra.mxu0 %v200
    %278 = vmatprep.subr.mxu0 %v205
    %279 = vmatpush1.msra.mxu0 %v204
    %280 = vmatprep.subr.mxu0 %v209
    %281 = vmatpush1.msra.mxu0 %v208
    %282 = vmatprep.subr.mxu0 %v213
    %283 = vmatpush1.msra.mxu0 %v212
    %284 = vmatprep.mubr.f32.mxu0 0.0
    %285 = vmatmul.mubr.f32.gmra.mrb[0].mxu0 %v87
    %v286 = vpop.f32.mrb[0].mxu0
    %v287 = vadd.f32 %v216, %v286
    %v288 = vpop.f32.mrb[0].mxu0
    %v289 = vadd.f32 %v217, %v288
    %290 = vdwg.mxu0
    %291 = vmatprep.subr.mxu0 %v91
    %292 = vmatpush1.msra.mxu0 %v90
    %293 = vmatprep.subr.mxu0 %v95
    %294 = vmatpush1.msra.mxu0 %v94
    %295 = vmatprep.subr.mxu0 %v99
    %296 = vmatpush1.msra.mxu0 %v98
    %297 = vmatprep.subr.mxu0 %v103
    %298 = vmatpush1.msra.mxu0 %v102
    %299 = vmatprep.subr.mxu0 %v107
    %300 = vmatpush1.msra.mxu0 %v106
    %301 = vmatprep.subr.mxu0 %v111
    %302 = vmatpush1.msra.mxu0 %v110
    %303 = vmatprep.subr.mxu0 %v115
    %304 = vmatpush1.msra.mxu0 %v114
    %305 = vmatprep.subr.mxu0 %v119
    %306 = vmatpush1.msra.mxu0 %v118
    %307 = vmatprep.subr.mxu0 %v123
    %308 = vmatpush1.msra.mxu0 %v122
    %309 = vmatprep.subr.mxu0 %v127
    %310 = vmatpush1.msra.mxu0 %v126
    %311 = vmatprep.subr.mxu0 %v131
    %312 = vmatpush1.msra.mxu0 %v130
    %313 = vmatprep.subr.mxu0 %v135
    %314 = vmatpush1.msra.mxu0 %v134
    %315 = vmatprep.subr.mxu0 %v139
    %316 = vmatpush1.msra.mxu0 %v138
    %317 = vmatprep.subr.mxu0 %v143
    %318 = vmatpush1.msra.mxu0 %v142
    %319 = vmatprep.subr.mxu0 %v147
    %320 = vmatpush1.msra.mxu0 %v146
    %321 = vmatprep.subr.mxu0 %v151
    %322 = vmatpush1.msra.mxu0 %v150
    %323 = vmatprep.subr.mxu0 %v155
    %324 = vmatpush1.msra.mxu0 %v154
    %325 = vmatprep.subr.mxu0 %v159
    %326 = vmatpush1.msra.mxu0 %v158
    %327 = vmatprep.subr.mxu0 %v163
    %328 = vmatpush1.msra.mxu0 %v162
    %329 = vmatprep.subr.mxu0 %v167
    %330 = vmatpush1.msra.mxu0 %v166
    %331 = vmatprep.subr.mxu0 %v171
    %332 = vmatpush1.msra.mxu0 %v170
    %333 = vmatprep.subr.mxu0 %v175
    %334 = vmatpush1.msra.mxu0 %v174
    %335 = vmatprep.subr.mxu0 %v179
    %336 = vmatpush1.msra.mxu0 %v178
    %337 = vmatprep.subr.mxu0 %v183
    %338 = vmatpush1.msra.mxu0 %v182
    %339 = vmatprep.subr.mxu0 %v187
    %340 = vmatpush1.msra.mxu0 %v186
    %341 = vmatprep.subr.mxu0 %v191
    %342 = vmatpush1.msra.mxu0 %v190
    %343 = vmatprep.subr.mxu0 %v195
    %344 = vmatpush1.msra.mxu0 %v194
    %345 = vmatprep.subr.mxu0 %v199
    %346 = vmatpush1.msra.mxu0 %v198
    %347 = vmatprep.subr.mxu0 %v203
    %348 = vmatpush1.msra.mxu0 %v202
    %349 = vmatprep.subr.mxu0 %v207
    %350 = vmatpush1.msra.mxu0 %v206
    %351 = vmatprep.subr.mxu0 %v211
    %352 = vmatpush1.msra.mxu0 %v210
    %353 = vmatprep.subr.mxu0 %v215
    %354 = vmatpush1.msra.mxu0 %v214
    %355 = vmatprep.mubr.f32.mxu0 0.0
    %356 = vmatmul.mubr.f32.gmra.mrb[0].mxu0 %v87
    %v357 = vpop.f32.mrb[0].mxu0
    %v358 = vadd.f32 %v218, %v357
    %v359 = vpop.f32.mrb[0].mxu0
    %v360 = vadd.f32 %v219, %v359
    %361 = vdwg.mxu0
    %v362 = vmul.f32 %v287, 0.5
    %v363 = vtanh.pop %v362
    %v364 = vadd.f32 %v363, 1.0
    %v365 = vmul.f32 %v364, 0.5
    %v366 = vmul.f32 %v289, 0.5
    %v367 = vtanh.pop %v366
    %v368 = vadd.f32 %v367, 1.0
    %v369 = vmul.f32 %v368, 0.5
    %v370 = vtanh.pop %v358
    %v371 = vmul.f32 %v360, 0.5
    %v372 = vtanh.pop %v371
    %v373 = vadd.f32 %v372, 1.0
    %v374 = vmul.f32 %v373, 0.5
    %v375 = vmul.f32 %v369, 0.0
    %v376 = vmul.f32 %v365, %v370
    %v377 = vadd.f32 %v375, %v376
    %v378 = vtanh.pop %v377
    %v379 = vmul.f32 %v374, %v378
    %s380 = scalar_lea.vmem [#allocation5], 1024
    %v381 = vld [vmem:[%s380] sm:$0xff]
    %v382 = vld [vmem:[%s380 + $0x8] sm:$0xff]
    %v383 = vld [vmem:[%s380 + $0x10] sm:$0xff]
    %v384 = vld [vmem:[%s380 + $0x18] sm:$0xff]
    %v385 = vld [vmem:[%s380 + $0x20] sm:$0xff]
    %v386 = vld [vmem:[%s380 + $0x28] sm:$0xff]
    %v387 = vld [vmem:[%s380 + $0x30] sm:$0xff]
    %v388 = vld [vmem:[%s380 + $0x38] sm:$0xff]
    %v389 = vld [vmem:[%s380 + $0x40] sm:$0xff]
    %v390 = vld [vmem:[%s380 + $0x48] sm:$0xff]
    %v391 = vld [vmem:[%s380 + $0x50] sm:$0xff]
    %v392 = vld [vmem:[%s380 + $0x58] sm:$0xff]
    %v393 = vld [vmem:[%s380 + $0x60] sm:$0xff]
    %v394 = vld [vmem:[%s380 + $0x68] sm:$0xff]
    %v395 = vld [vmem:[%s380 + $0x70] sm:$0xff]
    %v396 = vld [vmem:[%s380 + $0x78] sm:$0xff]
    %v397 = vld [vmem:[%s380 + $0x80] sm:$0xff]
    %v398 = vld [vmem:[%s380 + $0x88] sm:$0xff]
    %v399 = vld [vmem:[%s380 + $0x90] sm:$0xff]
    %v400 = vld [vmem:[%s380 + $0x98] sm:$0xff]
    %v401 = vld [vmem:[%s380 + $0xa0] sm:$0xff]
    %v402 = vld [vmem:[%s380 + $0xa8] sm:$0xff]
    %v403 = vld [vmem:[%s380 + $0xb0] sm:$0xff]
    %v404 = vld [vmem:[%s380 + $0xb8] sm:$0xff]
    %v405 = vld [vmem:[%s380 + $0xc0] sm:$0xff]
    %v406 = vld [vmem:[%s380 + $0xc8] sm:$0xff]
    %v407 = vld [vmem:[%s380 + $0xd0] sm:$0xff]
    %v408 = vld [vmem:[%s380 + $0xd8] sm:$0xff]
    %v409 = vld [vmem:[%s380 + $0xe0] sm:$0xff]
    %v410 = vld [vmem:[%s380 + $0xe8] sm:$0xff]
    %v411 = vld [vmem:[%s380 + $0xf0] sm:$0xff]
    %v412 = vld [vmem:[%s380 + $0xf8] sm:$0xff]
    %v413 = vld [vmem:[%s380 + $0x100] sm:$0xff]
    %v414 = vld [vmem:[%s380 + $0x108] sm:$0xff]
    %v415 = vld [vmem:[%s380 + $0x110] sm:$0xff]
    %v416 = vld [vmem:[%s380 + $0x118] sm:$0xff]
    %v417 = vld [vmem:[%s380 + $0x120] sm:$0xff]
    %v418 = vld [vmem:[%s380 + $0x128] sm:$0xff]
    %v419 = vld [vmem:[%s380 + $0x130] sm:$0xff]
    %v420 = vld [vmem:[%s380 + $0x138] sm:$0xff]
    %v421 = vld [vmem:[%s380 + $0x140] sm:$0xff]
    %v422 = vld [vmem:[%s380 + $0x148] sm:$0xff]
    %v423 = vld [vmem:[%s380 + $0x150] sm:$0xff]
    %v424 = vld [vmem:[%s380 + $0x158] sm:$0xff]
    %v425 = vld [vmem:[%s380 + $0x160] sm:$0xff]
    %v426 = vld [vmem:[%s380 + $0x168] sm:$0xff]
    %v427 = vld [vmem:[%s380 + $0x170] sm:$0xff]
    %v428 = vld [vmem:[%s380 + $0x178] sm:$0xff]
    %v429 = vld [vmem:[%s380 + $0x180] sm:$0xff]
    %v430 = vld [vmem:[%s380 + $0x188] sm:$0xff]
    %v431 = vld [vmem:[%s380 + $0x190] sm:$0xff]
    %v432 = vld [vmem:[%s380 + $0x198] sm:$0xff]
    %v433 = vld [vmem:[%s380 + $0x1a0] sm:$0xff]
    %v434 = vld [vmem:[%s380 + $0x1a8] sm:$0xff]
    %v435 = vld [vmem:[%s380 + $0x1b0] sm:$0xff]
    %v436 = vld [vmem:[%s380 + $0x1b8] sm:$0xff]
    %v437 = vld [vmem:[%s380 + $0x1c0] sm:$0xff]
    %v438 = vld [vmem:[%s380 + $0x1c8] sm:$0xff]
    %v439 = vld [vmem:[%s380 + $0x1d0] sm:$0xff]
    %v440 = vld [vmem:[%s380 + $0x1d8] sm:$0xff]
    %v441 = vld [vmem:[%s380 + $0x1e0] sm:$0xff]
    %v442 = vld [vmem:[%s380 + $0x1e8] sm:$0xff]
    %v443 = vld [vmem:[%s380 + $0x1f0] sm:$0xff]
    %v444 = vld [vmem:[%s380 + $0x1f8] sm:$0xff]
    %v445 = vld [vmem:[%s380 + $0x200] sm:$0xff]
    %v446 = vld [vmem:[%s380 + $0x208] sm:$0xff]
    %v447 = vld [vmem:[%s380 + $0x210] sm:$0xff]
    %v448 = vld [vmem:[%s380 + $0x218] sm:$0xff]
    %v449 = vld [vmem:[%s380 + $0x220] sm:$0xff]
    %v450 = vld [vmem:[%s380 + $0x228] sm:$0xff]
    %v451 = vld [vmem:[%s380 + $0x230] sm:$0xff]
    %v452 = vld [vmem:[%s380 + $0x238] sm:$0xff]
    %v453 = vld [vmem:[%s380 + $0x240] sm:$0xff]
    %v454 = vld [vmem:[%s380 + $0x248] sm:$0xff]
    %v455 = vld [vmem:[%s380 + $0x250] sm:$0xff]
    %v456 = vld [vmem:[%s380 + $0x258] sm:$0xff]
    %v457 = vld [vmem:[%s380 + $0x260] sm:$0xff]
    %v458 = vld [vmem:[%s380 + $0x268] sm:$0xff]
    %v459 = vld [vmem:[%s380 + $0x270] sm:$0xff]
    %v460 = vld [vmem:[%s380 + $0x278] sm:$0xff]
    %v461 = vld [vmem:[%s380 + $0x280] sm:$0xff]
    %v462 = vld [vmem:[%s380 + $0x288] sm:$0xff]
    %v463 = vld [vmem:[%s380 + $0x290] sm:$0xff]
    %v464 = vld [vmem:[%s380 + $0x298] sm:$0xff]
    %v465 = vld [vmem:[%s380 + $0x2a0] sm:$0xff]
    %v466 = vld [vmem:[%s380 + $0x2a8] sm:$0xff]
    %v467 = vld [vmem:[%s380 + $0x2b0] sm:$0xff]
    %v468 = vld [vmem:[%s380 + $0x2b8] sm:$0xff]
    %v469 = vld [vmem:[%s380 + $0x2c0] sm:$0xff]
    %v470 = vld [vmem:[%s380 + $0x2c8] sm:$0xff]
    %v471 = vld [vmem:[%s380 + $0x2d0] sm:$0xff]
    %v472 = vld [vmem:[%s380 + $0x2d8] sm:$0xff]
    %v473 = vld [vmem:[%s380 + $0x2e0] sm:$0xff]
    %v474 = vld [vmem:[%s380 + $0x2e8] sm:$0xff]
    %v475 = vld [vmem:[%s380 + $0x2f0] sm:$0xff]
    %v476 = vld [vmem:[%s380 + $0x2f8] sm:$0xff]
    %v477 = vld [vmem:[%s380 + $0x300] sm:$0xff]
    %v478 = vld [vmem:[%s380 + $0x308] sm:$0xff]
    %v479 = vld [vmem:[%s380 + $0x310] sm:$0xff]
    %v480 = vld [vmem:[%s380 + $0x318] sm:$0xff]
    %v481 = vld [vmem:[%s380 + $0x320] sm:$0xff]
    %v482 = vld [vmem:[%s380 + $0x328] sm:$0xff]
    %v483 = vld [vmem:[%s380 + $0x330] sm:$0xff]
    %v484 = vld [vmem:[%s380 + $0x338] sm:$0xff]
    %v485 = vld [vmem:[%s380 + $0x340] sm:$0xff]
    %v486 = vld [vmem:[%s380 + $0x348] sm:$0xff]
    %v487 = vld [vmem:[%s380 + $0x350] sm:$0xff]
    %v488 = vld [vmem:[%s380 + $0x358] sm:$0xff]
    %v489 = vld [vmem:[%s380 + $0x360] sm:$0xff]
    %v490 = vld [vmem:[%s380 + $0x368] sm:$0xff]
    %v491 = vld [vmem:[%s380 + $0x370] sm:$0xff]
    %v492 = vld [vmem:[%s380 + $0x378] sm:$0xff]
    %v493 = vld [vmem:[%s380 + $0x380] sm:$0xff]
    %v494 = vld [vmem:[%s380 + $0x388] sm:$0xff]
    %v495 = vld [vmem:[%s380 + $0x390] sm:$0xff]
    %v496 = vld [vmem:[%s380 + $0x398] sm:$0xff]
    %v497 = vld [vmem:[%s380 + $0x3a0] sm:$0xff]
    %v498 = vld [vmem:[%s380 + $0x3a8] sm:$0xff]
    %v499 = vld [vmem:[%s380 + $0x3b0] sm:$0xff]
    %v500 = vld [vmem:[%s380 + $0x3b8] sm:$0xff]
    %v501 = vld [vmem:[%s380 + $0x3c0] sm:$0xff]
    %v502 = vld [vmem:[%s380 + $0x3c8] sm:$0xff]
    %v503 = vld [vmem:[%s380 + $0x3d0] sm:$0xff]
    %v504 = vld [vmem:[%s380 + $0x3d8] sm:$0xff]
    %v505 = vld [vmem:[%s380 + $0x3e0] sm:$0xff]
    %v506 = vld [vmem:[%s380 + $0x3e8] sm:$0xff]
    %v507 = vld [vmem:[%s380 + $0x3f0] sm:$0xff]
    %v508 = vld [vmem:[%s380 + $0x3f8] sm:$0xff]
    %s509 = scalar_lea.vmem [#allocation7], 32
    %v510 = vld [vmem:[%s509] sm:$0xff]
    %v511 = vld [vmem:[%s509 + $0x8] sm:$0xff]
    %v512 = vld [vmem:[%s509 + $0x10] sm:$0xff]
    %v513 = vld [vmem:[%s509 + $0x18] sm:$0xff]
    %514 = vmatprep.subr.mxu0 %v382
    %515 = vmatpush1.msra.mxu0 %v381
    %516 = vmatprep.subr.mxu0 %v386
    %517 = vmatpush1.msra.mxu0 %v385
    %518 = vmatprep.subr.mxu0 %v390
    %519 = vmatpush1.msra.mxu0 %v389
    %520 = vmatprep.subr.mxu0 %v394
    %521 = vmatpush1.msra.mxu0 %v393
    %522 = vmatprep.subr.mxu0 %v398
    %523 = vmatpush1.msra.mxu0 %v397
    %524 = vmatprep.subr.mxu0 %v402
    %525 = vmatpush1.msra.mxu0 %v401
    %526 = vmatprep.subr.mxu0 %v406
    %527 = vmatpush1.msra.mxu0 %v405
    %528 = vmatprep.subr.mxu0 %v410
    %529 = vmatpush1.msra.mxu0 %v409
    %530 = vmatprep.subr.mxu0 %v414
    %531 = vmatpush1.msra.mxu0 %v413
    %532 = vmatprep.subr.mxu0 %v418
    %533 = vmatpush1.msra.mxu0 %v417
    %534 = vmatprep.subr.mxu0 %v422
    %535 = vmatpush1.msra.mxu0 %v421
    %536 = vmatprep.subr.mxu0 %v426
    %537 = vmatpush1.msra.mxu0 %v425
    %538 = vmatprep.subr.mxu0 %v430
    %539 = vmatpush1.msra.mxu0 %v429
    %540 = vmatprep.subr.mxu0 %v434
    %541 = vmatpush1.msra.mxu0 %v433
    %542 = vmatprep.subr.mxu0 %v438
    %543 = vmatpush1.msra.mxu0 %v437
    %544 = vmatprep.subr.mxu0 %v442
    %545 = vmatpush1.msra.mxu0 %v441
    %546 = vmatprep.subr.mxu0 %v446
    %547 = vmatpush1.msra.mxu0 %v445
    %548 = vmatprep.subr.mxu0 %v450
    %549 = vmatpush1.msra.mxu0 %v449
    %550 = vmatprep.subr.mxu0 %v454
    %551 = vmatpush1.msra.mxu0 %v453
    %552 = vmatprep.subr.mxu0 %v458
    %553 = vmatpush1.msra.mxu0 %v457
    %554 = vmatprep.subr.mxu0 %v462
    %555 = vmatpush1.msra.mxu0 %v461
    %556 = vmatprep.subr.mxu0 %v466
    %557 = vmatpush1.msra.mxu0 %v465
    %558 = vmatprep.subr.mxu0 %v470
    %559 = vmatpush1.msra.mxu0 %v469
    %560 = vmatprep.subr.mxu0 %v474
    %561 = vmatpush1.msra.mxu0 %v473
    %562 = vmatprep.subr.mxu0 %v478
    %563 = vmatpush1.msra.mxu0 %v477
    %564 = vmatprep.subr.mxu0 %v482
    %565 = vmatpush1.msra.mxu0 %v481
    %566 = vmatprep.subr.mxu0 %v486
    %567 = vmatpush1.msra.mxu0 %v485
    %568 = vmatprep.subr.mxu0 %v490
    %569 = vmatpush1.msra.mxu0 %v489
    %570 = vmatprep.subr.mxu0 %v494
    %571 = vmatpush1.msra.mxu0 %v493
    %572 = vmatprep.subr.mxu0 %v498
    %573 = vmatpush1.msra.mxu0 %v497
    %574 = vmatprep.subr.mxu0 %v502
    %575 = vmatpush1.msra.mxu0 %v501
    %576 = vmatprep.subr.mxu0 %v506
    %577 = vmatpush1.msra.mxu0 %v505
    %578 = vmatprep.mubr.f32.mxu0 0.0
    %579 = vmatmul.mubr.f32.gmra.mrb[0].mxu0 %v379
    %v580 = vpop.f32.mrb[0].mxu0
    %v581 = vadd.f32 %v510, %v580
    %v582 = vpop.f32.mrb[0].mxu0
    %v583 = vadd.f32 %v511, %v582
    %584 = vdwg.mxu0
    %585 = vmatprep.subr.mxu0 %v384
    %586 = vmatpush1.msra.mxu0 %v383
    %587 = vmatprep.subr.mxu0 %v388
    %588 = vmatpush1.msra.mxu0 %v387
    %589 = vmatprep.subr.mxu0 %v392
    %590 = vmatpush1.msra.mxu0 %v391
    %591 = vmatprep.subr.mxu0 %v396
    %592 = vmatpush1.msra.mxu0 %v395
    %593 = vmatprep.subr.mxu0 %v400
    %594 = vmatpush1.msra.mxu0 %v399
    %595 = vmatprep.subr.mxu0 %v404
    %596 = vmatpush1.msra.mxu0 %v403
    %597 = vmatprep.subr.mxu0 %v408
    %598 = vmatpush1.msra.mxu0 %v407
    %599 = vmatprep.subr.mxu0 %v412
    %600 = vmatpush1.msra.mxu0 %v411
    %601 = vmatprep.subr.mxu0 %v416
    %602 = vmatpush1.msra.mxu0 %v415
    %603 = vmatprep.subr.mxu0 %v420
    %604 = vmatpush1.msra.mxu0 %v419
    %605 = vmatprep.subr.mxu0 %v424
    %606 = vmatpush1.msra.mxu0 %v423
    %607 = vmatprep.subr.mxu0 %v428
    %608 = vmatpush1.msra.mxu0 %v427
    %609 = vmatprep.subr.mxu0 %v432
    %610 = vmatpush1.msra.mxu0 %v431
    %611 = vmatprep.subr.mxu0 %v436
    %612 = vmatpush1.msra.mxu0 %v435
    %613 = vmatprep.subr.mxu0 %v440
    %614 = vmatpush1.msra.mxu0 %v439
    %615 = vmatprep.subr.mxu0 %v444
    %616 = vmatpush1.msra.mxu0 %v443
    %617 = vmatprep.subr.mxu0 %v448
    %618 = vmatpush1.msra.mxu0 %v447
    %619 = vmatprep.subr.mxu0 %v452
    %620 = vmatpush1.msra.mxu0 %v451
    %621 = vmatprep.subr.mxu0 %v456
    %622 = vmatpush1.msra.mxu0 %v455
    %623 = vmatprep.subr.mxu0 %v460
    %624 = vmatpush1.msra.mxu0 %v459
    %625 = vmatprep.subr.mxu0 %v464
    %626 = vmatpush1.msra.mxu0 %v463
    %627 = vmatprep.subr.mxu0 %v468
    %628 = vmatpush1.msra.mxu0 %v467
    %629 = vmatprep.subr.mxu0 %v472
    %630 = vmatpush1.msra.mxu0 %v471
    %631 = vmatprep.subr.mxu0 %v476
    %632 = vmatpush1.msra.mxu0 %v475
    %633 = vmatprep.subr.mxu0 %v480
    %634 = vmatpush1.msra.mxu0 %v479
    %635 = vmatprep.subr.mxu0 %v484
    %636 = vmatpush1.msra.mxu0 %v483
    %637 = vmatprep.subr.mxu0 %v488
    %638 = vmatpush1.msra.mxu0 %v487
    %639 = vmatprep.subr.mxu0 %v492
    %640 = vmatpush1.msra.mxu0 %v491
    %641 = vmatprep.subr.mxu0 %v496
    %642 = vmatpush1.msra.mxu0 %v495
    %643 = vmatprep.subr.mxu0 %v500
    %644 = vmatpush1.msra.mxu0 %v499
    %645 = vmatprep.subr.mxu0 %v504
    %646 = vmatpush1.msra.mxu0 %v503
    %647 = vmatprep.subr.mxu0 %v508
    %648 = vmatpush1.msra.mxu0 %v507
    %649 = vmatprep.mubr.f32.mxu0 0.0
    %650 = vmatmul.mubr.f32.gmra.mrb[0].mxu0 %v379
    %v651 = vpop.f32.mrb[0].mxu0
    %v652 = vadd.f32 %v512, %v651
    %v653 = vpop.f32.mrb[0].mxu0
    %v654 = vadd.f32 %v513, %v653
    %655 = vdwg.mxu0
    %v656 = vmul.f32 %v581, 0.5
    %v657 = vtanh.pop %v656
    %v658 = vadd.f32 %v657, 1.0
    %v659 = vmul.f32 %v658, 0.5
    %v660 = vmul.f32 %v583, 0.5
    %v661 = vtanh.pop %v660
    %v662 = vadd.f32 %v661, 1.0
    %v663 = vmul.f32 %v662, 0.5
    %v664 = vtanh.pop %v652
    %v665 = vmul.f32 %v654, 0.5
    %v666 = vtanh.pop %v665
    %v667 = vadd.f32 %v666, 1.0
    %v668 = vmul.f32 %v667, 0.5
    %v669 = vmul.f32 %v663, 0.0
    %v670 = vmul.f32 %v659, %v664
    %v671 = vadd.f32 %v669, %v670
    %v672 = vtanh.pop %v671
    %v673 = vmul.f32 %v668, %v672
    %s674 = scalar_lea.vmem [#allocation5], 2048
    %v675 = vld [vmem:[%s674] sm:$0xff]
    %v676 = vld [vmem:[%s674 + $0x8] sm:$0xff]
    %v677 = vld [vmem:[%s674 + $0x10] sm:$0xff]
    %v678 = vld [vmem:[%s674 + $0x18] sm:$0xff]
    %v679 = vld [vmem:[%s674 + $0x20] sm:$0xff]
    %v680 = vld [vmem:[%s674 + $0x28] sm:$0xff]
    %v681 = vld [vmem:[%s674 + $0x30] sm:$0xff]
    %v682 = vld [vmem:[%s674 + $0x38] sm:$0xff]
    %v683 = vld [vmem:[%s674 + $0x40] sm:$0xff]
    %v684 = vld [vmem:[%s674 + $0x48] sm:$0xff]
    %v685 = vld [vmem:[%s674 + $0x50] sm:$0xff]
    %v686 = vld [vmem:[%s674 + $0x58] sm:$0xff]
    %v687 = vld [vmem:[%s674 + $0x60] sm:$0xff]
    %v688 = vld [vmem:[%s674 + $0x68] sm:$0xff]
    %v689 = vld [vmem:[%s674 + $0x70] sm:$0xff]
    %v690 = vld [vmem:[%s674 + $0x78] sm:$0xff]
    %v691 = vld [vmem:[%s674 + $0x80] sm:$0xff]
    %v692 = vld [vmem:[%s674 + $0x88] sm:$0xff]
    %v693 = vld [vmem:[%s674 + $0x90] sm:$0xff]
    %v694 = vld [vmem:[%s674 + $0x98] sm:$0xff]
    %v695 = vld [vmem:[%s674 + $0xa0] sm:$0xff]
    %v696 = vld [vmem:[%s674 + $0xa8] sm:$0xff]
    %v697 = vld [vmem:[%s674 + $0xb0] sm:$0xff]
    %v698 = vld [vmem:[%s674 + $0xb8] sm:$0xff]
    %v699 = vld [vmem:[%s674 + $0xc0] sm:$0xff]
    %v700 = vld [vmem:[%s674 + $0xc8] sm:$0xff]
    %v701 = vld [vmem:[%s674 + $0xd0] sm:$0xff]
    %v702 = vld [vmem:[%s674 + $0xd8] sm:$0xff]
    %v703 = vld [vmem:[%s674 + $0xe0] sm:$0xff]
    %v704 = vld [vmem:[%s674 + $0xe8] sm:$0xff]
    %v705 = vld [vmem:[%s674 + $0xf0] sm:$0xff]
    %v706 = vld [vmem:[%s674 + $0xf8] sm:$0xff]
    %v707 = vld [vmem:[%s674 + $0x100] sm:$0xff]
    %v708 = vld [vmem:[%s674 + $0x108] sm:$0xff]
    %v709 = vld [vmem:[%s674 + $0x110] sm:$0xff]
    %v710 = vld [vmem:[%s674 + $0x118] sm:$0xff]
    %v711 = vld [vmem:[%s674 + $0x120] sm:$0xff]
    %v712 = vld [vmem:[%s674 + $0x128] sm:$0xff]
    %v713 = vld [vmem:[%s674 + $0x130] sm:$0xff]
    %v714 = vld [vmem:[%s674 + $0x138] sm:$0xff]
    %v715 = vld [vmem:[%s674 + $0x140] sm:$0xff]
    %v716 = vld [vmem:[%s674 + $0x148] sm:$0xff]
    %v717 = vld [vmem:[%s674 + $0x150] sm:$0xff]
    %v718 = vld [vmem:[%s674 + $0x158] sm:$0xff]
    %v719 = vld [vmem:[%s674 + $0x160] sm:$0xff]
    %v720 = vld [vmem:[%s674 + $0x168] sm:$0xff]
    %v721 = vld [vmem:[%s674 + $0x170] sm:$0xff]
    %v722 = vld [vmem:[%s674 + $0x178] sm:$0xff]
    %v723 = vld [vmem:[%s674 + $0x180] sm:$0xff]
    %v724 = vld [vmem:[%s674 + $0x188] sm:$0xff]
    %v725 = vld [vmem:[%s674 + $0x190] sm:$0xff]
    %v726 = vld [vmem:[%s674 + $0x198] sm:$0xff]
    %v727 = vld [vmem:[%s674 + $0x1a0] sm:$0xff]
    %v728 = vld [vmem:[%s674 + $0x1a8] sm:$0xff]
    %v729 = vld [vmem:[%s674 + $0x1b0] sm:$0xff]
    %v730 = vld [vmem:[%s674 + $0x1b8] sm:$0xff]
    %v731 = vld [vmem:[%s674 + $0x1c0] sm:$0xff]
    %v732 = vld [vmem:[%s674 + $0x1c8] sm:$0xff]
    %v733 = vld [vmem:[%s674 + $0x1d0] sm:$0xff]
    %v734 = vld [vmem:[%s674 + $0x1d8] sm:$0xff]
    %v735 = vld [vmem:[%s674 + $0x1e0] sm:$0xff]
    %v736 = vld [vmem:[%s674 + $0x1e8] sm:$0xff]
    %v737 = vld [vmem:[%s674 + $0x1f0] sm:$0xff]
    %v738 = vld [vmem:[%s674 + $0x1f8] sm:$0xff]
    %v739 = vld [vmem:[%s674 + $0x200] sm:$0xff]
    %v740 = vld [vmem:[%s674 + $0x208] sm:$0xff]
    %v741 = vld [vmem:[%s674 + $0x210] sm:$0xff]
    %v742 = vld [vmem:[%s674 + $0x218] sm:$0xff]
    %v743 = vld [vmem:[%s674 + $0x220] sm:$0xff]
    %v744 = vld [vmem:[%s674 + $0x228] sm:$0xff]
    %v745 = vld [vmem:[%s674 + $0x230] sm:$0xff]
    %v746 = vld [vmem:[%s674 + $0x238] sm:$0xff]
    %v747 = vld [vmem:[%s674 + $0x240] sm:$0xff]
    %v748 = vld [vmem:[%s674 + $0x248] sm:$0xff]
    %v749 = vld [vmem:[%s674 + $0x250] sm:$0xff]
    %v750 = vld [vmem:[%s674 + $0x258] sm:$0xff]
    %v751 = vld [vmem:[%s674 + $0x260] sm:$0xff]
    %v752 = vld [vmem:[%s674 + $0x268] sm:$0xff]
    %v753 = vld [vmem:[%s674 + $0x270] sm:$0xff]
    %v754 = vld [vmem:[%s674 + $0x278] sm:$0xff]
    %v755 = vld [vmem:[%s674 + $0x280] sm:$0xff]
    %v756 = vld [vmem:[%s674 + $0x288] sm:$0xff]
    %v757 = vld [vmem:[%s674 + $0x290] sm:$0xff]
    %v758 = vld [vmem:[%s674 + $0x298] sm:$0xff]
    %v759 = vld [vmem:[%s674 + $0x2a0] sm:$0xff]
    %v760 = vld [vmem:[%s674 + $0x2a8] sm:$0xff]
    %v761 = vld [vmem:[%s674 + $0x2b0] sm:$0xff]
    %v762 = vld [vmem:[%s674 + $0x2b8] sm:$0xff]
    %v763 = vld [vmem:[%s674 + $0x2c0] sm:$0xff]
    %v764 = vld [vmem:[%s674 + $0x2c8] sm:$0xff]
    %v765 = vld [vmem:[%s674 + $0x2d0] sm:$0xff]
    %v766 = vld [vmem:[%s674 + $0x2d8] sm:$0xff]
    %v767 = vld [vmem:[%s674 + $0x2e0] sm:$0xff]
    %v768 = vld [vmem:[%s674 + $0x2e8] sm:$0xff]
    %v769 = vld [vmem:[%s674 + $0x2f0] sm:$0xff]
    %v770 = vld [vmem:[%s674 + $0x2f8] sm:$0xff]
    %v771 = vld [vmem:[%s674 + $0x300] sm:$0xff]
    %v772 = vld [vmem:[%s674 + $0x308] sm:$0xff]
    %v773 = vld [vmem:[%s674 + $0x310] sm:$0xff]
    %v774 = vld [vmem:[%s674 + $0x318] sm:$0xff]
    %v775 = vld [vmem:[%s674 + $0x320] sm:$0xff]
    %v776 = vld [vmem:[%s674 + $0x328] sm:$0xff]
    %v777 = vld [vmem:[%s674 + $0x330] sm:$0xff]
    %v778 = vld [vmem:[%s674 + $0x338] sm:$0xff]
    %v779 = vld [vmem:[%s674 + $0x340] sm:$0xff]
    %v780 = vld [vmem:[%s674 + $0x348] sm:$0xff]
    %v781 = vld [vmem:[%s674 + $0x350] sm:$0xff]
    %v782 = vld [vmem:[%s674 + $0x358] sm:$0xff]
    %v783 = vld [vmem:[%s674 + $0x360] sm:$0xff]
    %v784 = vld [vmem:[%s674 + $0x368] sm:$0xff]
    %v785 = vld [vmem:[%s674 + $0x370] sm:$0xff]
    %v786 = vld [vmem:[%s674 + $0x378] sm:$0xff]
    %v787 = vld [vmem:[%s674 + $0x380] sm:$0xff]
    %v788 = vld [vmem:[%s674 + $0x388] sm:$0xff]
    %v789 = vld [vmem:[%s674 + $0x390] sm:$0xff]
    %v790 = vld [vmem:[%s674 + $0x398] sm:$0xff]
    %v791 = vld [vmem:[%s674 + $0x3a0] sm:$0xff]
    %v792 = vld [vmem:[%s674 + $0x3a8] sm:$0xff]
    %v793 = vld [vmem:[%s674 + $0x3b0] sm:$0xff]
    %v794 = vld [vmem:[%s674 + $0x3b8] sm:$0xff]
    %v795 = vld [vmem:[%s674 + $0x3c0] sm:$0xff]
    %v796 = vld [vmem:[%s674 + $0x3c8] sm:$0xff]
    %v797 = vld [vmem:[%s674 + $0x3d0] sm:$0xff]
    %v798 = vld [vmem:[%s674 + $0x3d8] sm:$0xff]
    %v799 = vld [vmem:[%s674 + $0x3e0] sm:$0xff]
    %v800 = vld [vmem:[%s674 + $0x3e8] sm:$0xff]
    %v801 = vld [vmem:[%s674 + $0x3f0] sm:$0xff]
    %v802 = vld [vmem:[%s674 + $0x3f8] sm:$0xff]
    %s803 = scalar_lea.vmem [#allocation7], 64
    %v804 = vld [vmem:[%s803] sm:$0xff]
    %v805 = vld [vmem:[%s803 + $0x8] sm:$0xff]
    %v806 = vld [vmem:[%s803 + $0x10] sm:$0xff]
    %v807 = vld [vmem:[%s803 + $0x18] sm:$0xff]
    %808 = vmatprep.subr.mxu0 %v676
    %809 = vmatpush1.msra.mxu0 %v675
    %810 = vmatprep.subr.mxu0 %v680
    %811 = vmatpush1.msra.mxu0 %v679
    %812 = vmatprep.subr.mxu0 %v684
    %813 = vmatpush1.msra.mxu0 %v683
    %814 = vmatprep.subr.mxu0 %v688
    %815 = vmatpush1.msra.mxu0 %v687
    %816 = vmatprep.subr.mxu0 %v692
    %817 = vmatpush1.msra.mxu0 %v691
    %818 = vmatprep.subr.mxu0 %v696
    %819 = vmatpush1.msra.mxu0 %v695
    %820 = vmatprep.subr.mxu0 %v700
    %821 = vmatpush1.msra.mxu0 %v699
    %822 = vmatprep.subr.mxu0 %v704
    %823 = vmatpush1.msra.mxu0 %v703
    %824 = vmatprep.subr.mxu0 %v708
    %825 = vmatpush1.msra.mxu0 %v707
    %826 = vmatprep.subr.mxu0 %v712
    %827 = vmatpush1.msra.mxu0 %v711
    %828 = vmatprep.subr.mxu0 %v716
    %829 = vmatpush1.msra.mxu0 %v715
    %830 = vmatprep.subr.mxu0 %v720
    %831 = vmatpush1.msra.mxu0 %v719
    %832 = vmatprep.subr.mxu0 %v724
    %833 = vmatpush1.msra.mxu0 %v723
    %834 = vmatprep.subr.mxu0 %v728
    %835 = vmatpush1.msra.mxu0 %v727
    %836 = vmatprep.subr.mxu0 %v732
    %837 = vmatpush1.msra.mxu0 %v731
    %838 = vmatprep.subr.mxu0 %v736
    %839 = vmatpush1.msra.mxu0 %v735
    %840 = vmatprep.subr.mxu0 %v740
    %841 = vmatpush1.msra.mxu0 %v739
    %842 = vmatprep.subr.mxu0 %v744
    %843 = vmatpush1.msra.mxu0 %v743
    %844 = vmatprep.subr.mxu0 %v748
    %845 = vmatpush1.msra.mxu0 %v747
    %846 = vmatprep.subr.mxu0 %v752
    %847 = vmatpush1.msra.mxu0 %v751
    %848 = vmatprep.subr.mxu0 %v756
    %849 = vmatpush1.msra.mxu0 %v755
    %850 = vmatprep.subr.mxu0 %v760
    %851 = vmatpush1.msra.mxu0 %v759
    %852 = vmatprep.subr.mxu0 %v764
    %853 = vmatpush1.msra.mxu0 %v763
    %854 = vmatprep.subr.mxu0 %v768
    %855 = vmatpush1.msra.mxu0 %v767
    %856 = vmatprep.subr.mxu0 %v772
    %857 = vmatpush1.msra.mxu0 %v771
    %858 = vmatprep.subr.mxu0 %v776
    %859 = vmatpush1.msra.mxu0 %v775
    %860 = vmatprep.subr.mxu0 %v780
    %861 = vmatpush1.msra.mxu0 %v779
    %862 = vmatprep.subr.mxu0 %v784
    %863 = vmatpush1.msra.mxu0 %v783
    %864 = vmatprep.subr.mxu0 %v788
    %865 = vmatpush1.msra.mxu0 %v787
    %866 = vmatprep.subr.mxu0 %v792
    %867 = vmatpush1.msra.mxu0 %v791
    %868 = vmatprep.subr.mxu0 %v796
    %869 = vmatpush1.msra.mxu0 %v795
    %870 = vmatprep.subr.mxu0 %v800
    %871 = vmatpush1.msra.mxu0 %v799
    %872 = vmatprep.mubr.f32.mxu0 0.0
    %873 = vmatmul.mubr.f32.gmra.mrb[0].mxu0 %v673
    %v874 = vpop.f32.mrb[0].mxu0
    %v875 = vadd.f32 %v804, %v874
    %v876 = vpop.f32.mrb[0].mxu0
    %v877 = vadd.f32 %v805, %v876
    %878 = vdwg.mxu0
    %879 = vmatprep.subr.mxu0 %v678
    %880 = vmatpush1.msra.mxu0 %v677
    %881 = vmatprep.subr.mxu0 %v682
    %882 = vmatpush1.msra.mxu0 %v681
    %883 = vmatprep.subr.mxu0 %v686
    %884 = vmatpush1.msra.mxu0 %v685
    %885 = vmatprep.subr.mxu0 %v690
    %886 = vmatpush1.msra.mxu0 %v689
    %887 = vmatprep.subr.mxu0 %v694
    %888 = vmatpush1.msra.mxu0 %v693
    %889 = vmatprep.subr.mxu0 %v698
    %890 = vmatpush1.msra.mxu0 %v697
    %891 = vmatprep.subr.mxu0 %v702
    %892 = vmatpush1.msra.mxu0 %v701
    %893 = vmatprep.subr.mxu0 %v706
    %894 = vmatpush1.msra.mxu0 %v705
    %895 = vmatprep.subr.mxu0 %v710
    %896 = vmatpush1.msra.mxu0 %v709
    %897 = vmatprep.subr.mxu0 %v714
    %898 = vmatpush1.msra.mxu0 %v713
    %899 = vmatprep.subr.mxu0 %v718
    %900 = vmatpush1.msra.mxu0 %v717
    %901 = vmatprep.subr.mxu0 %v722
    %902 = vmatpush1.msra.mxu0 %v721
    %903 = vmatprep.subr.mxu0 %v726
    %904 = vmatpush1.msra.mxu0 %v725
    %905 = vmatprep.subr.mxu0 %v730
    %906 = vmatpush1.msra.mxu0 %v729
    %907 = vmatprep.subr.mxu0 %v734
    %908 = vmatpush1.msra.mxu0 %v733
    %909 = vmatprep.subr.mxu0 %v738
    %910 = vmatpush1.msra.mxu0 %v737
    %911 = vmatprep.subr.mxu0 %v742
    %912 = vmatpush1.msra.mxu0 %v741
    %913 = vmatprep.subr.mxu0 %v746
    %914 = vmatpush1.msra.mxu0 %v745
    %915 = vmatprep.subr.mxu0 %v750
    %916 = vmatpush1.msra.mxu0 %v749
    %917 = vmatprep.subr.mxu0 %v754
    %918 = vmatpush1.msra.mxu0 %v753
    %919 = vmatprep.subr.mxu0 %v758
    %920 = vmatpush1.msra.mxu0 %v757
    %921 = vmatprep.subr.mxu0 %v762
    %922 = vmatpush1.msra.mxu0 %v761
    %923 = vmatprep.subr.mxu0 %v766
    %924 = vmatpush1.msra.mxu0 %v765
    %925 = vmatprep.subr.mxu0 %v770
    %926 = vmatpush1.msra.mxu0 %v769
    %927 = vmatprep.subr.mxu0 %v774
    %928 = vmatpush1.msra.mxu0 %v773
    %929 = vmatprep.subr.mxu0 %v778
    %930 = vmatpush1.msra.mxu0 %v777
    %931 = vmatprep.subr.mxu0 %v782
    %932 = vmatpush1.msra.mxu0 %v781
    %933 = vmatprep.subr.mxu0 %v786
    %934 = vmatpush1.msra.mxu0 %v785
    %935 = vmatprep.subr.mxu0 %v790
    %936 = vmatpush1.msra.mxu0 %v789
    %937 = vmatprep.subr.mxu0 %v794
    %938 = vmatpush1.msra.mxu0 %v793
    %939 = vmatprep.subr.mxu0 %v798
    %940 = vmatpush1.msra.mxu0 %v797
    %941 = vmatprep.subr.mxu0 %v802
    %942 = vmatpush1.msra.mxu0 %v801
    %943 = vmatprep.mubr.f32.mxu0 0.0
    %944 = vmatmul.mubr.f32.gmra.mrb[0].mxu0 %v673
    %v945 = vpop.f32.mrb[0].mxu0
    %v946 = vadd.f32 %v806, %v945
    %v947 = vpop.f32.mrb[0].mxu0
    %v948 = vadd.f32 %v807, %v947
    %949 = vdwg.mxu0
    %v950 = vmul.f32 %v875, 0.5
    %v951 = vtanh.pop %v950
    %v952 = vadd.f32 %v951, 1.0
    %v953 = vmul.f32 %v952, 0.5
    %v954 = vmul.f32 %v877, 0.5
    %v955 = vtanh.pop %v954
    %v956 = vadd.f32 %v955, 1.0
    %v957 = vmul.f32 %v956, 0.5
    %v958 = vtanh.pop %v946
    %v959 = vmul.f32 %v948, 0.5
    %v960 = vtanh.pop %v959
    %v961 = vadd.f32 %v960, 1.0
    %v962 = vmul.f32 %v961, 0.5
    %v963 = vmul.f32 %v957, 0.0
    %v964 = vmul.f32 %v953, %v958
    %v965 = vadd.f32 %v963, %v964
    %v966 = vtanh.pop %v965
    %v967 = vmul.f32 %v962, %v966
    %s968 = scalar_lea.vmem [#allocation2], 8
    %v969 = vld [vmem:[%s968] sm:$0xff]
    %970 = vmatprep.subr.mxu0 %v89
    %971 = vmatpush1.msra.mxu0 %v88
    %972 = vmatprep.subr.mxu0 %v93
    %973 = vmatpush1.msra.mxu0 %v92
    %974 = vmatprep.subr.mxu0 %v97
    %975 = vmatpush1.msra.mxu0 %v96
    %976 = vmatprep.subr.mxu0 %v101
    %977 = vmatpush1.msra.mxu0 %v100
    %978 = vmatprep.subr.mxu0 %v105
    %979 = vmatpush1.msra.mxu0 %v104
    %980 = vmatprep.subr.mxu0 %v109
    %981 = vmatpush1.msra.mxu0 %v108
    %982 = vmatprep.subr.mxu0 %v113
    %983 = vmatpush1.msra.mxu0 %v112
    %984 = vmatprep.subr.mxu0 %v117
    %985 = vmatpush1.msra.mxu0 %v116
    %986 = vmatprep.subr.mxu0 %v121
    %987 = vmatpush1.msra.mxu0 %v120
    %988 = vmatprep.subr.mxu0 %v125
    %989 = vmatpush1.msra.mxu0 %v124
    %990 = vmatprep.subr.mxu0 %v129
    %991 = vmatpush1.msra.mxu0 %v128
    %992 = vmatprep.subr.mxu0 %v133
    %993 = vmatpush1.msra.mxu0 %v132
    %994 = vmatprep.subr.mxu0 %v137
    %995 = vmatpush1.msra.mxu0 %v136
    %996 = vmatprep.subr.mxu0 %v141
    %997 = vmatpush1.msra.mxu0 %v140
    %998 = vmatprep.subr.mxu0 %v145
    %999 = vmatpush1.msra.mxu0 %v144
    %1000 = vmatprep.subr.mxu0 %v149
    %1001 = vmatpush1.msra.mxu0 %v148
    %1002 = vmatprep.subr.mxu0 %v153
    %1003 = vmatpush1.msra.mxu0 %v152
    %1004 = vmatprep.subr.mxu0 %v157
    %1005 = vmatpush1.msra.mxu0 %v156
    %1006 = vmatprep.subr.mxu0 %v161
    %1007 = vmatpush1.msra.mxu0 %v160
    %1008 = vmatprep.subr.mxu0 %v165
    %1009 = vmatpush1.msra.mxu0 %v164
    %1010 = vmatprep.subr.mxu0 %v169
    %1011 = vmatpush1.msra.mxu0 %v168
    %1012 = vmatprep.subr.mxu0 %v173
    %1013 = vmatpush1.msra.mxu0 %v172
    %1014 = vmatprep.subr.mxu0 %v177
    %1015 = vmatpush1.msra.mxu0 %v176
    %1016 = vmatprep.subr.mxu0 %v181
    %1017 = vmatpush1.msra.mxu0 %v180
    %1018 = vmatprep.subr.mxu0 %v185
    %1019 = vmatpush1.msra.mxu0 %v184
    %1020 = vmatprep.subr.mxu0 %v189
    %1021 = vmatpush1.msra.mxu0 %v188
    %1022 = vmatprep.subr.mxu0 %v193
    %1023 = vmatpush1.msra.mxu0 %v192
    %1024 = vmatprep.subr.mxu0 %v197
    %1025 = vmatpush1.msra.mxu0 %v196
    %1026 = vmatprep.subr.mxu0 %v201
    %1027 = vmatpush1.msra.mxu0 %v200
    %1028 = vmatprep.subr.mxu0 %v205
    %1029 = vmatpush1.msra.mxu0 %v204
    %1030 = vmatprep.subr.mxu0 %v209
    %1031 = vmatpush1.msra.mxu0 %v208
    %1032 = vmatprep.subr.mxu0 %v213
    %1033 = vmatpush1.msra.mxu0 %v212
    %1034 = vmatprep.mubr.f32.mxu0 %v379
    %1035 = vmatmul.mubr.f32.gmra.mrb[0].mxu0 %v969
    %v1036 = vpop.f32.mrb[0].mxu0
    %v1037 = vadd.f32 %v216, %v1036
    %v1038 = vpop.f32.mrb[0].mxu0
    %v1039 = vadd.f32 %v217, %v1038
    %1040 = vdwg.mxu0
    %1041 = vmatprep.subr.mxu0 %v91
    %1042 = vmatpush1.msra.mxu0 %v90
    %1043 = vmatprep.subr.mxu0 %v95
    %1044 = vmatpush1.msra.mxu0 %v94
    %1045 = vmatprep.subr.mxu0 %v99
    %1046 = vmatpush1.msra.mxu0 %v98
    %1047 = vmatprep.subr.mxu0 %v103
    %1048 = vmatpush1.msra.mxu0 %v102
    %1049 = vmatprep.subr.mxu0 %v107
    %1050 = vmatpush1.msra.mxu0 %v106
    %1051 = vmatprep.subr.mxu0 %v111
    %1052 = vmatpush1.msra.mxu0 %v110
    %1053 = vmatprep.subr.mxu0 %v115
    %1054 = vmatpush1.msra.mxu0 %v114
    %1055 = vmatprep.subr.mxu0 %v119
    %1056 = vmatpush1.msra.mxu0 %v118
    %1057 = vmatprep.subr.mxu0 %v123
    %1058 = vmatpush1.msra.mxu0 %v122
    %1059 = vmatprep.subr.mxu0 %v127
    %1060 = vmatpush1.msra.mxu0 %v126
    %1061 = vmatprep.subr.mxu0 %v131
    %1062 = vmatpush1.msra.mxu0 %v130
    %1063 = vmatprep.subr.mxu0 %v135
    %1064 = vmatpush1.msra.mxu0 %v134
    %1065 = vmatprep.subr.mxu0 %v139
    %1066 = vmatpush1.msra.mxu0 %v138
    %1067 = vmatprep.subr.mxu0 %v143
    %1068 = vmatpush1.msra.mxu0 %v142
    %1069 = vmatprep.subr.mxu0 %v147
    %1070 = vmatpush1.msra.mxu0 %v146
    %1071 = vmatprep.subr.mxu0 %v151
    %1072 = vmatpush1.msra.mxu0 %v150
    %1073 = vmatprep.subr.mxu0 %v155
    %1074 = vmatpush1.msra.mxu0 %v154
    %1075 = vmatprep.subr.mxu0 %v159
    %1076 = vmatpush1.msra.mxu0 %v158
    %1077 = vmatprep.subr.mxu0 %v163
    %1078 = vmatpush1.msra.mxu0 %v162
    %1079 = vmatprep.subr.mxu0 %v167
    %1080 = vmatpush1.msra.mxu0 %v166
    %1081 = vmatprep.subr.mxu0 %v171
    %1082 = vmatpush1.msra.mxu0 %v170
    %1083 = vmatprep.subr.mxu0 %v175
    %1084 = vmatpush1.msra.mxu0 %v174
    %1085 = vmatprep.subr.mxu0 %v179
    %1086 = vmatpush1.msra.mxu0 %v178
    %1087 = vmatprep.subr.mxu0 %v183
    %1088 = vmatpush1.msra.mxu0 %v182
    %1089 = vmatprep.subr.mxu0 %v187
    %1090 = vmatpush1.msra.mxu0 %v186
    %1091 = vmatprep.subr.mxu0 %v191
    %1092 = vmatpush1.msra.mxu0 %v190
    %1093 = vmatprep.subr.mxu0 %v195
    %1094 = vmatpush1.msra.mxu0 %v194
    %1095 = vmatprep.subr.mxu0 %v199
    %1096 = vmatpush1.msra.mxu0 %v198
    %1097 = vmatprep.subr.mxu0 %v203
    %1098 = vmatpush1.msra.mxu0 %v202
    %1099 = vmatprep.subr.mxu0 %v207
    %1100 = vmatpush1.msra.mxu0 %v206
    %1101 = vmatprep.subr.mxu0 %v211
    %1102 = vmatpush1.msra.mxu0 %v210
    %1103 = vmatprep.subr.mxu0 %v215
    %1104 = vmatpush1.msra.mxu0 %v214
    %1105 = vmatprep.mubr.f32.mxu0 %v379
    %1106 = vmatmul.mubr.f32.gmra.mrb[0].mxu0 %v969
    %v1107 = vpop.f32.mrb[0].mxu0
    %v1108 = vadd.f32 %v218, %v1107
    %v1109 = vpop.f32.mrb[0].mxu0
    %v1110 = vadd.f32 %v219, %v1109
    %1111 = vdwg.mxu0
    %v1112 = vmul.f32 %v1037, 0.5
    %v1113 = vtanh.pop %v1112
    %v1114 = vadd.f32 %v1113, 1.0
    %v1115 = vmul.f32 %v1114, 0.5
    %v1116 = vmul.f32 %v1039, 0.5
    %v1117 = vtanh.pop %v1116
    %v1118 = vadd.f32 %v1117, 1.0
    %v1119 = vmul.f32 %v1118, 0.5
    %v1120 = vtanh.pop %v1108
    %v1121 = vmul.f32 %v1110, 0.5
    %v1122 = vtanh.pop %v1121
    %v1123 = vadd.f32 %v1122, 1.0
    %v1124 = vmul.f32 %v1123, 0.5
    %v1125 = vmul.f32 %v1119, %v377
    %v1126 = vmul.f32 %v1115, %v1120
    %v1127 = vadd.f32 %v1125, %v1126
    %v1128 = vtanh.pop %v1127
    %v1129 = vmul.f32 %v1124, %v1128
    %1130 = vmatprep.subr.mxu0 %v382
    %1131 = vmatpush1.msra.mxu0 %v381
    %1132 = vmatprep.subr.mxu0 %v386
    %1133 = vmatpush1.msra.mxu0 %v385
    %1134 = vmatprep.subr.mxu0 %v390
    %1135 = vmatpush1.msra.mxu0 %v389
    %1136 = vmatprep.subr.mxu0 %v394
    %1137 = vmatpush1.msra.mxu0 %v393
    %1138 = vmatprep.subr.mxu0 %v398
    %1139 = vmatpush1.msra.mxu0 %v397
    %1140 = vmatprep.subr.mxu0 %v402
    %1141 = vmatpush1.msra.mxu0 %v401
    %1142 = vmatprep.subr.mxu0 %v406
    %1143 = vmatpush1.msra.mxu0 %v405
    %1144 = vmatprep.subr.mxu0 %v410
    %1145 = vmatpush1.msra.mxu0 %v409
    %1146 = vmatprep.subr.mxu0 %v414
    %1147 = vmatpush1.msra.mxu0 %v413
    %1148 = vmatprep.subr.mxu0 %v418
    %1149 = vmatpush1.msra.mxu0 %v417
    %1150 = vmatprep.subr.mxu0 %v422
    %1151 = vmatpush1.msra.mxu0 %v421
    %1152 = vmatprep.subr.mxu0 %v426
    %1153 = vmatpush1.msra.mxu0 %v425
    %1154 = vmatprep.subr.mxu0 %v430
    %1155 = vmatpush1.msra.mxu0 %v429
    %1156 = vmatprep.subr.mxu0 %v434
    %1157 = vmatpush1.msra.mxu0 %v433
    %1158 = vmatprep.subr.mxu0 %v438
    %1159 = vmatpush1.msra.mxu0 %v437
    %1160 = vmatprep.subr.mxu0 %v442
    %1161 = vmatpush1.msra.mxu0 %v441
    %1162 = vmatprep.subr.mxu0 %v446
    %1163 = vmatpush1.msra.mxu0 %v445
    %1164 = vmatprep.subr.mxu0 %v450
    %1165 = vmatpush1.msra.mxu0 %v449
    %1166 = vmatprep.subr.mxu0 %v454
    %1167 = vmatpush1.msra.mxu0 %v453
    %1168 = vmatprep.subr.mxu0 %v458
    %1169 = vmatpush1.msra.mxu0 %v457
    %1170 = vmatprep.subr.mxu0 %v462
    %1171 = vmatpush1.msra.mxu0 %v461
    %1172 = vmatprep.subr.mxu0 %v466
    %1173 = vmatpush1.msra.mxu0 %v465
    %1174 = vmatprep.subr.mxu0 %v470
    %1175 = vmatpush1.msra.mxu0 %v469
    %1176 = vmatprep.subr.mxu0 %v474
    %1177 = vmatpush1.msra.mxu0 %v473
    %1178 = vmatprep.subr.mxu0 %v478
    %1179 = vmatpush1.msra.mxu0 %v477
    %1180 = vmatprep.subr.mxu0 %v482
    %1181 = vmatpush1.msra.mxu0 %v481
    %1182 = vmatprep.subr.mxu0 %v486
    %1183 = vmatpush1.msra.mxu0 %v485
    %1184 = vmatprep.subr.mxu0 %v490
    %1185 = vmatpush1.msra.mxu0 %v489
    %1186 = vmatprep.subr.mxu0 %v494
    %1187 = vmatpush1.msra.mxu0 %v493
    %1188 = vmatprep.subr.mxu0 %v498
    %1189 = vmatpush1.msra.mxu0 %v497
    %1190 = vmatprep.subr.mxu0 %v502
    %1191 = vmatpush1.msra.mxu0 %v501
    %1192 = vmatprep.subr.mxu0 %v506
    %1193 = vmatpush1.msra.mxu0 %v505
    %1194 = vmatprep.mubr.f32.mxu0 %v673
    %1195 = vmatmul.mubr.f32.gmra.mrb[0].mxu0 %v1129
    %v1196 = vpop.f32.mrb[0].mxu0
    %v1197 = vadd.f32 %v510, %v1196
    %v1198 = vpop.f32.mrb[0].mxu0
    %v1199 = vadd.f32 %v511, %v1198
    %1200 = vdwg.mxu0
    %1201 = vmatprep.subr.mxu0 %v384
    %1202 = vmatpush1.msra.mxu0 %v383
    %1203 = vmatprep.subr.mxu0 %v388
    %1204 = vmatpush1.msra.mxu0 %v387
    %1205 = vmatprep.subr.mxu0 %v392
    %1206 = vmatpush1.msra.mxu0 %v391
    %1207 = vmatprep.subr.mxu0 %v396
    %1208 = vmatpush1.msra.mxu0 %v395
    %1209 = vmatprep.subr.mxu0 %v400
    %1210 = vmatpush1.msra.mxu0 %v399
    %1211 = vmatprep.subr.mxu0 %v404
    %1212 = vmatpush1.msra.mxu0 %v403
    %1213 = vmatprep.subr.mxu0 %v408
    %1214 = vmatpush1.msra.mxu0 %v407
    %1215 = vmatprep.subr.mxu0 %v412
    %1216 = vmatpush1.msra.mxu0 %v411
    %1217 = vmatprep.subr.mxu0 %v416
    %1218 = vmatpush1.msra.mxu0 %v415
    %1219 = vmatprep.subr.mxu0 %v420
    %1220 = vmatpush1.msra.mxu0 %v419
    %1221 = vmatprep.subr.mxu0 %v424
    %1222 = vmatpush1.msra.mxu0 %v423
    %1223 = vmatprep.subr.mxu0 %v428
    %1224 = vmatpush1.msra.mxu0 %v427
    %1225 = vmatprep.subr.mxu0 %v432
    %1226 = vmatpush1.msra.mxu0 %v431
    %1227 = vmatprep.subr.mxu0 %v436
    %1228 = vmatpush1.msra.mxu0 %v435
    %1229 = vmatprep.subr.mxu0 %v440
    %1230 = vmatpush1.msra.mxu0 %v439
    %1231 = vmatprep.subr.mxu0 %v444
    %1232 = vmatpush1.msra.mxu0 %v443
    %1233 = vmatprep.subr.mxu0 %v448
    %1234 = vmatpush1.msra.mxu0 %v447
    %1235 = vmatprep.subr.mxu0 %v452
    %1236 = vmatpush1.msra.mxu0 %v451
    %1237 = vmatprep.subr.mxu0 %v456
    %1238 = vmatpush1.msra.mxu0 %v455
    %1239 = vmatprep.subr.mxu0 %v460
    %1240 = vmatpush1.msra.mxu0 %v459
    %1241 = vmatprep.subr.mxu0 %v464
    %1242 = vmatpush1.msra.mxu0 %v463
    %1243 = vmatprep.subr.mxu0 %v468
    %1244 = vmatpush1.msra.mxu0 %v467
    %1245 = vmatprep.subr.mxu0 %v472
    %1246 = vmatpush1.msra.mxu0 %v471
    %1247 = vmatprep.subr.mxu0 %v476
    %1248 = vmatpush1.msra.mxu0 %v475
    %1249 = vmatprep.subr.mxu0 %v480
    %1250 = vmatpush1.msra.mxu0 %v479
    %1251 = vmatprep.subr.mxu0 %v484
    %1252 = vmatpush1.msra.mxu0 %v483
    %1253 = vmatprep.subr.mxu0 %v488
    %1254 = vmatpush1.msra.mxu0 %v487
    %1255 = vmatprep.subr.mxu0 %v492
    %1256 = vmatpush1.msra.mxu0 %v491
    %1257 = vmatprep.subr.mxu0 %v496
    %1258 = vmatpush1.msra.mxu0 %v495
    %1259 = vmatprep.subr.mxu0 %v500
    %1260 = vmatpush1.msra.mxu0 %v499
    %1261 = vmatprep.subr.mxu0 %v504
    %1262 = vmatpush1.msra.mxu0 %v503
    %1263 = vmatprep.subr.mxu0 %v508
    %1264 = vmatpush1.msra.mxu0 %v507
    %1265 = vmatprep.mubr.f32.mxu0 %v673
    %1266 = vmatmul.mubr.f32.gmra.mrb[0].mxu0 %v1129
    %v1267 = vpop.f32.mrb[0].mxu0
    %v1268 = vadd.f32 %v512, %v1267
    %v1269 = vpop.f32.mrb[0].mxu0
    %v1270 = vadd.f32 %v513, %v1269
    %1271 = vdwg.mxu0
    %v1272 = vmul.f32 %v1197, 0.5
    %v1273 = vtanh.pop %v1272
    %v1274 = vadd.f32 %v1273, 1.0
    %v1275 = vmul.f32 %v1274, 0.5
    %v1276 = vmul.f32 %v1199, 0.5
    %v1277 = vtanh.pop %v1276
    %v1278 = vadd.f32 %v1277, 1.0
    %v1279 = vmul.f32 %v1278, 0.5
    %v1280 = vtanh.pop %v1268
    %v1281 = vmul.f32 %v1270, 0.5
    %v1282 = vtanh.pop %v1281
    %v1283 = vadd.f32 %v1282, 1.0
    %v1284 = vmul.f32 %v1283, 0.5
    %v1285 = vmul.f32 %v1279, %v671
    %v1286 = vmul.f32 %v1275, %v1280
    %v1287 = vadd.f32 %v1285, %v1286
    %v1288 = vtanh.pop %v1287
    %v1289 = vmul.f32 %v1284, %v1288
    %1290 = vmatprep.subr.mxu0 %v676
    %1291 = vmatpush1.msra.mxu0 %v675
    %1292 = vmatprep.subr.mxu0 %v680
    %1293 = vmatpush1.msra.mxu0 %v679
    %1294 = vmatprep.subr.mxu0 %v684
    %1295 = vmatpush1.msra.mxu0 %v683
    %1296 = vmatprep.subr.mxu0 %v688
    %1297 = vmatpush1.msra.mxu0 %v687
    %1298 = vmatprep.subr.mxu0 %v692
    %1299 = vmatpush1.msra.mxu0 %v691
    %1300 = vmatprep.subr.mxu0 %v696
    %1301 = vmatpush1.msra.mxu0 %v695
    %1302 = vmatprep.subr.mxu0 %v700
    %1303 = vmatpush1.msra.mxu0 %v699
    %1304 = vmatprep.subr.mxu0 %v704
    %1305 = vmatpush1.msra.mxu0 %v703
    %1306 = vmatprep.subr.mxu0 %v708
    %1307 = vmatpush1.msra.mxu0 %v707
    %1308 = vmatprep.subr.mxu0 %v712
    %1309 = vmatpush1.msra.mxu0 %v711
    %1310 = vmatprep.subr.mxu0 %v716
    %1311 = vmatpush1.msra.mxu0 %v715
    %1312 = vmatprep.subr.mxu0 %v720
    %1313 = vmatpush1.msra.mxu0 %v719
    %1314 = vmatprep.subr.mxu0 %v724
    %1315 = vmatpush1.msra.mxu0 %v723
    %1316 = vmatprep.subr.mxu0 %v728
    %1317 = vmatpush1.msra.mxu0 %v727
    %1318 = vmatprep.subr.mxu0 %v732
    %1319 = vmatpush1.msra.mxu0 %v731
    %1320 = vmatprep.subr.mxu0 %v736
    %1321 = vmatpush1.msra.mxu0 %v735
    %1322 = vmatprep.subr.mxu0 %v740
    %1323 = vmatpush1.msra.mxu0 %v739
    %1324 = vmatprep.subr.mxu0 %v744
    %1325 = vmatpush1.msra.mxu0 %v743
    %1326 = vmatprep.subr.mxu0 %v748
    %1327 = vmatpush1.msra.mxu0 %v747
    %1328 = vmatprep.subr.mxu0 %v752
    %1329 = vmatpush1.msra.mxu0 %v751
    %1330 = vmatprep.subr.mxu0 %v756
    %1331 = vmatpush1.msra.mxu0 %v755
    %1332 = vmatprep.subr.mxu0 %v760
    %1333 = vmatpush1.msra.mxu0 %v759
    %1334 = vmatprep.subr.mxu0 %v764
    %1335 = vmatpush1.msra.mxu0 %v763
    %1336 = vmatprep.subr.mxu0 %v768
    %1337 = vmatpush1.msra.mxu0 %v767
    %1338 = vmatprep.subr.mxu0 %v772
    %1339 = vmatpush1.msra.mxu0 %v771
    %1340 = vmatprep.subr.mxu0 %v776
    %1341 = vmatpush1.msra.mxu0 %v775
    %1342 = vmatprep.subr.mxu0 %v780
    %1343 = vmatpush1.msra.mxu0 %v779
    %1344 = vmatprep.subr.mxu0 %v784
    %1345 = vmatpush1.msra.mxu0 %v783
    %1346 = vmatprep.subr.mxu0 %v788
    %1347 = vmatpush1.msra.mxu0 %v787
    %1348 = vmatprep.subr.mxu0 %v792
    %1349 = vmatpush1.msra.mxu0 %v791
    %1350 = vmatprep.subr.mxu0 %v796
    %1351 = vmatpush1.msra.mxu0 %v795
    %1352 = vmatprep.subr.mxu0 %v800
    %1353 = vmatpush1.msra.mxu0 %v799
    %1354 = vmatprep.mubr.f32.mxu0 %v967
    %1355 = vmatmul.mubr.f32.gmra.mrb[0].mxu0 %v1289
    %v1356 = vpop.f32.mrb[0].mxu0
    %v1357 = vadd.f32 %v804, %v1356
    %v1358 = vpop.f32.mrb[0].mxu0
    %v1359 = vadd.f32 %v805, %v1358
    %1360 = vdwg.mxu0
    %1361 = vmatprep.subr.mxu0 %v678
    %1362 = vmatpush1.msra.mxu0 %v677
    %1363 = vmatprep.subr.mxu0 %v682
    %1364 = vmatpush1.msra.mxu0 %v681
    %1365 = vmatprep.subr.mxu0 %v686
    %1366 = vmatpush1.msra.mxu0 %v685
    %1367 = vmatprep.subr.mxu0 %v690
    %1368 = vmatpush1.msra.mxu0 %v689
    %1369 = vmatprep.subr.mxu0 %v694
    %1370 = vmatpush1.msra.mxu0 %v693
    %1371 = vmatprep.subr.mxu0 %v698
    %1372 = vmatpush1.msra.mxu0 %v697
    %1373 = vmatprep.subr.mxu0 %v702
    %1374 = vmatpush1.msra.mxu0 %v701
    %1375 = vmatprep.subr.mxu0 %v706
    %1376 = vmatpush1.msra.mxu0 %v705
    %1377 = vmatprep.subr.mxu0 %v710
    %1378 = vmatpush1.msra.mxu0 %v709
    %1379 = vmatprep.subr.mxu0 %v714
    %1380 = vmatpush1.msra.mxu0 %v713
    %1381 = vmatprep.subr.mxu0 %v718
    %1382 = vmatpush1.msra.mxu0 %v717
    %1383 = vmatprep.subr.mxu0 %v722
    %1384 = vmatpush1.msra.mxu0 %v721
    %1385 = vmatprep.subr.mxu0 %v726
    %1386 = vmatpush1.msra.mxu0 %v725
    %1387 = vmatprep.subr.mxu0 %v730
    %1388 = vmatpush1.msra.mxu0 %v729
    %1389 = vmatprep.subr.mxu0 %v734
    %1390 = vmatpush1.msra.mxu0 %v733
    %1391 = vmatprep.subr.mxu0 %v738
    %1392 = vmatpush1.msra.mxu0 %v737
    %1393 = vmatprep.subr.mxu0 %v742
    %1394 = vmatpush1.msra.mxu0 %v741
    %1395 = vmatprep.subr.mxu0 %v746
    %1396 = vmatpush1.msra.mxu0 %v745
    %1397 = vmatprep.subr.mxu0 %v750
    %1398 = vmatpush1.msra.mxu0 %v749
    %1399 = vmatprep.subr.mxu0 %v754
    %1400 = vmatpush1.msra.mxu0 %v753
    %1401 = vmatprep.subr.mxu0 %v758
    %1402 = vmatpush1.msra.mxu0 %v757
    %1403 = vmatprep.subr.mxu0 %v762
    %1404 = vmatpush1.msra.mxu0 %v761
    %1405 = vmatprep.subr.mxu0 %v766
    %1406 = vmatpush1.msra.mxu0 %v765
    %1407 = vmatprep.subr.mxu0 %v770
    %1408 = vmatpush1.msra.mxu0 %v769
    %1409 = vmatprep.subr.mxu0 %v774
    %1410 = vmatpush1.msra.mxu0 %v773
    %1411 = vmatprep.subr.mxu0 %v778
    %1412 = vmatpush1.msra.mxu0 %v777
    %1413 = vmatprep.subr.mxu0 %v782
    %1414 = vmatpush1.msra.mxu0 %v781
    %1415 = vmatprep.subr.mxu0 %v786
    %1416 = vmatpush1.msra.mxu0 %v785
    %1417 = vmatprep.subr.mxu0 %v790
    %1418 = vmatpush1.msra.mxu0 %v789
    %1419 = vmatprep.subr.mxu0 %v794
    %1420 = vmatpush1.msra.mxu0 %v793
    %1421 = vmatprep.subr.mxu0 %v798
    %1422 = vmatpush1.msra.mxu0 %v797
    %1423 = vmatprep.subr.mxu0 %v802
    %1424 = vmatpush1.msra.mxu0 %v801
    %1425 = vmatprep.mubr.f32.mxu0 %v967
    %1426 = vmatmul.mubr.f32.gmra.mrb[0].mxu0 %v1289
    %v1427 = vpop.f32.mrb[0].mxu0
    %v1428 = vadd.f32 %v806, %v1427
    %v1429 = vpop.f32.mrb[0].mxu0
    %v1430 = vadd.f32 %v807, %v1429
    %1431 = vdwg.mxu0
    %v1432 = vmul.f32 %v1357, 0.5
    %v1433 = vtanh.pop %v1432
    %v1434 = vadd.f32 %v1433, 1.0
    %v1435 = vmul.f32 %v1434, 0.5
    %v1436 = vmul.f32 %v1359, 0.5
    %v1437 = vtanh.pop %v1436
    %v1438 = vadd.f32 %v1437, 1.0
    %v1439 = vmul.f32 %v1438, 0.5
    %v1440 = vtanh.pop %v1428
    %v1441 = vmul.f32 %v1430, 0.5
    %v1442 = vtanh.pop %v1441
    %v1443 = vadd.f32 %v1442, 1.0
    %v1444 = vmul.f32 %v1443, 0.5
    %v1445 = vmul.f32 %v1439, %v965
    %v1446 = vmul.f32 %v1435, %v1440
    %v1447 = vadd.f32 %v1445, %v1446
    %v1448 = vtanh.pop %v1447
    %v1449 = vmul.f32 %v1444, %v1448
    %s1450 = scalar_lea.vmem [#allocation2], 16
    %v1451 = vld [vmem:[%s1450] sm:$0xff]
    %1452 = vmatprep.subr.mxu0 %v89
    %1453 = vmatpush1.msra.mxu0 %v88
    %1454 = vmatprep.subr.mxu0 %v93
    %1455 = vmatpush1.msra.mxu0 %v92
    %1456 = vmatprep.subr.mxu0 %v97
    %1457 = vmatpush1.msra.mxu0 %v96
    %1458 = vmatprep.subr.mxu0 %v101
    %1459 = vmatpush1.msra.mxu0 %v100
    %1460 = vmatprep.subr.mxu0 %v105
    %1461 = vmatpush1.msra.mxu0 %v104
    %1462 = vmatprep.subr.mxu0 %v109
    %1463 = vmatpush1.msra.mxu0 %v108
    %1464 = vmatprep.subr.mxu0 %v113
    %1465 = vmatpush1.msra.mxu0 %v112
    %1466 = vmatprep.subr.mxu0 %v117
    %1467 = vmatpush1.msra.mxu0 %v116
    %1468 = vmatprep.subr.mxu0 %v121
    %1469 = vmatpush1.msra.mxu0 %v120
    %1470 = vmatprep.subr.mxu0 %v125
    %1471 = vmatpush1.msra.mxu0 %v124
    %1472 = vmatprep.subr.mxu0 %v129
    %1473 = vmatpush1.msra.mxu0 %v128
    %1474 = vmatprep.subr.mxu0 %v133
    %1475 = vmatpush1.msra.mxu0 %v132
    %1476 = vmatprep.subr.mxu0 %v137
    %1477 = vmatpush1.msra.mxu0 %v136
    %1478 = vmatprep.subr.mxu0 %v141
    %1479 = vmatpush1.msra.mxu0 %v140
    %1480 = vmatprep.subr.mxu0 %v145
    %1481 = vmatpush1.msra.mxu0 %v144
    %1482 = vmatprep.subr.mxu0 %v149
    %1483 = vmatpush1.msra.mxu0 %v148
    %1484 = vmatprep.subr.mxu0 %v153
    %1485 = vmatpush1.msra.mxu0 %v152
    %1486 = vmatprep.subr.mxu0 %v157
    %1487 = vmatpush1.msra.mxu0 %v156
    %1488 = vmatprep.subr.mxu0 %v161
    %1489 = vmatpush1.msra.mxu0 %v160
    %1490 = vmatprep.subr.mxu0 %v165
    %1491 = vmatpush1.msra.mxu0 %v164
    %1492 = vmatprep.subr.mxu0 %v169
    %1493 = vmatpush1.msra.mxu0 %v168
    %1494 = vmatprep.subr.mxu0 %v173
    %1495 = vmatpush1.msra.mxu0 %v172
    %1496 = vmatprep.subr.mxu0 %v177
    %1497 = vmatpush1.msra.mxu0 %v176
    %1498 = vmatprep.subr.mxu0 %v181
    %1499 = vmatpush1.msra.mxu0 %v180
    %1500 = vmatprep.subr.mxu0 %v185
    %1501 = vmatpush1.msra.mxu0 %v184
    %1502 = vmatprep.subr.mxu0 %v189
    %1503 = vmatpush1.msra.mxu0 %v188
    %1504 = vmatprep.subr.mxu0 %v193
    %1505 = vmatpush1.msra.mxu0 %v192
    %1506 = vmatprep.subr.mxu0 %v197
    %1507 = vmatpush1.msra.mxu0 %v196
    %1508 = vmatprep.subr.mxu0 %v201
    %1509 = vmatpush1.msra.mxu0 %v200
    %1510 = vmatprep.subr.mxu0 %v205
    %1511 = vmatpush1.msra.mxu0 %v204
    %1512 = vmatprep.subr.mxu0 %v209
    %1513 = vmatpush1.msra.mxu0 %v208
    %1514 = vmatprep.subr.mxu0 %v213
    %1515 = vmatpush1.msra.mxu0 %v212
    %1516 = vmatprep.mubr.f32.mxu0 %v1129
    %1517 = vmatmul.mubr.f32.gmra.mrb[0].mxu0 %v1451
    %v1518 = vpop.f32.mrb[0].mxu0
    %v1519 = vadd.f32 %v216, %v1518
    %v1520 = vpop.f32.mrb[0].mxu0
    %v1521 = vadd.f32 %v217, %v1520
    %1522 = vdwg.mxu0
    %1523 = vmatprep.subr.mxu0 %v91
    %1524 = vmatpush1.msra.mxu0 %v90
    %1525 = vmatprep.subr.mxu0 %v95
    %1526 = vmatpush1.msra.mxu0 %v94
    %1527 = vmatprep.subr.mxu0 %v99
    %1528 = vmatpush1.msra.mxu0 %v98
    %1529 = vmatprep.subr.mxu0 %v103
    %1530 = vmatpush1.msra.mxu0 %v102
    %1531 = vmatprep.subr.mxu0 %v107
    %1532 = vmatpush1.msra.mxu0 %v106
    %1533 = vmatprep.subr.mxu0 %v111
    %1534 = vmatpush1.msra.mxu0 %v110
    %1535 = vmatprep.subr.mxu0 %v115
    %1536 = vmatpush1.msra.mxu0 %v114
    %1537 = vmatprep.subr.mxu0 %v119
    %1538 = vmatpush1.msra.mxu0 %v118
    %1539 = vmatprep.subr.mxu0 %v123
    %1540 = vmatpush1.msra.mxu0 %v122
    %1541 = vmatprep.subr.mxu0 %v127
    %1542 = vmatpush1.msra.mxu0 %v126
    %1543 = vmatprep.subr.mxu0 %v131
    %1544 = vmatpush1.msra.mxu0 %v130
    %1545 = vmatprep.subr.mxu0 %v135
    %1546 = vmatpush1.msra.mxu0 %v134
    %1547 = vmatprep.subr.mxu0 %v139
    %1548 = vmatpush1.msra.mxu0 %v138
    %1549 = vmatprep.subr.mxu0 %v143
    %1550 = vmatpush1.msra.mxu0 %v142
    %1551 = vmatprep.subr.mxu0 %v147
    %1552 = vmatpush1.msra.mxu0 %v146
    %1553 = vmatprep.subr.mxu0 %v151
    %1554 = vmatpush1.msra.mxu0 %v150
    %1555 = vmatprep.subr.mxu0 %v155
    %1556 = vmatpush1.msra.mxu0 %v154
    %1557 = vmatprep.subr.mxu0 %v159
    %1558 = vmatpush1.msra.mxu0 %v158
    %1559 = vmatprep.subr.mxu0 %v163
    %1560 = vmatpush1.msra.mxu0 %v162
    %1561 = vmatprep.subr.mxu0 %v167
    %1562 = vmatpush1.msra.mxu0 %v166
    %1563 = vmatprep.subr.mxu0 %v171
    %1564 = vmatpush1.msra.mxu0 %v170
    %1565 = vmatprep.subr.mxu0 %v175
    %1566 = vmatpush1.msra.mxu0 %v174
    %1567 = vmatprep.subr.mxu0 %v179
    %1568 = vmatpush1.msra.mxu0 %v178
    %1569 = vmatprep.subr.mxu0 %v183
    %1570 = vmatpush1.msra.mxu0 %v182
    %1571 = vmatprep.subr.mxu0 %v187
    %1572 = vmatpush1.msra.mxu0 %v186
    %1573 = vmatprep.subr.mxu0 %v191
    %1574 = vmatpush1.msra.mxu0 %v190
    %1575 = vmatprep.subr.mxu0 %v195
    %1576 = vmatpush1.msra.mxu0 %v194
    %1577 = vmatprep.subr.mxu0 %v199
    %1578 = vmatpush1.msra.mxu0 %v198
    %1579 = vmatprep.subr.mxu0 %v203
    %1580 = vmatpush1.msra.mxu0 %v202
    %1581 = vmatprep.subr.mxu0 %v207
    %1582 = vmatpush1.msra.mxu0 %v206
    %1583 = vmatprep.subr.mxu0 %v211
    %1584 = vmatpush1.msra.mxu0 %v210
    %1585 = vmatprep.subr.mxu0 %v215
    %1586 = vmatpush1.msra.mxu0 %v214
    %1587 = vmatprep.mubr.f32.mxu0 %v1129
    %1588 = vmatmul.mubr.f32.gmra.mrb[0].mxu0 %v1451
    %v1589 = vpop.f32.mrb[0].mxu0
    %v1590 = vadd.f32 %v218, %v1589
    %v1591 = vpop.f32.mrb[0].mxu0
    %v1592 = vadd.f32 %v219, %v1591
    %1593 = vdwg.mxu0
    %v1594 = vmul.f32 %v1519, 0.5
    %v1595 = vtanh.pop %v1594
    %v1596 = vadd.f32 %v1595, 1.0
    %v1597 = vmul.f32 %v1596, 0.5
    %v1598 = vmul.f32 %v1521, 0.5
    %v1599 = vtanh.pop %v1598
    %v1600 = vadd.f32 %v1599, 1.0
    %v1601 = vmul.f32 %v1600, 0.5
    %v1602 = vtanh.pop %v1590
    %v1603 = vmul.f32 %v1592, 0.5
    %v1604 = vtanh.pop %v1603
    %v1605 = vadd.f32 %v1604, 1.0
    %v1606 = vmul.f32 %v1605, 0.5
    %v1607 = vmul.f32 %v1601, %v1127
    %v1608 = vmul.f32 %v1597, %v1602
    %v1609 = vadd.f32 %v1607, %v1608
    %v1610 = vtanh.pop %v1609
    %v1611 = vmul.f32 %v1606, %v1610
    %1612 = vmatprep.subr.mxu0 %v382
    %1613 = vmatpush1.msra.mxu0 %v381
    %1614 = vmatprep.subr.mxu0 %v386
    %1615 = vmatpush1.msra.mxu0 %v385
    %1616 = vmatprep.subr.mxu0 %v390
    %1617 = vmatpush1.msra.mxu0 %v389
    %1618 = vmatprep.subr.mxu0 %v394
    %1619 = vmatpush1.msra.mxu0 %v393
    %1620 = vmatprep.subr.mxu0 %v398
    %1621 = vmatpush1.msra.mxu0 %v397
    %1622 = vmatprep.subr.mxu0 %v402
    %1623 = vmatpush1.msra.mxu0 %v401
    %1624 = vmatprep.subr.mxu0 %v406
    %1625 = vmatpush1.msra.mxu0 %v405
    %1626 = vmatprep.subr.mxu0 %v410
    %1627 = vmatpush1.msra.mxu0 %v409
    %1628 = vmatprep.subr.mxu0 %v414
    %1629 = vmatpush1.msra.mxu0 %v413
    %1630 = vmatprep.subr.mxu0 %v418
    %1631 = vmatpush1.msra.mxu0 %v417
    %1632 = vmatprep.subr.mxu0 %v422
    %1633 = vmatpush1.msra.mxu0 %v421
    %1634 = vmatprep.subr.mxu0 %v426
    %1635 = vmatpush1.msra.mxu0 %v425
    %1636 = vmatprep.subr.mxu0 %v430
    %1637 = vmatpush1.msra.mxu0 %v429
    %1638 = vmatprep.subr.mxu0 %v434
    %1639 = vmatpush1.msra.mxu0 %v433
    %1640 = vmatprep.subr.mxu0 %v438
    %1641 = vmatpush1.msra.mxu0 %v437
    %1642 = vmatprep.subr.mxu0 %v442
    %1643 = vmatpush1.msra.mxu0 %v441
    %1644 = vmatprep.subr.mxu0 %v446
    %1645 = vmatpush1.msra.mxu0 %v445
    %1646 = vmatprep.subr.mxu0 %v450
    %1647 = vmatpush1.msra.mxu0 %v449
    %1648 = vmatprep.subr.mxu0 %v454
    %1649 = vmatpush1.msra.mxu0 %v453
    %1650 = vmatprep.subr.mxu0 %v458
    %1651 = vmatpush1.msra.mxu0 %v457
    %1652 = vmatprep.subr.mxu0 %v462
    %1653 = vmatpush1.msra.mxu0 %v461
    %1654 = vmatprep.subr.mxu0 %v466
    %1655 = vmatpush1.msra.mxu0 %v465
    %1656 = vmatprep.subr.mxu0 %v470
    %1657 = vmatpush1.msra.mxu0 %v469
    %1658 = vmatprep.subr.mxu0 %v474
    %1659 = vmatpush1.msra.mxu0 %v473
    %1660 = vmatprep.subr.mxu0 %v478
    %1661 = vmatpush1.msra.mxu0 %v477
    %1662 = vmatprep.subr.mxu0 %v482
    %1663 = vmatpush1.msra.mxu0 %v481
    %1664 = vmatprep.subr.mxu0 %v486
    %1665 = vmatpush1.msra.mxu0 %v485
    %1666 = vmatprep.subr.mxu0 %v490
    %1667 = vmatpush1.msra.mxu0 %v489
    %1668 = vmatprep.subr.mxu0 %v494
    %1669 = vmatpush1.msra.mxu0 %v493
    %1670 = vmatprep.subr.mxu0 %v498
    %1671 = vmatpush1.msra.mxu0 %v497
    %1672 = vmatprep.subr.mxu0 %v502
    %1673 = vmatpush1.msra.mxu0 %v501
    %1674 = vmatprep.subr.mxu0 %v506
    %1675 = vmatpush1.msra.mxu0 %v505
    %1676 = vmatprep.mubr.f32.mxu0 %v1289
    %1677 = vmatmul.mubr.f32.gmra.mrb[0].mxu0 %v1611
    %v1678 = vpop.f32.mrb[0].mxu0
    %v1679 = vadd.f32 %v510, %v1678
    %v1680 = vpop.f32.mrb[0].mxu0
    %v1681 = vadd.f32 %v511, %v1680
    %1682 = vdwg.mxu0
    %1683 = vmatprep.subr.mxu0 %v384
    %1684 = vmatpush1.msra.mxu0 %v383
    %1685 = vmatprep.subr.mxu0 %v388
    %1686 = vmatpush1.msra.mxu0 %v387
    %1687 = vmatprep.subr.mxu0 %v392
    %1688 = vmatpush1.msra.mxu0 %v391
    %1689 = vmatprep.subr.mxu0 %v396
    %1690 = vmatpush1.msra.mxu0 %v395
    %1691 = vmatprep.subr.mxu0 %v400
    %1692 = vmatpush1.msra.mxu0 %v399
    %1693 = vmatprep.subr.mxu0 %v404
    %1694 = vmatpush1.msra.mxu0 %v403
    %1695 = vmatprep.subr.mxu0 %v408
    %1696 = vmatpush1.msra.mxu0 %v407
    %1697 = vmatprep.subr.mxu0 %v412
    %1698 = vmatpush1.msra.mxu0 %v411
    %1699 = vmatprep.subr.mxu0 %v416
    %1700 = vmatpush1.msra.mxu0 %v415
    %1701 = vmatprep.subr.mxu0 %v420
    %1702 = vmatpush1.msra.mxu0 %v419
    %1703 = vmatprep.subr.mxu0 %v424
    %1704 = vmatpush1.msra.mxu0 %v423
    %1705 = vmatprep.subr.mxu0 %v428
    %1706 = vmatpush1.msra.mxu0 %v427
    %1707 = vmatprep.subr.mxu0 %v432
    %1708 = vmatpush1.msra.mxu0 %v431
    %1709 = vmatprep.subr.mxu0 %v436
    %1710 = vmatpush1.msra.mxu0 %v435
    %1711 = vmatprep.subr.mxu0 %v440
    %1712 = vmatpush1.msra.mxu0 %v439
    %1713 = vmatprep.subr.mxu0 %v444
    %1714 = vmatpush1.msra.mxu0 %v443
    %1715 = vmatprep.subr.mxu0 %v448
    %1716 = vmatpush1.msra.mxu0 %v447
    %1717 = vmatprep.subr.mxu0 %v452
    %1718 = vmatpush1.msra.mxu0 %v451
    %1719 = vmatprep.subr.mxu0 %v456
    %1720 = vmatpush1.msra.mxu0 %v455
    %1721 = vmatprep.subr.mxu0 %v460
    %1722 = vmatpush1.msra.mxu0 %v459
    %1723 = vmatprep.subr.mxu0 %v464
    %1724 = vmatpush1.msra.mxu0 %v463
    %1725 = vmatprep.subr.mxu0 %v468
    %1726 = vmatpush1.msra.mxu0 %v467
    %1727 = vmatprep.subr.mxu0 %v472
    %1728 = vmatpush1.msra.mxu0 %v471
    %1729 = vmatprep.subr.mxu0 %v476
    %1730 = vmatpush1.msra.mxu0 %v475
    %1731 = vmatprep.subr.mxu0 %v480
    %1732 = vmatpush1.msra.mxu0 %v479
    %1733 = vmatprep.subr.mxu0 %v484
    %1734 = vmatpush1.msra.mxu0 %v483
    %1735 = vmatprep.subr.mxu0 %v488
    %1736 = vmatpush1.msra.mxu0 %v487
    %1737 = vmatprep.subr.mxu0 %v492
    %1738 = vmatpush1.msra.mxu0 %v491
    %1739 = vmatprep.subr.mxu0 %v496
    %1740 = vmatpush1.msra.mxu0 %v495
    %1741 = vmatprep.subr.mxu0 %v500
    %1742 = vmatpush1.msra.mxu0 %v499
    %1743 = vmatprep.subr.mxu0 %v504
    %1744 = vmatpush1.msra.mxu0 %v503
    %1745 = vmatprep.subr.mxu0 %v508
    %1746 = vmatpush1.msra.mxu0 %v507
    %1747 = vmatprep.mubr.f32.mxu0 %v1289
    %1748 = vmatmul.mubr.f32.gmra.mrb[0].mxu0 %v1611
    %v1749 = vpop.f32.mrb[0].mxu0
    %v1750 = vadd.f32 %v512, %v1749
    %v1751 = vpop.f32.mrb[0].mxu0
    %v1752 = vadd.f32 %v513, %v1751
    %1753 = vdwg.mxu0
    %v1754 = vmul.f32 %v1679, 0.5
    %v1755 = vtanh.pop %v1754
    %v1756 = vadd.f32 %v1755, 1.0
    %v1757 = vmul.f32 %v1756, 0.5
    %v1758 = vmul.f32 %v1681, 0.5
    %v1759 = vtanh.pop %v1758
    %v1760 = vadd.f32 %v1759, 1.0
    %v1761 = vmul.f32 %v1760, 0.5
    %v1762 = vtanh.pop %v1750
    %v1763 = vmul.f32 %v1752, 0.5
    %v1764 = vtanh.pop %v1763
    %v1765 = vadd.f32 %v1764, 1.0
    %v1766 = vmul.f32 %v1765, 0.5
    %v1767 = vmul.f32 %v1761, %v1287
    %v1768 = vmul.f32 %v1757, %v1762
    %v1769 = vadd.f32 %v1767, %v1768
    %v1770 = vtanh.pop %v1769
    %v1771 = vmul.f32 %v1766, %v1770
    %1772 = vmatprep.subr.mxu0 %v676
    %1773 = vmatpush1.msra.mxu0 %v675
    %1774 = vmatprep.subr.mxu0 %v680
    %1775 = vmatpush1.msra.mxu0 %v679
    %1776 = vmatprep.subr.mxu0 %v684
    %1777 = vmatpush1.msra.mxu0 %v683
    %1778 = vmatprep.subr.mxu0 %v688
    %1779 = vmatpush1.msra.mxu0 %v687
    %1780 = vmatprep.subr.mxu0 %v692
    %1781 = vmatpush1.msra.mxu0 %v691
    %1782 = vmatprep.subr.mxu0 %v696
    %1783 = vmatpush1.msra.mxu0 %v695
    %1784 = vmatprep.subr.mxu0 %v700
    %1785 = vmatpush1.msra.mxu0 %v699
    %1786 = vmatprep.subr.mxu0 %v704
    %1787 = vmatpush1.msra.mxu0 %v703
    %1788 = vmatprep.subr.mxu0 %v708
    %1789 = vmatpush1.msra.mxu0 %v707
    %1790 = vmatprep.subr.mxu0 %v712
    %1791 = vmatpush1.msra.mxu0 %v711
    %1792 = vmatprep.subr.mxu0 %v716
    %1793 = vmatpush1.msra.mxu0 %v715
    %1794 = vmatprep.subr.mxu0 %v720
    %1795 = vmatpush1.msra.mxu0 %v719
    %1796 = vmatprep.subr.mxu0 %v724
    %1797 = vmatpush1.msra.mxu0 %v723
    %1798 = vmatprep.subr.mxu0 %v728
    %1799 = vmatpush1.msra.mxu0 %v727
    %1800 = vmatprep.subr.mxu0 %v732
    %1801 = vmatpush1.msra.mxu0 %v731
    %1802 = vmatprep.subr.mxu0 %v736
    %1803 = vmatpush1.msra.mxu0 %v735
    %1804 = vmatprep.subr.mxu0 %v740
    %1805 = vmatpush1.msra.mxu0 %v739
    %1806 = vmatprep.subr.mxu0 %v744
    %1807 = vmatpush1.msra.mxu0 %v743
    %1808 = vmatprep.subr.mxu0 %v748
    %1809 = vmatpush1.msra.mxu0 %v747
    %1810 = vmatprep.subr.mxu0 %v752
    %1811 = vmatpush1.msra.mxu0 %v751
    %1812 = vmatprep.subr.mxu0 %v756
    %1813 = vmatpush1.msra.mxu0 %v755
    %1814 = vmatprep.subr.mxu0 %v760
    %1815 = vmatpush1.msra.mxu0 %v759
    %1816 = vmatprep.subr.mxu0 %v764
    %1817 = vmatpush1.msra.mxu0 %v763
    %1818 = vmatprep.subr.mxu0 %v768
    %1819 = vmatpush1.msra.mxu0 %v767
    %1820 = vmatprep.subr.mxu0 %v772
    %1821 = vmatpush1.msra.mxu0 %v771
    %1822 = vmatprep.subr.mxu0 %v776
    %1823 = vmatpush1.msra.mxu0 %v775
    %1824 = vmatprep.subr.mxu0 %v780
    %1825 = vmatpush1.msra.mxu0 %v779
    %1826 = vmatprep.subr.mxu0 %v784
    %1827 = vmatpush1.msra.mxu0 %v783
    %1828 = vmatprep.subr.mxu0 %v788
    %1829 = vmatpush1.msra.mxu0 %v787
    %1830 = vmatprep.subr.mxu0 %v792
    %1831 = vmatpush1.msra.mxu0 %v791
    %1832 = vmatprep.subr.mxu0 %v796
    %1833 = vmatpush1.msra.mxu0 %v795
    %1834 = vmatprep.subr.mxu0 %v800
    %1835 = vmatpush1.msra.mxu0 %v799
    %1836 = vmatprep.mubr.f32.mxu0 %v1449
    %1837 = vmatmul.mubr.f32.gmra.mrb[0].mxu0 %v1771
    %v1838 = vpop.f32.mrb[0].mxu0
    %v1839 = vadd.f32 %v804, %v1838
    %v1840 = vpop.f32.mrb[0].mxu0
    %v1841 = vadd.f32 %v805, %v1840
    %1842 = vdwg.mxu0
    %1843 = vmatprep.subr.mxu0 %v678
    %1844 = vmatpush1.msra.mxu0 %v677
    %1845 = vmatprep.subr.mxu0 %v682
    %1846 = vmatpush1.msra.mxu0 %v681
    %1847 = vmatprep.subr.mxu0 %v686
    %1848 = vmatpush1.msra.mxu0 %v685
    %1849 = vmatprep.subr.mxu0 %v690
    %1850 = vmatpush1.msra.mxu0 %v689
    %1851 = vmatprep.subr.mxu0 %v694
    %1852 = vmatpush1.msra.mxu0 %v693
    %1853 = vmatprep.subr.mxu0 %v698
    %1854 = vmatpush1.msra.mxu0 %v697
    %1855 = vmatprep.subr.mxu0 %v702
    %1856 = vmatpush1.msra.mxu0 %v701
    %1857 = vmatprep.subr.mxu0 %v706
    %1858 = vmatpush1.msra.mxu0 %v705
    %1859 = vmatprep.subr.mxu0 %v710
    %1860 = vmatpush1.msra.mxu0 %v709
    %1861 = vmatprep.subr.mxu0 %v714
    %1862 = vmatpush1.msra.mxu0 %v713
    %1863 = vmatprep.subr.mxu0 %v718
    %1864 = vmatpush1.msra.mxu0 %v717
    %1865 = vmatprep.subr.mxu0 %v722
    %1866 = vmatpush1.msra.mxu0 %v721
    %1867 = vmatprep.subr.mxu0 %v726
    %1868 = vmatpush1.msra.mxu0 %v725
    %1869 = vmatprep.subr.mxu0 %v730
    %1870 = vmatpush1.msra.mxu0 %v729
    %1871 = vmatprep.subr.mxu0 %v734
    %1872 = vmatpush1.msra.mxu0 %v733
    %1873 = vmatprep.subr.mxu0 %v738
    %1874 = vmatpush1.msra.mxu0 %v737
    %1875 = vmatprep.subr.mxu0 %v742
    %1876 = vmatpush1.msra.mxu0 %v741
    %1877 = vmatprep.subr.mxu0 %v746
    %1878 = vmatpush1.msra.mxu0 %v745
    %1879 = vmatprep.subr.mxu0 %v750
    %1880 = vmatpush1.msra.mxu0 %v749
    %1881 = vmatprep.subr.mxu0 %v754
    %1882 = vmatpush1.msra.mxu0 %v753
    %1883 = vmatprep.subr.mxu0 %v758
    %1884 = vmatpush1.msra.mxu0 %v757
    %1885 = vmatprep.subr.mxu0 %v762
    %1886 = vmatpush1.msra.mxu0 %v761
    %1887 = vmatprep.subr.mxu0 %v766
    %1888 = vmatpush1.msra.mxu0 %v765
    %1889 = vmatprep.subr.mxu0 %v770
    %1890 = vmatpush1.msra.mxu0 %v769
    %1891 = vmatprep.subr.mxu0 %v774
    %1892 = vmatpush1.msra.mxu0 %v773
    %1893 = vmatprep.subr.mxu0 %v778
    %1894 = vmatpush1.msra.mxu0 %v777
    %1895 = vmatprep.subr.mxu0 %v782
    %1896 = vmatpush1.msra.mxu0 %v781
    %1897 = vmatprep.subr.mxu0 %v786
    %1898 = vmatpush1.msra.mxu0 %v785
    %1899 = vmatprep.subr.mxu0 %v790
    %1900 = vmatpush1.msra.mxu0 %v789
    %1901 = vmatprep.subr.mxu0 %v794
    %1902 = vmatpush1.msra.mxu0 %v793
    %1903 = vmatprep.subr.mxu0 %v798
    %1904 = vmatpush1.msra.mxu0 %v797
    %1905 = vmatprep.subr.mxu0 %v802
    %1906 = vmatpush1.msra.mxu0 %v801
    %1907 = vmatprep.mubr.f32.mxu0 %v1449
    %1908 = vmatmul.mubr.f32.gmra.mrb[0].mxu0 %v1771
    %v1909 = vpop.f32.mrb[0].mxu0
    %v1910 = vadd.f32 %v806, %v1909
    %v1911 = vpop.f32.mrb[0].mxu0
    %v1912 = vadd.f32 %v807, %v1911
    %1913 = vdwg.mxu0
    %v1914 = vmul.f32 %v1839, 0.5
    %v1915 = vtanh.pop %v1914
    %v1916 = vadd.f32 %v1915, 1.0
    %v1917 = vmul.f32 %v1916, 0.5
    %v1918 = vmul.f32 %v1841, 0.5
    %v1919 = vtanh.pop %v1918
    %v1920 = vadd.f32 %v1919, 1.0
    %v1921 = vmul.f32 %v1920, 0.5
    %v1922 = vtanh.pop %v1910
    %v1923 = vmul.f32 %v1912, 0.5
    %v1924 = vtanh.pop %v1923
    %v1925 = vadd.f32 %v1924, 1.0
    %v1926 = vmul.f32 %v1925, 0.5
    %v1927 = vmul.f32 %v1921, %v1447
    %v1928 = vmul.f32 %v1917, %v1922
    %v1929 = vadd.f32 %v1927, %v1928
    %v1930 = vtanh.pop %v1929
    %v1931 = vmul.f32 %v1926, %v1930
    %s1932 = scalar_lea.vmem [#allocation2], 24
    %v1933 = vld [vmem:[%s1932] sm:$0xff]
    %1934 = vmatprep.subr.mxu0 %v89
    %1935 = vmatpush1.msra.mxu0 %v88
    %1936 = vmatprep.subr.mxu0 %v93
    %1937 = vmatpush1.msra.mxu0 %v92
    %1938 = vmatprep.subr.mxu0 %v97
    %1939 = vmatpush1.msra.mxu0 %v96
    %1940 = vmatprep.subr.mxu0 %v101
    %1941 = vmatpush1.msra.mxu0 %v100
    %1942 = vmatprep.subr.mxu0 %v105
    %1943 = vmatpush1.msra.mxu0 %v104
    %1944 = vmatprep.subr.mxu0 %v109
    %1945 = vmatpush1.msra.mxu0 %v108
    %1946 = vmatprep.subr.mxu0 %v113
    %1947 = vmatpush1.msra.mxu0 %v112
    %1948 = vmatprep.subr.mxu0 %v117
    %1949 = vmatpush1.msra.mxu0 %v116
    %1950 = vmatprep.subr.mxu0 %v121
    %1951 = vmatpush1.msra.mxu0 %v120
    %1952 = vmatprep.subr.mxu0 %v125
    %1953 = vmatpush1.msra.mxu0 %v124
    %1954 = vmatprep.subr.mxu0 %v129
    %1955 = vmatpush1.msra.mxu0 %v128
    %1956 = vmatprep.subr.mxu0 %v133
    %1957 = vmatpush1.msra.mxu0 %v132
    %1958 = vmatprep.subr.mxu0 %v137
    %1959 = vmatpush1.msra.mxu0 %v136
    %1960 = vmatprep.subr.mxu0 %v141
    %1961 = vmatpush1.msra.mxu0 %v140
    %1962 = vmatprep.subr.mxu0 %v145
    %1963 = vmatpush1.msra.mxu0 %v144
    %1964 = vmatprep.subr.mxu0 %v149
    %1965 = vmatpush1.msra.mxu0 %v148
    %1966 = vmatprep.subr.mxu0 %v153
    %1967 = vmatpush1.msra.mxu0 %v152
    %1968 = vmatprep.subr.mxu0 %v157
    %1969 = vmatpush1.msra.mxu0 %v156
    %1970 = vmatprep.subr.mxu0 %v161
    %1971 = vmatpush1.msra.mxu0 %v160
    %1972 = vmatprep.subr.mxu0 %v165
    %1973 = vmatpush1.msra.mxu0 %v164
    %1974 = vmatprep.subr.mxu0 %v169
    %1975 = vmatpush1.msra.mxu0 %v168
    %1976 = vmatprep.subr.mxu0 %v173
    %1977 = vmatpush1.msra.mxu0 %v172
    %1978 = vmatprep.subr.mxu0 %v177
    %1979 = vmatpush1.msra.mxu0 %v176
    %1980 = vmatprep.subr.mxu0 %v181
    %1981 = vmatpush1.msra.mxu0 %v180
    %1982 = vmatprep.subr.mxu0 %v185
    %1983 = vmatpush1.msra.mxu0 %v184
    %1984 = vmatprep.subr.mxu0 %v189
    %1985 = vmatpush1.msra.mxu0 %v188
    %1986 = vmatprep.subr.mxu0 %v193
    %1987 = vmatpush1.msra.mxu0 %v192
    %1988 = vmatprep.subr.mxu0 %v197
    %1989 = vmatpush1.msra.mxu0 %v196
    %1990 = vmatprep.subr.mxu0 %v201
    %1991 = vmatpush1.msra.mxu0 %v200
    %1992 = vmatprep.subr.mxu0 %v205
    %1993 = vmatpush1.msra.mxu0 %v204
    %1994 = vmatprep.subr.mxu0 %v209
    %1995 = vmatpush1.msra.mxu0 %v208
    %1996 = vmatprep.subr.mxu0 %v213
    %1997 = vmatpush1.msra.mxu0 %v212
    %1998 = vmatprep.mubr.f32.mxu0 %v1611
    %1999 = vmatmul.mubr.f32.gmra.mrb[0].mxu0 %v1933
    %v2000 = vpop.f32.mrb[0].mxu0
    %v2001 = vadd.f32 %v216, %v2000
    %v2002 = vpop.f32.mrb[0].mxu0
    %v2003 = vadd.f32 %v217, %v2002
    %2004 = vdwg.mxu0
    %2005 = vmatprep.subr.mxu0 %v91
    %2006 = vmatpush1.msra.mxu0 %v90
    %2007 = vmatprep.subr.mxu0 %v95
    %2008 = vmatpush1.msra.mxu0 %v94
    %2009 = vmatprep.subr.mxu0 %v99
    %2010 = vmatpush1.msra.mxu0 %v98
    %2011 = vmatprep.subr.mxu0 %v103
    %2012 = vmatpush1.msra.mxu0 %v102
    %2013 = vmatprep.subr.mxu0 %v107
    %2014 = vmatpush1.msra.mxu0 %v106
    %2015 = vmatprep.subr.mxu0 %v111
    %2016 = vmatpush1.msra.mxu0 %v110
    %2017 = vmatprep.subr.mxu0 %v115
    %2018 = vmatpush1.msra.mxu0 %v114
    %2019 = vmatprep.subr.mxu0 %v119
    %2020 = vmatpush1.msra.mxu0 %v118
    %2021 = vmatprep.subr.mxu0 %v123
    %2022 = vmatpush1.msra.mxu0 %v122
    %2023 = vmatprep.subr.mxu0 %v127
    %2024 = vmatpush1.msra.mxu0 %v126
    %2025 = vmatprep.subr.mxu0 %v131
    %2026 = vmatpush1.msra.mxu0 %v130
    %2027 = vmatprep.subr.mxu0 %v135
    %2028 = vmatpush1.msra.mxu0 %v134
    %2029 = vmatprep.subr.mxu0 %v139
    %2030 = vmatpush1.msra.mxu0 %v138
    %2031 = vmatprep.subr.mxu0 %v143
    %2032 = vmatpush1.msra.mxu0 %v142
    %2033 = vmatprep.subr.mxu0 %v147
    %2034 = vmatpush1.msra.mxu0 %v146
    %2035 = vmatprep.subr.mxu0 %v151
    %2036 = vmatpush1.msra.mxu0 %v150
    %2037 = vmatprep.subr.mxu0 %v155
    %2038 = vmatpush1.msra.mxu0 %v154
    %2039 = vmatprep.subr.mxu0 %v159
    %2040 = vmatpush1.msra.mxu0 %v158
    %2041 = vmatprep.subr.mxu0 %v163
    %2042 = vmatpush1.msra.mxu0 %v162
    %2043 = vmatprep.subr.mxu0 %v167
    %2044 = vmatpush1.msra.mxu0 %v166
    %2045 = vmatprep.subr.mxu0 %v171
    %2046 = vmatpush1.msra.mxu0 %v170
    %2047 = vmatprep.subr.mxu0 %v175
    %2048 = vmatpush1.msra.mxu0 %v174
    %2049 = vmatprep.subr.mxu0 %v179
    %2050 = vmatpush1.msra.mxu0 %v178
    %2051 = vmatprep.subr.mxu0 %v183
    %2052 = vmatpush1.msra.mxu0 %v182
    %2053 = vmatprep.subr.mxu0 %v187
    %2054 = vmatpush1.msra.mxu0 %v186
    %2055 = vmatprep.subr.mxu0 %v191
    %2056 = vmatpush1.msra.mxu0 %v190
    %2057 = vmatprep.subr.mxu0 %v195
    %2058 = vmatpush1.msra.mxu0 %v194
    %2059 = vmatprep.subr.mxu0 %v199
    %2060 = vmatpush1.msra.mxu0 %v198
    %2061 = vmatprep.subr.mxu0 %v203
    %2062 = vmatpush1.msra.mxu0 %v202
    %2063 = vmatprep.subr.mxu0 %v207
    %2064 = vmatpush1.msra.mxu0 %v206
    %2065 = vmatprep.subr.mxu0 %v211
    %2066 = vmatpush1.msra.mxu0 %v210
    %2067 = vmatprep.subr.mxu0 %v215
    %2068 = vmatpush1.msra.mxu0 %v214
    %2069 = vmatprep.mubr.f32.mxu0 %v1611
    %2070 = vmatmul.mubr.f32.gmra.mrb[0].mxu0 %v1933
    %v2071 = vpop.f32.mrb[0].mxu0
    %v2072 = vadd.f32 %v218, %v2071
    %v2073 = vpop.f32.mrb[0].mxu0
    %v2074 = vadd.f32 %v219, %v2073
    %2075 = vdwg.mxu0
    %v2076 = vmul.f32 %v2001, 0.5
    %v2077 = vtanh.pop %v2076
    %v2078 = vadd.f32 %v2077, 1.0
    %v2079 = vmul.f32 %v2078, 0.5
    %v2080 = vmul.f32 %v2003, 0.5
    %v2081 = vtanh.pop %v2080
    %v2082 = vadd.f32 %v2081, 1.0
    %v2083 = vmul.f32 %v2082, 0.5
    %v2084 = vtanh.pop %v2072
    %v2085 = vmul.f32 %v2074, 0.5
    %v2086 = vtanh.pop %v2085
    %v2087 = vadd.f32 %v2086, 1.0
    %v2088 = vmul.f32 %v2087, 0.5
    %v2089 = vmul.f32 %v2083, %v1609
    %v2090 = vmul.f32 %v2079, %v2084
    %v2091 = vadd.f32 %v2089, %v2090
    %v2092 = vtanh.pop %v2091
    %v2093 = vmul.f32 %v2088, %v2092
    %2094 = vmatprep.subr.mxu0 %v382
    %2095 = vmatpush1.msra.mxu0 %v381
    %2096 = vmatprep.subr.mxu0 %v386
    %2097 = vmatpush1.msra.mxu0 %v385
    %2098 = vmatprep.subr.mxu0 %v390
    %2099 = vmatpush1.msra.mxu0 %v389
    %2100 = vmatprep.subr.mxu0 %v394
    %2101 = vmatpush1.msra.mxu0 %v393
    %2102 = vmatprep.subr.mxu0 %v398
    %2103 = vmatpush1.msra.mxu0 %v397
    %2104 = vmatprep.subr.mxu0 %v402
    %2105 = vmatpush1.msra.mxu0 %v401
    %2106 = vmatprep.subr.mxu0 %v406
    %2107 = vmatpush1.msra.mxu0 %v405
    %2108 = vmatprep.subr.mxu0 %v410
    %2109 = vmatpush1.msra.mxu0 %v409
    %2110 = vmatprep.subr.mxu0 %v414
    %2111 = vmatpush1.msra.mxu0 %v413
    %2112 = vmatprep.subr.mxu0 %v418
    %2113 = vmatpush1.msra.mxu0 %v417
    %2114 = vmatprep.subr.mxu0 %v422
    %2115 = vmatpush1.msra.mxu0 %v421
    %2116 = vmatprep.subr.mxu0 %v426
    %2117 = vmatpush1.msra.mxu0 %v425
    %2118 = vmatprep.subr.mxu0 %v430
    %2119 = vmatpush1.msra.mxu0 %v429
    %2120 = vmatprep.subr.mxu0 %v434
    %2121 = vmatpush1.msra.mxu0 %v433
    %2122 = vmatprep.subr.mxu0 %v438
    %2123 = vmatpush1.msra.mxu0 %v437
    %2124 = vmatprep.subr.mxu0 %v442
    %2125 = vmatpush1.msra.mxu0 %v441
    %2126 = vmatprep.subr.mxu0 %v446
    %2127 = vmatpush1.msra.mxu0 %v445
    %2128 = vmatprep.subr.mxu0 %v450
    %2129 = vmatpush1.msra.mxu0 %v449
    %2130 = vmatprep.subr.mxu0 %v454
    %2131 = vmatpush1.msra.mxu0 %v453
    %2132 = vmatprep.subr.mxu0 %v458
    %2133 = vmatpush1.msra.mxu0 %v457
    %2134 = vmatprep.subr.mxu0 %v462
    %2135 = vmatpush1.msra.mxu0 %v461
    %2136 = vmatprep.subr.mxu0 %v466
    %2137 = vmatpush1.msra.mxu0 %v465
    %2138 = vmatprep.subr.mxu0 %v470
    %2139 = vmatpush1.msra.mxu0 %v469
    %2140 = vmatprep.subr.mxu0 %v474
    %2141 = vmatpush1.msra.mxu0 %v473
    %2142 = vmatprep.subr.mxu0 %v478
    %2143 = vmatpush1.msra.mxu0 %v477
    %2144 = vmatprep.subr.mxu0 %v482
    %2145 = vmatpush1.msra.mxu0 %v481
    %2146 = vmatprep.subr.mxu0 %v486
    %2147 = vmatpush1.msra.mxu0 %v485
    %2148 = vmatprep.subr.mxu0 %v490
    %2149 = vmatpush1.msra.mxu0 %v489
    %2150 = vmatprep.subr.mxu0 %v494
    %2151 = vmatpush1.msra.mxu0 %v493
    %2152 = vmatprep.subr.mxu0 %v498
    %2153 = vmatpush1.msra.mxu0 %v497
    %2154 = vmatprep.subr.mxu0 %v502
    %2155 = vmatpush1.msra.mxu0 %v501
    %2156 = vmatprep.subr.mxu0 %v506
    %2157 = vmatpush1.msra.mxu0 %v505
    %2158 = vmatprep.mubr.f32.mxu0 %v1771
    %2159 = vmatmul.mubr.f32.gmra.mrb[0].mxu0 %v2093
    %v2160 = vpop.f32.mrb[0].mxu0
    %v2161 = vadd.f32 %v510, %v2160
    %v2162 = vpop.f32.mrb[0].mxu0
    %v2163 = vadd.f32 %v511, %v2162
    %2164 = vdwg.mxu0
    %2165 = vmatprep.subr.mxu0 %v384
    %2166 = vmatpush1.msra.mxu0 %v383
    %2167 = vmatprep.subr.mxu0 %v388
    %2168 = vmatpush1.msra.mxu0 %v387
    %2169 = vmatprep.subr.mxu0 %v392
    %2170 = vmatpush1.msra.mxu0 %v391
    %2171 = vmatprep.subr.mxu0 %v396
    %2172 = vmatpush1.msra.mxu0 %v395
    %2173 = vmatprep.subr.mxu0 %v400
    %2174 = vmatpush1.msra.mxu0 %v399
    %2175 = vmatprep.subr.mxu0 %v404
    %2176 = vmatpush1.msra.mxu0 %v403
    %2177 = vmatprep.subr.mxu0 %v408
    %2178 = vmatpush1.msra.mxu0 %v407
    %2179 = vmatprep.subr.mxu0 %v412
    %2180 = vmatpush1.msra.mxu0 %v411
    %2181 = vmatprep.subr.mxu0 %v416
    %2182 = vmatpush1.msra.mxu0 %v415
    %2183 = vmatprep.subr.mxu0 %v420
    %2184 = vmatpush1.msra.mxu0 %v419
    %2185 = vmatprep.subr.mxu0 %v424
    %2186 = vmatpush1.msra.mxu0 %v423
    %2187 = vmatprep.subr.mxu0 %v428
    %2188 = vmatpush1.msra.mxu0 %v427
    %2189 = vmatprep.subr.mxu0 %v432
    %2190 = vmatpush1.msra.mxu0 %v431
    %2191 = vmatprep.subr.mxu0 %v436
    %2192 = vmatpush1.msra.mxu0 %v435
    %2193 = vmatprep.subr.mxu0 %v440
    %2194 = vmatpush1.msra.mxu0 %v439
    %2195 = vmatprep.subr.mxu0 %v444
    %2196 = vmatpush1.msra.mxu0 %v443
    %2197 = vmatprep.subr.mxu0 %v448
    %2198 = vmatpush1.msra.mxu0 %v447
    %2199 = vmatprep.subr.mxu0 %v452
    %2200 = vmatpush1.msra.mxu0 %v451
    %2201 = vmatprep.subr.mxu0 %v456
    %2202 = vmatpush1.msra.mxu0 %v455
    %2203 = vmatprep.subr.mxu0 %v460
    %2204 = vmatpush1.msra.mxu0 %v459
    %2205 = vmatprep.subr.mxu0 %v464
    %2206 = vmatpush1.msra.mxu0 %v463
    %2207 = vmatprep.subr.mxu0 %v468
    %2208 = vmatpush1.msra.mxu0 %v467
    %2209 = vmatprep.subr.mxu0 %v472
    %2210 = vmatpush1.msra.mxu0 %v471
    %2211 = vmatprep.subr.mxu0 %v476
    %2212 = vmatpush1.msra.mxu0 %v475
    %2213 = vmatprep.subr.mxu0 %v480
    %2214 = vmatpush1.msra.mxu0 %v479
    %2215 = vmatprep.subr.mxu0 %v484
    %2216 = vmatpush1.msra.mxu0 %v483
    %2217 = vmatprep.subr.mxu0 %v488
    %2218 = vmatpush1.msra.mxu0 %v487
    %2219 = vmatprep.subr.mxu0 %v492
    %2220 = vmatpush1.msra.mxu0 %v491
    %2221 = vmatprep.subr.mxu0 %v496
    %2222 = vmatpush1.msra.mxu0 %v495
    %2223 = vmatprep.subr.mxu0 %v500
    %2224 = vmatpush1.msra.mxu0 %v499
    %2225 = vmatprep.subr.mxu0 %v504
    %2226 = vmatpush1.msra.mxu0 %v503
    %2227 = vmatprep.subr.mxu0 %v508
    %2228 = vmatpush1.msra.mxu0 %v507
    %2229 = vmatprep.mubr.f32.mxu0 %v1771
    %2230 = vmatmul.mubr.f32.gmra.mrb[0].mxu0 %v2093
    %v2231 = vpop.f32.mrb[0].mxu0
    %v2232 = vadd.f32 %v512, %v2231
    %v2233 = vpop.f32.mrb[0].mxu0
    %v2234 = vadd.f32 %v513, %v2233
    %2235 = vdwg.mxu0
    %v2236 = vmul.f32 %v2161, 0.5
    %v2237 = vtanh.pop %v2236
    %v2238 = vadd.f32 %v2237, 1.0
    %v2239 = vmul.f32 %v2238, 0.5
    %v2240 = vmul.f32 %v2163, 0.5
    %v2241 = vtanh.pop %v2240
    %v2242 = vadd.f32 %v2241, 1.0
    %v2243 = vmul.f32 %v2242, 0.5
    %v2244 = vtanh.pop %v2232
    %v2245 = vmul.f32 %v2234, 0.5
    %v2246 = vtanh.pop %v2245
    %v2247 = vadd.f32 %v2246, 1.0
    %v2248 = vmul.f32 %v2247, 0.5
    %v2249 = vmul.f32 %v2243, %v1769
    %v2250 = vmul.f32 %v2239, %v2244
    %v2251 = vadd.f32 %v2249, %v2250
    %v2252 = vtanh.pop %v2251
    %v2253 = vmul.f32 %v2248, %v2252
    %2254 = vmatprep.subr.mxu0 %v676
    %2255 = vmatpush1.msra.mxu0 %v675
    %2256 = vmatprep.subr.mxu0 %v680
    %2257 = vmatpush1.msra.mxu0 %v679
    %2258 = vmatprep.subr.mxu0 %v684
    %2259 = vmatpush1.msra.mxu0 %v683
    %2260 = vmatprep.subr.mxu0 %v688
    %2261 = vmatpush1.msra.mxu0 %v687
    %2262 = vmatprep.subr.mxu0 %v692
    %2263 = vmatpush1.msra.mxu0 %v691
    %2264 = vmatprep.subr.mxu0 %v696
    %2265 = vmatpush1.msra.mxu0 %v695
    %2266 = vmatprep.subr.mxu0 %v700
    %2267 = vmatpush1.msra.mxu0 %v699
    %2268 = vmatprep.subr.mxu0 %v704
    %2269 = vmatpush1.msra.mxu0 %v703
    %2270 = vmatprep.subr.mxu0 %v708
    %2271 = vmatpush1.msra.mxu0 %v707
    %2272 = vmatprep.subr.mxu0 %v712
    %2273 = vmatpush1.msra.mxu0 %v711
    %2274 = vmatprep.subr.mxu0 %v716
    %2275 = vmatpush1.msra.mxu0 %v715
    %2276 = vmatprep.subr.mxu0 %v720
    %2277 = vmatpush1.msra.mxu0 %v719
    %2278 = vmatprep.subr.mxu0 %v724
    %2279 = vmatpush1.msra.mxu0 %v723
    %2280 = vmatprep.subr.mxu0 %v728
    %2281 = vmatpush1.msra.mxu0 %v727
    %2282 = vmatprep.subr.mxu0 %v732
    %2283 = vmatpush1.msra.mxu0 %v731
    %2284 = vmatprep.subr.mxu0 %v736
    %2285 = vmatpush1.msra.mxu0 %v735
    %2286 = vmatprep.subr.mxu0 %v740
    %2287 = vmatpush1.msra.mxu0 %v739
    %2288 = vmatprep.subr.mxu0 %v744
    %2289 = vmatpush1.msra.mxu0 %v743
    %2290 = vmatprep.subr.mxu0 %v748
    %2291 = vmatpush1.msra.mxu0 %v747
    %2292 = vmatprep.subr.mxu0 %v752
    %2293 = vmatpush1.msra.mxu0 %v751
    %2294 = vmatprep.subr.mxu0 %v756
    %2295 = vmatpush1.msra.mxu0 %v755
    %2296 = vmatprep.subr.mxu0 %v760
    %2297 = vmatpush1.msra.mxu0 %v759
    %2298 = vmatprep.subr.mxu0 %v764
    %2299 = vmatpush1.msra.mxu0 %v763
    %2300 = vmatprep.subr.mxu0 %v768
    %2301 = vmatpush1.msra.mxu0 %v767
    %2302 = vmatprep.subr.mxu0 %v772
    %2303 = vmatpush1.msra.mxu0 %v771
    %2304 = vmatprep.subr.mxu0 %v776
    %2305 = vmatpush1.msra.mxu0 %v775
    %2306 = vmatprep.subr.mxu0 %v780
    %2307 = vmatpush1.msra.mxu0 %v779
    %2308 = vmatprep.subr.mxu0 %v784
    %2309 = vmatpush1.msra.mxu0 %v783
    %2310 = vmatprep.subr.mxu0 %v788
    %2311 = vmatpush1.msra.mxu0 %v787
    %2312 = vmatprep.subr.mxu0 %v792
    %2313 = vmatpush1.msra.mxu0 %v791
    %2314 = vmatprep.subr.mxu0 %v796
    %2315 = vmatpush1.msra.mxu0 %v795
    %2316 = vmatprep.subr.mxu0 %v800
    %2317 = vmatpush1.msra.mxu0 %v799
    %2318 = vmatprep.mubr.f32.mxu0 %v1931
    %2319 = vmatmul.mubr.f32.gmra.mrb[0].mxu0 %v2253
    %v2320 = vpop.f32.mrb[0].mxu0
    %v2321 = vadd.f32 %v804, %v2320
    %v2322 = vpop.f32.mrb[0].mxu0
    %v2323 = vadd.f32 %v805, %v2322
    %2324 = vdwg.mxu0
    %2325 = vmatprep.subr.mxu0 %v678
    %2326 = vmatpush1.msra.mxu0 %v677
    %2327 = vmatprep.subr.mxu0 %v682
    %2328 = vmatpush1.msra.mxu0 %v681
    %2329 = vmatprep.subr.mxu0 %v686
    %2330 = vmatpush1.msra.mxu0 %v685
    %2331 = vmatprep.subr.mxu0 %v690
    %2332 = vmatpush1.msra.mxu0 %v689
    %2333 = vmatprep.subr.mxu0 %v694
    %2334 = vmatpush1.msra.mxu0 %v693
    %2335 = vmatprep.subr.mxu0 %v698
    %2336 = vmatpush1.msra.mxu0 %v697
    %2337 = vmatprep.subr.mxu0 %v702
    %2338 = vmatpush1.msra.mxu0 %v701
    %2339 = vmatprep.subr.mxu0 %v706
    %2340 = vmatpush1.msra.mxu0 %v705
    %2341 = vmatprep.subr.mxu0 %v710
    %2342 = vmatpush1.msra.mxu0 %v709
    %2343 = vmatprep.subr.mxu0 %v714
    %2344 = vmatpush1.msra.mxu0 %v713
    %2345 = vmatprep.subr.mxu0 %v718
    %2346 = vmatpush1.msra.mxu0 %v717
    %2347 = vmatprep.subr.mxu0 %v722
    %2348 = vmatpush1.msra.mxu0 %v721
    %2349 = vmatprep.subr.mxu0 %v726
    %2350 = vmatpush1.msra.mxu0 %v725
    %2351 = vmatprep.subr.mxu0 %v730
    %2352 = vmatpush1.msra.mxu0 %v729
    %2353 = vmatprep.subr.mxu0 %v734
    %2354 = vmatpush1.msra.mxu0 %v733
    %2355 = vmatprep.subr.mxu0 %v738
    %2356 = vmatpush1.msra.mxu0 %v737
    %2357 = vmatprep.subr.mxu0 %v742
    %2358 = vmatpush1.msra.mxu0 %v741
    %2359 = vmatprep.subr.mxu0 %v746
    %2360 = vmatpush1.msra.mxu0 %v745
    %2361 = vmatprep.subr.mxu0 %v750
    %2362 = vmatpush1.msra.mxu0 %v749
    %2363 = vmatprep.subr.mxu0 %v754
    %2364 = vmatpush1.msra.mxu0 %v753
    %2365 = vmatprep.subr.mxu0 %v758
    %2366 = vmatpush1.msra.mxu0 %v757
    %2367 = vmatprep.subr.mxu0 %v762
    %2368 = vmatpush1.msra.mxu0 %v761
    %2369 = vmatprep.subr.mxu0 %v766
    %2370 = vmatpush1.msra.mxu0 %v765
    %2371 = vmatprep.subr.mxu0 %v770
    %2372 = vmatpush1.msra.mxu0 %v769
    %2373 = vmatprep.subr.mxu0 %v774
    %2374 = vmatpush1.msra.mxu0 %v773
    %2375 = vmatprep.subr.mxu0 %v778
    %2376 = vmatpush1.msra.mxu0 %v777
    %2377 = vmatprep.subr.mxu0 %v782
    %2378 = vmatpush1.msra.mxu0 %v781
    %2379 = vmatprep.subr.mxu0 %v786
    %2380 = vmatpush1.msra.mxu0 %v785
    %2381 = vmatprep.subr.mxu0 %v790
    %2382 = vmatpush1.msra.mxu0 %v789
    %2383 = vmatprep.subr.mxu0 %v794
    %2384 = vmatpush1.msra.mxu0 %v793
    %2385 = vmatprep.subr.mxu0 %v798
    %2386 = vmatpush1.msra.mxu0 %v797
    %2387 = vmatprep.subr.mxu0 %v802
    %2388 = vmatpush1.msra.mxu0 %v801
    %2389 = vmatprep.mubr.f32.mxu0 %v1931
    %2390 = vmatmul.mubr.f32.gmra.mrb[0].mxu0 %v2253
    %v2391 = vpop.f32.mrb[0].mxu0
    %v2392 = vadd.f32 %v806, %v2391
    %v2393 = vpop.f32.mrb[0].mxu0
    %v2394 = vadd.f32 %v807, %v2393
    %2395 = vdwg.mxu0
    %v2396 = vmul.f32 %v2321, 0.5
    %v2397 = vtanh.pop %v2396
    %v2398 = vadd.f32 %v2397, 1.0
    %v2399 = vmul.f32 %v2398, 0.5
    %v2400 = vmul.f32 %v2323, 0.5
    %v2401 = vtanh.pop %v2400
    %v2402 = vadd.f32 %v2401, 1.0
    %v2403 = vmul.f32 %v2402, 0.5
    %v2404 = vtanh.pop %v2392
    %v2405 = vmul.f32 %v2394, 0.5
    %v2406 = vtanh.pop %v2405
    %v2407 = vadd.f32 %v2406, 1.0
    %v2408 = vmul.f32 %v2407, 0.5
    %v2409 = vmul.f32 %v2403, %v1929
    %v2410 = vmul.f32 %v2399, %v2404
    %v2411 = vadd.f32 %v2409, %v2410
    %v2412 = vtanh.pop %v2411
    %v2413 = vmul.f32 %v2408, %v2412
    %s2414 = scalar_lea.vmem [#allocation2], 32
    %v2415 = vld [vmem:[%s2414] sm:$0xff]
    %2416 = vmatprep.subr.mxu0 %v89
    %2417 = vmatpush1.msra.mxu0 %v88
    %2418 = vmatprep.subr.mxu0 %v93
    %2419 = vmatpush1.msra.mxu0 %v92
    %2420 = vmatprep.subr.mxu0 %v97
    %2421 = vmatpush1.msra.mxu0 %v96
    %2422 = vmatprep.subr.mxu0 %v101
    %2423 = vmatpush1.msra.mxu0 %v100
    %2424 = vmatprep.subr.mxu0 %v105
    %2425 = vmatpush1.msra.mxu0 %v104
    %2426 = vmatprep.subr.mxu0 %v109
    %2427 = vmatpush1.msra.mxu0 %v108
    %2428 = vmatprep.subr.mxu0 %v113
    %2429 = vmatpush1.msra.mxu0 %v112
    %2430 = vmatprep.subr.mxu0 %v117
    %2431 = vmatpush1.msra.mxu0 %v116
    %2432 = vmatprep.subr.mxu0 %v121
    %2433 = vmatpush1.msra.mxu0 %v120
    %2434 = vmatprep.subr.mxu0 %v125
    %2435 = vmatpush1.msra.mxu0 %v124
    %2436 = vmatprep.subr.mxu0 %v129
    %2437 = vmatpush1.msra.mxu0 %v128
    %2438 = vmatprep.subr.mxu0 %v133
    %2439 = vmatpush1.msra.mxu0 %v132
    %2440 = vmatprep.subr.mxu0 %v137
    %2441 = vmatpush1.msra.mxu0 %v136
    %2442 = vmatprep.subr.mxu0 %v141
    %2443 = vmatpush1.msra.mxu0 %v140
    %2444 = vmatprep.subr.mxu0 %v145
    %2445 = vmatpush1.msra.mxu0 %v144
    %2446 = vmatprep.subr.mxu0 %v149
    %2447 = vmatpush1.msra.mxu0 %v148
    %2448 = vmatprep.subr.mxu0 %v153
    %2449 = vmatpush1.msra.mxu0 %v152
    %2450 = vmatprep.subr.mxu0 %v157
    %2451 = vmatpush1.msra.mxu0 %v156
    %2452 = vmatprep.subr.mxu0 %v161
    %2453 = vmatpush1.msra.mxu0 %v160
    %2454 = vmatprep.subr.mxu0 %v165
    %2455 = vmatpush1.msra.mxu0 %v164
    %2456 = vmatprep.subr.mxu0 %v169
    %2457 = vmatpush1.msra.mxu0 %v168
    %2458 = vmatprep.subr.mxu0 %v173
    %2459 = vmatpush1.msra.mxu0 %v172
    %2460 = vmatprep.subr.mxu0 %v177
    %2461 = vmatpush1.msra.mxu0 %v176
    %2462 = vmatprep.subr.mxu0 %v181
    %2463 = vmatpush1.msra.mxu0 %v180
    %2464 = vmatprep.subr.mxu0 %v185
    %2465 = vmatpush1.msra.mxu0 %v184
    %2466 = vmatprep.subr.mxu0 %v189
    %2467 = vmatpush1.msra.mxu0 %v188
    %2468 = vmatprep.subr.mxu0 %v193
    %2469 = vmatpush1.msra.mxu0 %v192
    %2470 = vmatprep.subr.mxu0 %v197
    %2471 = vmatpush1.msra.mxu0 %v196
    %2472 = vmatprep.subr.mxu0 %v201
    %2473 = vmatpush1.msra.mxu0 %v200
    %2474 = vmatprep.subr.mxu0 %v205
    %2475 = vmatpush1.msra.mxu0 %v204
    %2476 = vmatprep.subr.mxu0 %v209
    %2477 = vmatpush1.msra.mxu0 %v208
    %2478 = vmatprep.subr.mxu0 %v213
    %2479 = vmatpush1.msra.mxu0 %v212
    %2480 = vmatprep.mubr.f32.mxu0 %v2093
    %2481 = vmatmul.mubr.f32.gmra.mrb[0].mxu0 %v2415
    %v2482 = vpop.f32.mrb[0].mxu0
    %v2483 = vadd.f32 %v216, %v2482
    %v2484 = vpop.f32.mrb[0].mxu0
    %v2485 = vadd.f32 %v217, %v2484
    %2486 = vdwg.mxu0
    %2487 = vmatprep.subr.mxu0 %v91
    %2488 = vmatpush1.msra.mxu0 %v90
    %2489 = vmatprep.subr.mxu0 %v95
    %2490 = vmatpush1.msra.mxu0 %v94
    %2491 = vmatprep.subr.mxu0 %v99
    %2492 = vmatpush1.msra.mxu0 %v98
    %2493 = vmatprep.subr.mxu0 %v103
    %2494 = vmatpush1.msra.mxu0 %v102
    %2495 = vmatprep.subr.mxu0 %v107
    %2496 = vmatpush1.msra.mxu0 %v106
    %2497 = vmatprep.subr.mxu0 %v111
    %2498 = vmatpush1.msra.mxu0 %v110
    %2499 = vmatprep.subr.mxu0 %v115
    %2500 = vmatpush1.msra.mxu0 %v114
    %2501 = vmatprep.subr.mxu0 %v119
    %2502 = vmatpush1.msra.mxu0 %v118
    %2503 = vmatprep.subr.mxu0 %v123
    %2504 = vmatpush1.msra.mxu0 %v122
    %2505 = vmatprep.subr.mxu0 %v127
    %2506 = vmatpush1.msra.mxu0 %v126
    %2507 = vmatprep.subr.mxu0 %v131
    %2508 = vmatpush1.msra.mxu0 %v130
    %2509 = vmatprep.subr.mxu0 %v135
    %2510 = vmatpush1.msra.mxu0 %v134
    %2511 = vmatprep.subr.mxu0 %v139
    %2512 = vmatpush1.msra.mxu0 %v138
    %2513 = vmatprep.subr.mxu0 %v143
    %2514 = vmatpush1.msra.mxu0 %v142
    %2515 = vmatprep.subr.mxu0 %v147
    %2516 = vmatpush1.msra.mxu0 %v146
    %2517 = vmatprep.subr.mxu0 %v151
    %2518 = vmatpush1.msra.mxu0 %v150
    %2519 = vmatprep.subr.mxu0 %v155
    %2520 = vmatpush1.msra.mxu0 %v154
    %2521 = vmatprep.subr.mxu0 %v159
    %2522 = vmatpush1.msra.mxu0 %v158
    %2523 = vmatprep.subr.mxu0 %v163
    %2524 = vmatpush1.msra.mxu0 %v162
    %2525 = vmatprep.subr.mxu0 %v167
    %2526 = vmatpush1.msra.mxu0 %v166
    %2527 = vmatprep.subr.mxu0 %v171
    %2528 = vmatpush1.msra.mxu0 %v170
    %2529 = vmatprep.subr.mxu0 %v175
    %2530 = vmatpush1.msra.mxu0 %v174
    %2531 = vmatprep.subr.mxu0 %v179
    %2532 = vmatpush1.msra.mxu0 %v178
    %2533 = vmatprep.subr.mxu0 %v183
    %2534 = vmatpush1.msra.mxu0 %v182
    %2535 = vmatprep.subr.mxu0 %v187
    %2536 = vmatpush1.msra.mxu0 %v186
    %2537 = vmatprep.subr.mxu0 %v191
    %2538 = vmatpush1.msra.mxu0 %v190
    %2539 = vmatprep.subr.mxu0 %v195
    %2540 = vmatpush1.msra.mxu0 %v194
    %2541 = vmatprep.subr.mxu0 %v199
    %2542 = vmatpush1.msra.mxu0 %v198
    %2543 = vmatprep.subr.mxu0 %v203
    %2544 = vmatpush1.msra.mxu0 %v202
    %2545 = vmatprep.subr.mxu0 %v207
    %2546 = vmatpush1.msra.mxu0 %v206
    %2547 = vmatprep.subr.mxu0 %v211
    %2548 = vmatpush1.msra.mxu0 %v210
    %2549 = vmatprep.subr.mxu0 %v215
    %2550 = vmatpush1.msra.mxu0 %v214
    %2551 = vmatprep.mubr.f32.mxu0 %v2093
    %2552 = vmatmul.mubr.f32.gmra.mrb[0].mxu0 %v2415
    %v2553 = vpop.f32.mrb[0].mxu0
    %v2554 = vadd.f32 %v218, %v2553
    %v2555 = vpop.f32.mrb[0].mxu0
    %v2556 = vadd.f32 %v219, %v2555
    %2557 = vdwg.mxu0
    %v2558 = vmul.f32 %v2483, 0.5
    %v2559 = vtanh.pop %v2558
    %v2560 = vadd.f32 %v2559, 1.0
    %v2561 = vmul.f32 %v2560, 0.5
    %v2562 = vmul.f32 %v2485, 0.5
    %v2563 = vtanh.pop %v2562
    %v2564 = vadd.f32 %v2563, 1.0
    %v2565 = vmul.f32 %v2564, 0.5
    %v2566 = vtanh.pop %v2554
    %v2567 = vmul.f32 %v2556, 0.5
    %v2568 = vtanh.pop %v2567
    %v2569 = vadd.f32 %v2568, 1.0
    %v2570 = vmul.f32 %v2569, 0.5
    %v2571 = vmul.f32 %v2565, %v2091
    %v2572 = vmul.f32 %v2561, %v2566
    %v2573 = vadd.f32 %v2571, %v2572
    %v2574 = vtanh.pop %v2573
    %v2575 = vmul.f32 %v2570, %v2574
    %2576 = vmatprep.subr.mxu0 %v382
    %2577 = vmatpush1.msra.mxu0 %v381
    %2578 = vmatprep.subr.mxu0 %v386
    %2579 = vmatpush1.msra.mxu0 %v385
    %2580 = vmatprep.subr.mxu0 %v390
    %2581 = vmatpush1.msra.mxu0 %v389
    %2582 = vmatprep.subr.mxu0 %v394
    %2583 = vmatpush1.msra.mxu0 %v393
    %2584 = vmatprep.subr.mxu0 %v398
    %2585 = vmatpush1.msra.mxu0 %v397
    %2586 = vmatprep.subr.mxu0 %v402
    %2587 = vmatpush1.msra.mxu0 %v401
    %2588 = vmatprep.subr.mxu0 %v406
    %2589 = vmatpush1.msra.mxu0 %v405
    %2590 = vmatprep.subr.mxu0 %v410
    %2591 = vmatpush1.msra.mxu0 %v409
    %2592 = vmatprep.subr.mxu0 %v414
    %2593 = vmatpush1.msra.mxu0 %v413
    %2594 = vmatprep.subr.mxu0 %v418
    %2595 = vmatpush1.msra.mxu0 %v417
    %2596 = vmatprep.subr.mxu0 %v422
    %2597 = vmatpush1.msra.mxu0 %v421
    %2598 = vmatprep.subr.mxu0 %v426
    %2599 = vmatpush1.msra.mxu0 %v425
    %2600 = vmatprep.subr.mxu0 %v430
    %2601 = vmatpush1.msra.mxu0 %v429
    %2602 = vmatprep.subr.mxu0 %v434
    %2603 = vmatpush1.msra.mxu0 %v433
    %2604 = vmatprep.subr.mxu0 %v438
    %2605 = vmatpush1.msra.mxu0 %v437
    %2606 = vmatprep.subr.mxu0 %v442
    %2607 = vmatpush1.msra.mxu0 %v441
    %2608 = vmatprep.subr.mxu0 %v446
    %2609 = vmatpush1.msra.mxu0 %v445
    %2610 = vmatprep.subr.mxu0 %v450
    %2611 = vmatpush1.msra.mxu0 %v449
    %2612 = vmatprep.subr.mxu0 %v454
    %2613 = vmatpush1.msra.mxu0 %v453
    %2614 = vmatprep.subr.mxu0 %v458
    %2615 = vmatpush1.msra.mxu0 %v457
    %2616 = vmatprep.subr.mxu0 %v462
    %2617 = vmatpush1.msra.mxu0 %v461
    %2618 = vmatprep.subr.mxu0 %v466
    %2619 = vmatpush1.msra.mxu0 %v465
    %2620 = vmatprep.subr.mxu0 %v470
    %2621 = vmatpush1.msra.mxu0 %v469
    %2622 = vmatprep.subr.mxu0 %v474
    %2623 = vmatpush1.msra.mxu0 %v473
    %2624 = vmatprep.subr.mxu0 %v478
    %2625 = vmatpush1.msra.mxu0 %v477
    %2626 = vmatprep.subr.mxu0 %v482
    %2627 = vmatpush1.msra.mxu0 %v481
    %2628 = vmatprep.subr.mxu0 %v486
    %2629 = vmatpush1.msra.mxu0 %v485
    %2630 = vmatprep.subr.mxu0 %v490
    %2631 = vmatpush1.msra.mxu0 %v489
    %2632 = vmatprep.subr.mxu0 %v494
    %2633 = vmatpush1.msra.mxu0 %v493
    %2634 = vmatprep.subr.mxu0 %v498
    %2635 = vmatpush1.msra.mxu0 %v497
    %2636 = vmatprep.subr.mxu0 %v502
    %2637 = vmatpush1.msra.mxu0 %v501
    %2638 = vmatprep.subr.mxu0 %v506
    %2639 = vmatpush1.msra.mxu0 %v505
    %2640 = vmatprep.mubr.f32.mxu0 %v2253
    %2641 = vmatmul.mubr.f32.gmra.mrb[0].mxu0 %v2575
    %v2642 = vpop.f32.mrb[0].mxu0
    %v2643 = vadd.f32 %v510, %v2642
    %v2644 = vpop.f32.mrb[0].mxu0
    %v2645 = vadd.f32 %v511, %v2644
    %2646 = vdwg.mxu0
    %2647 = vmatprep.subr.mxu0 %v384
    %2648 = vmatpush1.msra.mxu0 %v383
    %2649 = vmatprep.subr.mxu0 %v388
    %2650 = vmatpush1.msra.mxu0 %v387
    %2651 = vmatprep.subr.mxu0 %v392
    %2652 = vmatpush1.msra.mxu0 %v391
    %2653 = vmatprep.subr.mxu0 %v396
    %2654 = vmatpush1.msra.mxu0 %v395
    %2655 = vmatprep.subr.mxu0 %v400
    %2656 = vmatpush1.msra.mxu0 %v399
    %2657 = vmatprep.subr.mxu0 %v404
    %2658 = vmatpush1.msra.mxu0 %v403
    %2659 = vmatprep.subr.mxu0 %v408
    %2660 = vmatpush1.msra.mxu0 %v407
    %2661 = vmatprep.subr.mxu0 %v412
    %2662 = vmatpush1.msra.mxu0 %v411
    %2663 = vmatprep.subr.mxu0 %v416
    %2664 = vmatpush1.msra.mxu0 %v415
    %2665 = vmatprep.subr.mxu0 %v420
    %2666 = vmatpush1.msra.mxu0 %v419
    %2667 = vmatprep.subr.mxu0 %v424
    %2668 = vmatpush1.msra.mxu0 %v423
    %2669 = vmatprep.subr.mxu0 %v428
    %2670 = vmatpush1.msra.mxu0 %v427
    %2671 = vmatprep.subr.mxu0 %v432
    %2672 = vmatpush1.msra.mxu0 %v431
    %2673 = vmatprep.subr.mxu0 %v436
    %2674 = vmatpush1.msra.mxu0 %v435
    %2675 = vmatprep.subr.mxu0 %v440
    %2676 = vmatpush1.msra.mxu0 %v439
    %2677 = vmatprep.subr.mxu0 %v444
    %2678 = vmatpush1.msra.mxu0 %v443
    %2679 = vmatprep.subr.mxu0 %v448
    %2680 = vmatpush1.msra.mxu0 %v447
    %2681 = vmatprep.subr.mxu0 %v452
    %2682 = vmatpush1.msra.mxu0 %v451
    %2683 = vmatprep.subr.mxu0 %v456
    %2684 = vmatpush1.msra.mxu0 %v455
    %2685 = vmatprep.subr.mxu0 %v460
    %2686 = vmatpush1.msra.mxu0 %v459
    %2687 = vmatprep.subr.mxu0 %v464
    %2688 = vmatpush1.msra.mxu0 %v463
    %2689 = vmatprep.subr.mxu0 %v468
    %2690 = vmatpush1.msra.mxu0 %v467
    %2691 = vmatprep.subr.mxu0 %v472
    %2692 = vmatpush1.msra.mxu0 %v471
    %2693 = vmatprep.subr.mxu0 %v476
    %2694 = vmatpush1.msra.mxu0 %v475
    %2695 = vmatprep.subr.mxu0 %v480
    %2696 = vmatpush1.msra.mxu0 %v479
    %2697 = vmatprep.subr.mxu0 %v484
    %2698 = vmatpush1.msra.mxu0 %v483
    %2699 = vmatprep.subr.mxu0 %v488
    %2700 = vmatpush1.msra.mxu0 %v487
    %2701 = vmatprep.subr.mxu0 %v492
    %2702 = vmatpush1.msra.mxu0 %v491
    %2703 = vmatprep.subr.mxu0 %v496
    %2704 = vmatpush1.msra.mxu0 %v495
    %2705 = vmatprep.subr.mxu0 %v500
    %2706 = vmatpush1.msra.mxu0 %v499
    %2707 = vmatprep.subr.mxu0 %v504
    %2708 = vmatpush1.msra.mxu0 %v503
    %2709 = vmatprep.subr.mxu0 %v508
    %2710 = vmatpush1.msra.mxu0 %v507
    %2711 = vmatprep.mubr.f32.mxu0 %v2253
    %2712 = vmatmul.mubr.f32.gmra.mrb[0].mxu0 %v2575
    %v2713 = vpop.f32.mrb[0].mxu0
    %v2714 = vadd.f32 %v512, %v2713
    %v2715 = vpop.f32.mrb[0].mxu0
    %v2716 = vadd.f32 %v513, %v2715
    %2717 = vdwg.mxu0
    %v2718 = vmul.f32 %v2643, 0.5
    %v2719 = vtanh.pop %v2718
    %v2720 = vadd.f32 %v2719, 1.0
    %v2721 = vmul.f32 %v2720, 0.5
    %v2722 = vmul.f32 %v2645, 0.5
    %v2723 = vtanh.pop %v2722
    %v2724 = vadd.f32 %v2723, 1.0
    %v2725 = vmul.f32 %v2724, 0.5
    %v2726 = vtanh.pop %v2714
    %v2727 = vmul.f32 %v2716, 0.5
    %v2728 = vtanh.pop %v2727
    %v2729 = vadd.f32 %v2728, 1.0
    %v2730 = vmul.f32 %v2729, 0.5
    %v2731 = vmul.f32 %v2725, %v2251
    %v2732 = vmul.f32 %v2721, %v2726
    %v2733 = vadd.f32 %v2731, %v2732
    %v2734 = vtanh.pop %v2733
    %v2735 = vmul.f32 %v2730, %v2734
    %2736 = vmatprep.subr.mxu0 %v676
    %2737 = vmatpush1.msra.mxu0 %v675
    %2738 = vmatprep.subr.mxu0 %v680
    %2739 = vmatpush1.msra.mxu0 %v679
    %2740 = vmatprep.subr.mxu0 %v684
    %2741 = vmatpush1.msra.mxu0 %v683
    %2742 = vmatprep.subr.mxu0 %v688
    %2743 = vmatpush1.msra.mxu0 %v687
    %2744 = vmatprep.subr.mxu0 %v692
    %2745 = vmatpush1.msra.mxu0 %v691
    %2746 = vmatprep.subr.mxu0 %v696
    %2747 = vmatpush1.msra.mxu0 %v695
    %2748 = vmatprep.subr.mxu0 %v700
    %2749 = vmatpush1.msra.mxu0 %v699
    %2750 = vmatprep.subr.mxu0 %v704
    %2751 = vmatpush1.msra.mxu0 %v703
    %2752 = vmatprep.subr.mxu0 %v708
    %2753 = vmatpush1.msra.mxu0 %v707
    %2754 = vmatprep.subr.mxu0 %v712
    %2755 = vmatpush1.msra.mxu0 %v711
    %2756 = vmatprep.subr.mxu0 %v716
    %2757 = vmatpush1.msra.mxu0 %v715
    %2758 = vmatprep.subr.mxu0 %v720
    %2759 = vmatpush1.msra.mxu0 %v719
    %2760 = vmatprep.subr.mxu0 %v724
    %2761 = vmatpush1.msra.mxu0 %v723
    %2762 = vmatprep.subr.mxu0 %v728
    %2763 = vmatpush1.msra.mxu0 %v727
    %2764 = vmatprep.subr.mxu0 %v732
    %2765 = vmatpush1.msra.mxu0 %v731
    %2766 = vmatprep.subr.mxu0 %v736
    %2767 = vmatpush1.msra.mxu0 %v735
    %2768 = vmatprep.subr.mxu0 %v740
    %2769 = vmatpush1.msra.mxu0 %v739
    %2770 = vmatprep.subr.mxu0 %v744
    %2771 = vmatpush1.msra.mxu0 %v743
    %2772 = vmatprep.subr.mxu0 %v748
    %2773 = vmatpush1.msra.mxu0 %v747
    %2774 = vmatprep.subr.mxu0 %v752
    %2775 = vmatpush1.msra.mxu0 %v751
    %2776 = vmatprep.subr.mxu0 %v756
    %2777 = vmatpush1.msra.mxu0 %v755
    %2778 = vmatprep.subr.mxu0 %v760
    %2779 = vmatpush1.msra.mxu0 %v759
    %2780 = vmatprep.subr.mxu0 %v764
    %2781 = vmatpush1.msra.mxu0 %v763
    %2782 = vmatprep.subr.mxu0 %v768
    %2783 = vmatpush1.msra.mxu0 %v767
    %2784 = vmatprep.subr.mxu0 %v772
    %2785 = vmatpush1.msra.mxu0 %v771
    %2786 = vmatprep.subr.mxu0 %v776
    %2787 = vmatpush1.msra.mxu0 %v775
    %2788 = vmatprep.subr.mxu0 %v780
    %2789 = vmatpush1.msra.mxu0 %v779
    %2790 = vmatprep.subr.mxu0 %v784
    %2791 = vmatpush1.msra.mxu0 %v783
    %2792 = vmatprep.subr.mxu0 %v788
    %2793 = vmatpush1.msra.mxu0 %v787
    %2794 = vmatprep.subr.mxu0 %v792
    %2795 = vmatpush1.msra.mxu0 %v791
    %2796 = vmatprep.subr.mxu0 %v796
    %2797 = vmatpush1.msra.mxu0 %v795
    %2798 = vmatprep.subr.mxu0 %v800
    %2799 = vmatpush1.msra.mxu0 %v799
    %2800 = vmatprep.mubr.f32.mxu0 %v2413
    %2801 = vmatmul.mubr.f32.gmra.mrb[0].mxu0 %v2735
    %v2802 = vpop.f32.mrb[0].mxu0
    %v2803 = vadd.f32 %v804, %v2802
    %v2804 = vpop.f32.mrb[0].mxu0
    %v2805 = vadd.f32 %v805, %v2804
    %2806 = vdwg.mxu0
    %2807 = vmatprep.subr.mxu0 %v678
    %2808 = vmatpush1.msra.mxu0 %v677
    %2809 = vmatprep.subr.mxu0 %v682
    %2810 = vmatpush1.msra.mxu0 %v681
    %2811 = vmatprep.subr.mxu0 %v686
    %2812 = vmatpush1.msra.mxu0 %v685
    %2813 = vmatprep.subr.mxu0 %v690
    %2814 = vmatpush1.msra.mxu0 %v689
    %2815 = vmatprep.subr.mxu0 %v694
    %2816 = vmatpush1.msra.mxu0 %v693
    %2817 = vmatprep.subr.mxu0 %v698
    %2818 = vmatpush1.msra.mxu0 %v697
    %2819 = vmatprep.subr.mxu0 %v702
    %2820 = vmatpush1.msra.mxu0 %v701
    %2821 = vmatprep.subr.mxu0 %v706
    %2822 = vmatpush1.msra.mxu0 %v705
    %2823 = vmatprep.subr.mxu0 %v710
    %2824 = vmatpush1.msra.mxu0 %v709
    %2825 = vmatprep.subr.mxu0 %v714
    %2826 = vmatpush1.msra.mxu0 %v713
    %2827 = vmatprep.subr.mxu0 %v718
    %2828 = vmatpush1.msra.mxu0 %v717
    %2829 = vmatprep.subr.mxu0 %v722
    %2830 = vmatpush1.msra.mxu0 %v721
    %2831 = vmatprep.subr.mxu0 %v726
    %2832 = vmatpush1.msra.mxu0 %v725
    %2833 = vmatprep.subr.mxu0 %v730
    %2834 = vmatpush1.msra.mxu0 %v729
    %2835 = vmatprep.subr.mxu0 %v734
    %2836 = vmatpush1.msra.mxu0 %v733
    %2837 = vmatprep.subr.mxu0 %v738
    %2838 = vmatpush1.msra.mxu0 %v737
    %2839 = vmatprep.subr.mxu0 %v742
    %2840 = vmatpush1.msra.mxu0 %v741
    %2841 = vmatprep.subr.mxu0 %v746
    %2842 = vmatpush1.msra.mxu0 %v745
    %2843 = vmatprep.subr.mxu0 %v750
    %2844 = vmatpush1.msra.mxu0 %v749
    %2845 = vmatprep.subr.mxu0 %v754
    %2846 = vmatpush1.msra.mxu0 %v753
    %2847 = vmatprep.subr.mxu0 %v758
    %2848 = vmatpush1.msra.mxu0 %v757
    %2849 = vmatprep.subr.mxu0 %v762
    %2850 = vmatpush1.msra.mxu0 %v761
    %2851 = vmatprep.subr.mxu0 %v766
    %2852 = vmatpush1.msra.mxu0 %v765
    %2853 = vmatprep.subr.mxu0 %v770
    %2854 = vmatpush1.msra.mxu0 %v769
    %2855 = vmatprep.subr.mxu0 %v774
    %2856 = vmatpush1.msra.mxu0 %v773
    %2857 = vmatprep.subr.mxu0 %v778
    %2858 = vmatpush1.msra.mxu0 %v777
    %2859 = vmatprep.subr.mxu0 %v782
    %2860 = vmatpush1.msra.mxu0 %v781
    %2861 = vmatprep.subr.mxu0 %v786
    %2862 = vmatpush1.msra.mxu0 %v785
    %2863 = vmatprep.subr.mxu0 %v790
    %2864 = vmatpush1.msra.mxu0 %v789
    %2865 = vmatprep.subr.mxu0 %v794
    %2866 = vmatpush1.msra.mxu0 %v793
    %2867 = vmatprep.subr.mxu0 %v798
    %2868 = vmatpush1.msra.mxu0 %v797
    %2869 = vmatprep.subr.mxu0 %v802
    %2870 = vmatpush1.msra.mxu0 %v801
    %2871 = vmatprep.mubr.f32.mxu0 %v2413
    %2872 = vmatmul.mubr.f32.gmra.mrb[0].mxu0 %v2735
    %v2873 = vpop.f32.mrb[0].mxu0
    %v2874 = vadd.f32 %v806, %v2873
    %v2875 = vpop.f32.mrb[0].mxu0
    %v2876 = vadd.f32 %v807, %v2875
    %2877 = vdwg.mxu0
    %v2878 = vmul.f32 %v2803, 0.5
    %v2879 = vtanh.pop %v2878
    %v2880 = vadd.f32 %v2879, 1.0
    %v2881 = vmul.f32 %v2880, 0.5
    %v2882 = vmul.f32 %v2805, 0.5
    %v2883 = vtanh.pop %v2882
    %v2884 = vadd.f32 %v2883, 1.0
    %v2885 = vmul.f32 %v2884, 0.5
    %v2886 = vtanh.pop %v2874
    %v2887 = vmul.f32 %v2876, 0.5
    %v2888 = vtanh.pop %v2887
    %v2889 = vadd.f32 %v2888, 1.0
    %v2890 = vmul.f32 %v2889, 0.5
    %v2891 = vmul.f32 %v2885, %v2411
    %v2892 = vmul.f32 %v2881, %v2886
    %v2893 = vadd.f32 %v2891, %v2892
    %v2894 = vtanh.pop %v2893
    %v2895 = vmul.f32 %v2890, %v2894
    %s2896 = scalar_lea.vmem [#allocation2], 40
    %v2897 = vld [vmem:[%s2896] sm:$0xff]
    %2898 = vmatprep.subr.mxu0 %v89
    %2899 = vmatpush1.msra.mxu0 %v88
    %2900 = vmatprep.subr.mxu0 %v93
    %2901 = vmatpush1.msra.mxu0 %v92
    %2902 = vmatprep.subr.mxu0 %v97
    %2903 = vmatpush1.msra.mxu0 %v96
    %2904 = vmatprep.subr.mxu0 %v101
    %2905 = vmatpush1.msra.mxu0 %v100
    %2906 = vmatprep.subr.mxu0 %v105
    %2907 = vmatpush1.msra.mxu0 %v104
    %2908 = vmatprep.subr.mxu0 %v109
    %2909 = vmatpush1.msra.mxu0 %v108
    %2910 = vmatprep.subr.mxu0 %v113
    %2911 = vmatpush1.msra.mxu0 %v112
    %2912 = vmatprep.subr.mxu0 %v117
    %2913 = vmatpush1.msra.mxu0 %v116
    %2914 = vmatprep.subr.mxu0 %v121
    %2915 = vmatpush1.msra.mxu0 %v120
    %2916 = vmatprep.subr.mxu0 %v125
    %2917 = vmatpush1.msra.mxu0 %v124
    %2918 = vmatprep.subr.mxu0 %v129
    %2919 = vmatpush1.msra.mxu0 %v128
    %2920 = vmatprep.subr.mxu0 %v133
    %2921 = vmatpush1.msra.mxu0 %v132
    %2922 = vmatprep.subr.mxu0 %v137
    %2923 = vmatpush1.msra.mxu0 %v136
    %2924 = vmatprep.subr.mxu0 %v141
    %2925 = vmatpush1.msra.mxu0 %v140
    %2926 = vmatprep.subr.mxu0 %v145
    %2927 = vmatpush1.msra.mxu0 %v144
    %2928 = vmatprep.subr.mxu0 %v149
    %2929 = vmatpush1.msra.mxu0 %v148
    %2930 = vmatprep.subr.mxu0 %v153
    %2931 = vmatpush1.msra.mxu0 %v152
    %2932 = vmatprep.subr.mxu0 %v157
    %2933 = vmatpush1.msra.mxu0 %v156
    %2934 = vmatprep.subr.mxu0 %v161
    %2935 = vmatpush1.msra.mxu0 %v160
    %2936 = vmatprep.subr.mxu0 %v165
    %2937 = vmatpush1.msra.mxu0 %v164
    %2938 = vmatprep.subr.mxu0 %v169
    %2939 = vmatpush1.msra.mxu0 %v168
    %2940 = vmatprep.subr.mxu0 %v173
    %2941 = vmatpush1.msra.mxu0 %v172
    %2942 = vmatprep.subr.mxu0 %v177
    %2943 = vmatpush1.msra.mxu0 %v176
    %2944 = vmatprep.subr.mxu0 %v181
    %2945 = vmatpush1.msra.mxu0 %v180
    %2946 = vmatprep.subr.mxu0 %v185
    %2947 = vmatpush1.msra.mxu0 %v184
    %2948 = vmatprep.subr.mxu0 %v189
    %2949 = vmatpush1.msra.mxu0 %v188
    %2950 = vmatprep.subr.mxu0 %v193
    %2951 = vmatpush1.msra.mxu0 %v192
    %2952 = vmatprep.subr.mxu0 %v197
    %2953 = vmatpush1.msra.mxu0 %v196
    %2954 = vmatprep.subr.mxu0 %v201
    %2955 = vmatpush1.msra.mxu0 %v200
    %2956 = vmatprep.subr.mxu0 %v205
    %2957 = vmatpush1.msra.mxu0 %v204
    %2958 = vmatprep.subr.mxu0 %v209
    %2959 = vmatpush1.msra.mxu0 %v208
    %2960 = vmatprep.subr.mxu0 %v213
    %2961 = vmatpush1.msra.mxu0 %v212
    %2962 = vmatprep.mubr.f32.mxu0 %v2575
    %2963 = vmatmul.mubr.f32.gmra.mrb[0].mxu0 %v2897
    %v2964 = vpop.f32.mrb[0].mxu0
    %v2965 = vadd.f32 %v216, %v2964
    %v2966 = vpop.f32.mrb[0].mxu0
    %v2967 = vadd.f32 %v217, %v2966
    %2968 = vdwg.mxu0
    %2969 = vmatprep.subr.mxu0 %v91
    %2970 = vmatpush1.msra.mxu0 %v90
    %2971 = vmatprep.subr.mxu0 %v95
    %2972 = vmatpush1.msra.mxu0 %v94
    %2973 = vmatprep.subr.mxu0 %v99
    %2974 = vmatpush1.msra.mxu0 %v98
    %2975 = vmatprep.subr.mxu0 %v103
    %2976 = vmatpush1.msra.mxu0 %v102
    %2977 = vmatprep.subr.mxu0 %v107
    %2978 = vmatpush1.msra.mxu0 %v106
    %2979 = vmatprep.subr.mxu0 %v111
    %2980 = vmatpush1.msra.mxu0 %v110
    %2981 = vmatprep.subr.mxu0 %v115
    %2982 = vmatpush1.msra.mxu0 %v114
    %2983 = vmatprep.subr.mxu0 %v119
    %2984 = vmatpush1.msra.mxu0 %v118
    %2985 = vmatprep.subr.mxu0 %v123
    %2986 = vmatpush1.msra.mxu0 %v122
    %2987 = vmatprep.subr.mxu0 %v127
    %2988 = vmatpush1.msra.mxu0 %v126
    %2989 = vmatprep.subr.mxu0 %v131
    %2990 = vmatpush1.msra.mxu0 %v130
    %2991 = vmatprep.subr.mxu0 %v135
    %2992 = vmatpush1.msra.mxu0 %v134
    %2993 = vmatprep.subr.mxu0 %v139
    %2994 = vmatpush1.msra.mxu0 %v138
    %2995 = vmatprep.subr.mxu0 %v143
    %2996 = vmatpush1.msra.mxu0 %v142
    %2997 = vmatprep.subr.mxu0 %v147
    %2998 = vmatpush1.msra.mxu0 %v146
    %2999 = vmatprep.subr.mxu0 %v151
    %3000 = vmatpush1.msra.mxu0 %v150
    %3001 = vmatprep.subr.mxu0 %v155
    %3002 = vmatpush1.msra.mxu0 %v154
    %3003 = vmatprep.subr.mxu0 %v159
    %3004 = vmatpush1.msra.mxu0 %v158
    %3005 = vmatprep.subr.mxu0 %v163
    %3006 = vmatpush1.msra.mxu0 %v162
    %3007 = vmatprep.subr.mxu0 %v167
    %3008 = vmatpush1.msra.mxu0 %v166
    %3009 = vmatprep.subr.mxu0 %v171
    %3010 = vmatpush1.msra.mxu0 %v170
    %3011 = vmatprep.subr.mxu0 %v175
    %3012 = vmatpush1.msra.mxu0 %v174
    %3013 = vmatprep.subr.mxu0 %v179
    %3014 = vmatpush1.msra.mxu0 %v178
    %3015 = vmatprep.subr.mxu0 %v183
    %3016 = vmatpush1.msra.mxu0 %v182
    %3017 = vmatprep.subr.mxu0 %v187
    %3018 = vmatpush1.msra.mxu0 %v186
    %3019 = vmatprep.subr.mxu0 %v191
    %3020 = vmatpush1.msra.mxu0 %v190
    %3021 = vmatprep.subr.mxu0 %v195
    %3022 = vmatpush1.msra.mxu0 %v194
    %3023 = vmatprep.subr.mxu0 %v199
    %3024 = vmatpush1.msra.mxu0 %v198
    %3025 = vmatprep.subr.mxu0 %v203
    %3026 = vmatpush1.msra.mxu0 %v202
    %3027 = vmatprep.subr.mxu0 %v207
    %3028 = vmatpush1.msra.mxu0 %v206
    %3029 = vmatprep.subr.mxu0 %v211
    %3030 = vmatpush1.msra.mxu0 %v210
    %3031 = vmatprep.subr.mxu0 %v215
    %3032 = vmatpush1.msra.mxu0 %v214
    %3033 = vmatprep.mubr.f32.mxu0 %v2575
    %3034 = vmatmul.mubr.f32.gmra.mrb[0].mxu0 %v2897
    %v3035 = vpop.f32.mrb[0].mxu0
    %v3036 = vadd.f32 %v218, %v3035
    %v3037 = vpop.f32.mrb[0].mxu0
    %v3038 = vadd.f32 %v219, %v3037
    %3039 = vdwg.mxu0
    %v3040 = vmul.f32 %v2965, 0.5
    %v3041 = vtanh.pop %v3040
    %v3042 = vadd.f32 %v3041, 1.0
    %v3043 = vmul.f32 %v3042, 0.5
    %v3044 = vmul.f32 %v2967, 0.5
    %v3045 = vtanh.pop %v3044
    %v3046 = vadd.f32 %v3045, 1.0
    %v3047 = vmul.f32 %v3046, 0.5
    %v3048 = vtanh.pop %v3036
    %v3049 = vmul.f32 %v3038, 0.5
    %v3050 = vtanh.pop %v3049
    %v3051 = vadd.f32 %v3050, 1.0
    %v3052 = vmul.f32 %v3051, 0.5
    %v3053 = vmul.f32 %v3047, %v2573
    %v3054 = vmul.f32 %v3043, %v3048
    %v3055 = vadd.f32 %v3053, %v3054
    %v3056 = vtanh.pop %v3055
    %v3057 = vmul.f32 %v3052, %v3056
    %3058 = vmatprep.subr.mxu0 %v382
    %3059 = vmatpush1.msra.mxu0 %v381
    %3060 = vmatprep.subr.mxu0 %v386
    %3061 = vmatpush1.msra.mxu0 %v385
    %3062 = vmatprep.subr.mxu0 %v390
    %3063 = vmatpush1.msra.mxu0 %v389
    %3064 = vmatprep.subr.mxu0 %v394
    %3065 = vmatpush1.msra.mxu0 %v393
    %3066 = vmatprep.subr.mxu0 %v398
    %3067 = vmatpush1.msra.mxu0 %v397
    %3068 = vmatprep.subr.mxu0 %v402
    %3069 = vmatpush1.msra.mxu0 %v401
    %3070 = vmatprep.subr.mxu0 %v406
    %3071 = vmatpush1.msra.mxu0 %v405
    %3072 = vmatprep.subr.mxu0 %v410
    %3073 = vmatpush1.msra.mxu0 %v409
    %3074 = vmatprep.subr.mxu0 %v414
    %3075 = vmatpush1.msra.mxu0 %v413
    %3076 = vmatprep.subr.mxu0 %v418
    %3077 = vmatpush1.msra.mxu0 %v417
    %3078 = vmatprep.subr.mxu0 %v422
    %3079 = vmatpush1.msra.mxu0 %v421
    %3080 = vmatprep.subr.mxu0 %v426
    %3081 = vmatpush1.msra.mxu0 %v425
    %3082 = vmatprep.subr.mxu0 %v430
    %3083 = vmatpush1.msra.mxu0 %v429
    %3084 = vmatprep.subr.mxu0 %v434
    %3085 = vmatpush1.msra.mxu0 %v433
    %3086 = vmatprep.subr.mxu0 %v438
    %3087 = vmatpush1.msra.mxu0 %v437
    %3088 = vmatprep.subr.mxu0 %v442
    %3089 = vmatpush1.msra.mxu0 %v441
    %3090 = vmatprep.subr.mxu0 %v446
    %3091 = vmatpush1.msra.mxu0 %v445
    %3092 = vmatprep.subr.mxu0 %v450
    %3093 = vmatpush1.msra.mxu0 %v449
    %3094 = vmatprep.subr.mxu0 %v454
    %3095 = vmatpush1.msra.mxu0 %v453
    %3096 = vmatprep.subr.mxu0 %v458
    %3097 = vmatpush1.msra.mxu0 %v457
    %3098 = vmatprep.subr.mxu0 %v462
    %3099 = vmatpush1.msra.mxu0 %v461
    %3100 = vmatprep.subr.mxu0 %v466
    %3101 = vmatpush1.msra.mxu0 %v465
    %3102 = vmatprep.subr.mxu0 %v470
    %3103 = vmatpush1.msra.mxu0 %v469
    %3104 = vmatprep.subr.mxu0 %v474
    %3105 = vmatpush1.msra.mxu0 %v473
    %3106 = vmatprep.subr.mxu0 %v478
    %3107 = vmatpush1.msra.mxu0 %v477
    %3108 = vmatprep.subr.mxu0 %v482
    %3109 = vmatpush1.msra.mxu0 %v481
    %3110 = vmatprep.subr.mxu0 %v486
    %3111 = vmatpush1.msra.mxu0 %v485
    %3112 = vmatprep.subr.mxu0 %v490
    %3113 = vmatpush1.msra.mxu0 %v489
    %3114 = vmatprep.subr.mxu0 %v494
    %3115 = vmatpush1.msra.mxu0 %v493
    %3116 = vmatprep.subr.mxu0 %v498
    %3117 = vmatpush1.msra.mxu0 %v497
    %3118 = vmatprep.subr.mxu0 %v502
    %3119 = vmatpush1.msra.mxu0 %v501
    %3120 = vmatprep.subr.mxu0 %v506
    %3121 = vmatpush1.msra.mxu0 %v505
    %3122 = vmatprep.mubr.f32.mxu0 %v2735
    %3123 = vmatmul.mubr.f32.gmra.mrb[0].mxu0 %v3057
    %v3124 = vpop.f32.mrb[0].mxu0
    %v3125 = vadd.f32 %v510, %v3124
    %v3126 = vpop.f32.mrb[0].mxu0
    %v3127 = vadd.f32 %v511, %v3126
    %3128 = vdwg.mxu0
    %3129 = vmatprep.subr.mxu0 %v384
    %3130 = vmatpush1.msra.mxu0 %v383
    %3131 = vmatprep.subr.mxu0 %v388
    %3132 = vmatpush1.msra.mxu0 %v387
    %3133 = vmatprep.subr.mxu0 %v392
    %3134 = vmatpush1.msra.mxu0 %v391
    %3135 = vmatprep.subr.mxu0 %v396
    %3136 = vmatpush1.msra.mxu0 %v395
    %3137 = vmatprep.subr.mxu0 %v400
    %3138 = vmatpush1.msra.mxu0 %v399
    %3139 = vmatprep.subr.mxu0 %v404
    %3140 = vmatpush1.msra.mxu0 %v403
    %3141 = vmatprep.subr.mxu0 %v408
    %3142 = vmatpush1.msra.mxu0 %v407
    %3143 = vmatprep.subr.mxu0 %v412
    %3144 = vmatpush1.msra.mxu0 %v411
    %3145 = vmatprep.subr.mxu0 %v416
    %3146 = vmatpush1.msra.mxu0 %v415
    %3147 = vmatprep.subr.mxu0 %v420
    %3148 = vmatpush1.msra.mxu0 %v419
    %3149 = vmatprep.subr.mxu0 %v424
    %3150 = vmatpush1.msra.mxu0 %v423
    %3151 = vmatprep.subr.mxu0 %v428
    %3152 = vmatpush1.msra.mxu0 %v427
    %3153 = vmatprep.subr.mxu0 %v432
    %3154 = vmatpush1.msra.mxu0 %v431
    %3155 = vmatprep.subr.mxu0 %v436
    %3156 = vmatpush1.msra.mxu0 %v435
    %3157 = vmatprep.subr.mxu0 %v440
    %3158 = vmatpush1.msra.mxu0 %v439
    %3159 = vmatprep.subr.mxu0 %v444
    %3160 = vmatpush1.msra.mxu0 %v443
    %3161 = vmatprep.subr.mxu0 %v448
    %3162 = vmatpush1.msra.mxu0 %v447
    %3163 = vmatprep.subr.mxu0 %v452
    %3164 = vmatpush1.msra.mxu0 %v451
    %3165 = vmatprep.subr.mxu0 %v456
    %3166 = vmatpush1.msra.mxu0 %v455
    %3167 = vmatprep.subr.mxu0 %v460
    %3168 = vmatpush1.msra.mxu0 %v459
    %3169 = vmatprep.subr.mxu0 %v464
    %3170 = vmatpush1.msra.mxu0 %v463
    %3171 = vmatprep.subr.mxu0 %v468
    %3172 = vmatpush1.msra.mxu0 %v467
    %3173 = vmatprep.subr.mxu0 %v472
    %3174 = vmatpush1.msra.mxu0 %v471
    %3175 = vmatprep.subr.mxu0 %v476
    %3176 = vmatpush1.msra.mxu0 %v475
    %3177 = vmatprep.subr.mxu0 %v480
    %3178 = vmatpush1.msra.mxu0 %v479
    %3179 = vmatprep.subr.mxu0 %v484
    %3180 = vmatpush1.msra.mxu0 %v483
    %3181 = vmatprep.subr.mxu0 %v488
    %3182 = vmatpush1.msra.mxu0 %v487
    %3183 = vmatprep.subr.mxu0 %v492
    %3184 = vmatpush1.msra.mxu0 %v491
    %3185 = vmatprep.subr.mxu0 %v496
    %3186 = vmatpush1.msra.mxu0 %v495
    %3187 = vmatprep.subr.mxu0 %v500
    %3188 = vmatpush1.msra.mxu0 %v499
    %3189 = vmatprep.subr.mxu0 %v504
    %3190 = vmatpush1.msra.mxu0 %v503
    %3191 = vmatprep.subr.mxu0 %v508
    %3192 = vmatpush1.msra.mxu0 %v507
    %3193 = vmatprep.mubr.f32.mxu0 %v2735
    %3194 = vmatmul.mubr.f32.gmra.mrb[0].mxu0 %v3057
    %v3195 = vpop.f32.mrb[0].mxu0
    %v3196 = vadd.f32 %v512, %v3195
    %v3197 = vpop.f32.mrb[0].mxu0
    %v3198 = vadd.f32 %v513, %v3197
    %3199 = vdwg.mxu0
    %v3200 = vmul.f32 %v3125, 0.5
    %v3201 = vtanh.pop %v3200
    %v3202 = vadd.f32 %v3201, 1.0
    %v3203 = vmul.f32 %v3202, 0.5
    %v3204 = vmul.f32 %v3127, 0.5
    %v3205 = vtanh.pop %v3204
    %v3206 = vadd.f32 %v3205, 1.0
    %v3207 = vmul.f32 %v3206, 0.5
    %v3208 = vtanh.pop %v3196
    %v3209 = vmul.f32 %v3198, 0.5
    %v3210 = vtanh.pop %v3209
    %v3211 = vadd.f32 %v3210, 1.0
    %v3212 = vmul.f32 %v3211, 0.5
    %v3213 = vmul.f32 %v3207, %v2733
    %v3214 = vmul.f32 %v3203, %v3208
    %v3215 = vadd.f32 %v3213, %v3214
    %v3216 = vtanh.pop %v3215
    %v3217 = vmul.f32 %v3212, %v3216
    %3218 = vmatprep.subr.mxu0 %v676
    %3219 = vmatpush1.msra.mxu0 %v675
    %3220 = vmatprep.subr.mxu0 %v680
    %3221 = vmatpush1.msra.mxu0 %v679
    %3222 = vmatprep.subr.mxu0 %v684
    %3223 = vmatpush1.msra.mxu0 %v683
    %3224 = vmatprep.subr.mxu0 %v688
    %3225 = vmatpush1.msra.mxu0 %v687
    %3226 = vmatprep.subr.mxu0 %v692
    %3227 = vmatpush1.msra.mxu0 %v691
    %3228 = vmatprep.subr.mxu0 %v696
    %3229 = vmatpush1.msra.mxu0 %v695
    %3230 = vmatprep.subr.mxu0 %v700
    %3231 = vmatpush1.msra.mxu0 %v699
    %3232 = vmatprep.subr.mxu0 %v704
    %3233 = vmatpush1.msra.mxu0 %v703
    %3234 = vmatprep.subr.mxu0 %v708
    %3235 = vmatpush1.msra.mxu0 %v707
    %3236 = vmatprep.subr.mxu0 %v712
    %3237 = vmatpush1.msra.mxu0 %v711
    %3238 = vmatprep.subr.mxu0 %v716
    %3239 = vmatpush1.msra.mxu0 %v715
    %3240 = vmatprep.subr.mxu0 %v720
    %3241 = vmatpush1.msra.mxu0 %v719
    %3242 = vmatprep.subr.mxu0 %v724
    %3243 = vmatpush1.msra.mxu0 %v723
    %3244 = vmatprep.subr.mxu0 %v728
    %3245 = vmatpush1.msra.mxu0 %v727
    %3246 = vmatprep.subr.mxu0 %v732
    %3247 = vmatpush1.msra.mxu0 %v731
    %3248 = vmatprep.subr.mxu0 %v736
    %3249 = vmatpush1.msra.mxu0 %v735
    %3250 = vmatprep.subr.mxu0 %v740
    %3251 = vmatpush1.msra.mxu0 %v739
    %3252 = vmatprep.subr.mxu0 %v744
    %3253 = vmatpush1.msra.mxu0 %v743
    %3254 = vmatprep.subr.mxu0 %v748
    %3255 = vmatpush1.msra.mxu0 %v747
    %3256 = vmatprep.subr.mxu0 %v752
    %3257 = vmatpush1.msra.mxu0 %v751
    %3258 = vmatprep.subr.mxu0 %v756
    %3259 = vmatpush1.msra.mxu0 %v755
    %3260 = vmatprep.subr.mxu0 %v760
    %3261 = vmatpush1.msra.mxu0 %v759
    %3262 = vmatprep.subr.mxu0 %v764
    %3263 = vmatpush1.msra.mxu0 %v763
    %3264 = vmatprep.subr.mxu0 %v768
    %3265 = vmatpush1.msra.mxu0 %v767
    %3266 = vmatprep.subr.mxu0 %v772
    %3267 = vmatpush1.msra.mxu0 %v771
    %3268 = vmatprep.subr.mxu0 %v776
    %3269 = vmatpush1.msra.mxu0 %v775
    %3270 = vmatprep.subr.mxu0 %v780
    %3271 = vmatpush1.msra.mxu0 %v779
    %3272 = vmatprep.subr.mxu0 %v784
    %3273 = vmatpush1.msra.mxu0 %v783
    %3274 = vmatprep.subr.mxu0 %v788
    %3275 = vmatpush1.msra.mxu0 %v787
    %3276 = vmatprep.subr.mxu0 %v792
    %3277 = vmatpush1.msra.mxu0 %v791
    %3278 = vmatprep.subr.mxu0 %v796
    %3279 = vmatpush1.msra.mxu0 %v795
    %3280 = vmatprep.subr.mxu0 %v800
    %3281 = vmatpush1.msra.mxu0 %v799
    %3282 = vmatprep.mubr.f32.mxu0 %v2895
    %3283 = vmatmul.mubr.f32.gmra.mrb[0].mxu0 %v3217
    %v3284 = vpop.f32.mrb[0].mxu0
    %v3285 = vadd.f32 %v804, %v3284
    %v3286 = vpop.f32.mrb[0].mxu0
    %v3287 = vadd.f32 %v805, %v3286
    %3288 = vdwg.mxu0
    %3289 = vmatprep.subr.mxu0 %v678
    %3290 = vmatpush1.msra.mxu0 %v677
    %3291 = vmatprep.subr.mxu0 %v682
    %3292 = vmatpush1.msra.mxu0 %v681
    %3293 = vmatprep.subr.mxu0 %v686
    %3294 = vmatpush1.msra.mxu0 %v685
    %3295 = vmatprep.subr.mxu0 %v690
    %3296 = vmatpush1.msra.mxu0 %v689
    %3297 = vmatprep.subr.mxu0 %v694
    %3298 = vmatpush1.msra.mxu0 %v693
    %3299 = vmatprep.subr.mxu0 %v698
    %3300 = vmatpush1.msra.mxu0 %v697
    %3301 = vmatprep.subr.mxu0 %v702
    %3302 = vmatpush1.msra.mxu0 %v701
    %3303 = vmatprep.subr.mxu0 %v706
    %3304 = vmatpush1.msra.mxu0 %v705
    %3305 = vmatprep.subr.mxu0 %v710
    %3306 = vmatpush1.msra.mxu0 %v709
    %3307 = vmatprep.subr.mxu0 %v714
    %3308 = vmatpush1.msra.mxu0 %v713
    %3309 = vmatprep.subr.mxu0 %v718
    %3310 = vmatpush1.msra.mxu0 %v717
    %3311 = vmatprep.subr.mxu0 %v722
    %3312 = vmatpush1.msra.mxu0 %v721
    %3313 = vmatprep.subr.mxu0 %v726
    %3314 = vmatpush1.msra.mxu0 %v725
    %3315 = vmatprep.subr.mxu0 %v730
    %3316 = vmatpush1.msra.mxu0 %v729
    %3317 = vmatprep.subr.mxu0 %v734
    %3318 = vmatpush1.msra.mxu0 %v733
    %3319 = vmatprep.subr.mxu0 %v738
    %3320 = vmatpush1.msra.mxu0 %v737
    %3321 = vmatprep.subr.mxu0 %v742
    %3322 = vmatpush1.msra.mxu0 %v741
    %3323 = vmatprep.subr.mxu0 %v746
    %3324 = vmatpush1.msra.mxu0 %v745
    %3325 = vmatprep.subr.mxu0 %v750
    %3326 = vmatpush1.msra.mxu0 %v749
    %3327 = vmatprep.subr.mxu0 %v754
    %3328 = vmatpush1.msra.mxu0 %v753
    %3329 = vmatprep.subr.mxu0 %v758
    %3330 = vmatpush1.msra.mxu0 %v757
    %3331 = vmatprep.subr.mxu0 %v762
    %3332 = vmatpush1.msra.mxu0 %v761
    %3333 = vmatprep.subr.mxu0 %v766
    %3334 = vmatpush1.msra.mxu0 %v765
    %3335 = vmatprep.subr.mxu0 %v770
    %3336 = vmatpush1.msra.mxu0 %v769
    %3337 = vmatprep.subr.mxu0 %v774
    %3338 = vmatpush1.msra.mxu0 %v773
    %3339 = vmatprep.subr.mxu0 %v778
    %3340 = vmatpush1.msra.mxu0 %v777
    %3341 = vmatprep.subr.mxu0 %v782
    %3342 = vmatpush1.msra.mxu0 %v781
    %3343 = vmatprep.subr.mxu0 %v786
    %3344 = vmatpush1.msra.mxu0 %v785
    %3345 = vmatprep.subr.mxu0 %v790
    %3346 = vmatpush1.msra.mxu0 %v789
    %3347 = vmatprep.subr.mxu0 %v794
    %3348 = vmatpush1.msra.mxu0 %v793
    %3349 = vmatprep.subr.mxu0 %v798
    %3350 = vmatpush1.msra.mxu0 %v797
    %3351 = vmatprep.subr.mxu0 %v802
    %3352 = vmatpush1.msra.mxu0 %v801
    %3353 = vmatprep.mubr.f32.mxu0 %v2895
    %3354 = vmatmul.mubr.f32.gmra.mrb[0].mxu0 %v3217
    %v3355 = vpop.f32.mrb[0].mxu0
    %v3356 = vadd.f32 %v806, %v3355
    %v3357 = vpop.f32.mrb[0].mxu0
    %v3358 = vadd.f32 %v807, %v3357
    %3359 = vdwg.mxu0
    %v3360 = vmul.f32 %v3285, 0.5
    %v3361 = vtanh.pop %v3360
    %v3362 = vadd.f32 %v3361, 1.0
    %v3363 = vmul.f32 %v3362, 0.5
    %v3364 = vmul.f32 %v3287, 0.5
    %v3365 = vtanh.pop %v3364
    %v3366 = vadd.f32 %v3365, 1.0
    %v3367 = vmul.f32 %v3366, 0.5
    %v3368 = vtanh.pop %v3356
    %v3369 = vmul.f32 %v3358, 0.5
    %v3370 = vtanh.pop %v3369
    %v3371 = vadd.f32 %v3370, 1.0
    %v3372 = vmul.f32 %v3371, 0.5
    %v3373 = vmul.f32 %v3367, %v2893
    %v3374 = vmul.f32 %v3363, %v3368
    %v3375 = vadd.f32 %v3373, %v3374
    %v3376 = vtanh.pop %v3375
    %v3377 = vmul.f32 %v3372, %v3376
    %s3378 = scalar_lea.vmem [#allocation2], 48
    %v3379 = vld [vmem:[%s3378] sm:$0xff]
    %3380 = vmatprep.subr.mxu0 %v89
    %3381 = vmatpush1.msra.mxu0 %v88
    %3382 = vmatprep.subr.mxu0 %v93
    %3383 = vmatpush1.msra.mxu0 %v92
    %3384 = vmatprep.subr.mxu0 %v97
    %3385 = vmatpush1.msra.mxu0 %v96
    %3386 = vmatprep.subr.mxu0 %v101
    %3387 = vmatpush1.msra.mxu0 %v100
    %3388 = vmatprep.subr.mxu0 %v105
    %3389 = vmatpush1.msra.mxu0 %v104
    %3390 = vmatprep.subr.mxu0 %v109
    %3391 = vmatpush1.msra.mxu0 %v108
    %3392 = vmatprep.subr.mxu0 %v113
    %3393 = vmatpush1.msra.mxu0 %v112
    %3394 = vmatprep.subr.mxu0 %v117
    %3395 = vmatpush1.msra.mxu0 %v116
    %3396 = vmatprep.subr.mxu0 %v121
    %3397 = vmatpush1.msra.mxu0 %v120
    %3398 = vmatprep.subr.mxu0 %v125
    %3399 = vmatpush1.msra.mxu0 %v124
    %3400 = vmatprep.subr.mxu0 %v129
    %3401 = vmatpush1.msra.mxu0 %v128
    %3402 = vmatprep.subr.mxu0 %v133
    %3403 = vmatpush1.msra.mxu0 %v132
    %3404 = vmatprep.subr.mxu0 %v137
    %3405 = vmatpush1.msra.mxu0 %v136
    %3406 = vmatprep.subr.mxu0 %v141
    %3407 = vmatpush1.msra.mxu0 %v140
    %3408 = vmatprep.subr.mxu0 %v145
    %3409 = vmatpush1.msra.mxu0 %v144
    %3410 = vmatprep.subr.mxu0 %v149
    %3411 = vmatpush1.msra.mxu0 %v148
    %3412 = vmatprep.subr.mxu0 %v153
    %3413 = vmatpush1.msra.mxu0 %v152
    %3414 = vmatprep.subr.mxu0 %v157
    %3415 = vmatpush1.msra.mxu0 %v156
    %3416 = vmatprep.subr.mxu0 %v161
    %3417 = vmatpush1.msra.mxu0 %v160
    %3418 = vmatprep.subr.mxu0 %v165
    %3419 = vmatpush1.msra.mxu0 %v164
    %3420 = vmatprep.subr.mxu0 %v169
    %3421 = vmatpush1.msra.mxu0 %v168
    %3422 = vmatprep.subr.mxu0 %v173
    %3423 = vmatpush1.msra.mxu0 %v172
    %3424 = vmatprep.subr.mxu0 %v177
    %3425 = vmatpush1.msra.mxu0 %v176
    %3426 = vmatprep.subr.mxu0 %v181
    %3427 = vmatpush1.msra.mxu0 %v180
    %3428 = vmatprep.subr.mxu0 %v185
    %3429 = vmatpush1.msra.mxu0 %v184
    %3430 = vmatprep.subr.mxu0 %v189
    %3431 = vmatpush1.msra.mxu0 %v188
    %3432 = vmatprep.subr.mxu0 %v193
    %3433 = vmatpush1.msra.mxu0 %v192
    %3434 = vmatprep.subr.mxu0 %v197
    %3435 = vmatpush1.msra.mxu0 %v196
    %3436 = vmatprep.subr.mxu0 %v201
    %3437 = vmatpush1.msra.mxu0 %v200
    %3438 = vmatprep.subr.mxu0 %v205
    %3439 = vmatpush1.msra.mxu0 %v204
    %3440 = vmatprep.subr.mxu0 %v209
    %3441 = vmatpush1.msra.mxu0 %v208
    %3442 = vmatprep.subr.mxu0 %v213
    %3443 = vmatpush1.msra.mxu0 %v212
    %3444 = vmatprep.mubr.f32.mxu0 %v3057
    %3445 = vmatmul.mubr.f32.gmra.mrb[0].mxu0 %v3379
    %v3446 = vpop.f32.mrb[0].mxu0
    %v3447 = vadd.f32 %v216, %v3446
    %v3448 = vpop.f32.mrb[0].mxu0
    %v3449 = vadd.f32 %v217, %v3448
    %3450 = vdwg.mxu0
    %3451 = vmatprep.subr.mxu0 %v91
    %3452 = vmatpush1.msra.mxu0 %v90
    %3453 = vmatprep.subr.mxu0 %v95
    %3454 = vmatpush1.msra.mxu0 %v94
    %3455 = vmatprep.subr.mxu0 %v99
    %3456 = vmatpush1.msra.mxu0 %v98
    %3457 = vmatprep.subr.mxu0 %v103
    %3458 = vmatpush1.msra.mxu0 %v102
    %3459 = vmatprep.subr.mxu0 %v107
    %3460 = vmatpush1.msra.mxu0 %v106
    %3461 = vmatprep.subr.mxu0 %v111
    %3462 = vmatpush1.msra.mxu0 %v110
    %3463 = vmatprep.subr.mxu0 %v115
    %3464 = vmatpush1.msra.mxu0 %v114
    %3465 = vmatprep.subr.mxu0 %v119
    %3466 = vmatpush1.msra.mxu0 %v118
    %3467 = vmatprep.subr.mxu0 %v123
    %3468 = vmatpush1.msra.mxu0 %v122
    %3469 = vmatprep.subr.mxu0 %v127
    %3470 = vmatpush1.msra.mxu0 %v126
    %3471 = vmatprep.subr.mxu0 %v131
    %3472 = vmatpush1.msra.mxu0 %v130
    %3473 = vmatprep.subr.mxu0 %v135
    %3474 = vmatpush1.msra.mxu0 %v134
    %3475 = vmatprep.subr.mxu0 %v139
    %3476 = vmatpush1.msra.mxu0 %v138
    %3477 = vmatprep.subr.mxu0 %v143
    %3478 = vmatpush1.msra.mxu0 %v142
    %3479 = vmatprep.subr.mxu0 %v147
    %3480 = vmatpush1.msra.mxu0 %v146
    %3481 = vmatprep.subr.mxu0 %v151
    %3482 = vmatpush1.msra.mxu0 %v150
    %3483 = vmatprep.subr.mxu0 %v155
    %3484 = vmatpush1.msra.mxu0 %v154
    %3485 = vmatprep.subr.mxu0 %v159
    %3486 = vmatpush1.msra.mxu0 %v158
    %3487 = vmatprep.subr.mxu0 %v163
    %3488 = vmatpush1.msra.mxu0 %v162
    %3489 = vmatprep.subr.mxu0 %v167
    %3490 = vmatpush1.msra.mxu0 %v166
    %3491 = vmatprep.subr.mxu0 %v171
    %3492 = vmatpush1.msra.mxu0 %v170
    %3493 = vmatprep.subr.mxu0 %v175
    %3494 = vmatpush1.msra.mxu0 %v174
    %3495 = vmatprep.subr.mxu0 %v179
    %3496 = vmatpush1.msra.mxu0 %v178
    %3497 = vmatprep.subr.mxu0 %v183
    %3498 = vmatpush1.msra.mxu0 %v182
    %3499 = vmatprep.subr.mxu0 %v187
    %3500 = vmatpush1.msra.mxu0 %v186
    %3501 = vmatprep.subr.mxu0 %v191
    %3502 = vmatpush1.msra.mxu0 %v190
    %3503 = vmatprep.subr.mxu0 %v195
    %3504 = vmatpush1.msra.mxu0 %v194
    %3505 = vmatprep.subr.mxu0 %v199
    %3506 = vmatpush1.msra.mxu0 %v198
    %3507 = vmatprep.subr.mxu0 %v203
    %3508 = vmatpush1.msra.mxu0 %v202
    %3509 = vmatprep.subr.mxu0 %v207
    %3510 = vmatpush1.msra.mxu0 %v206
    %3511 = vmatprep.subr.mxu0 %v211
    %3512 = vmatpush1.msra.mxu0 %v210
    %3513 = vmatprep.subr.mxu0 %v215
    %3514 = vmatpush1.msra.mxu0 %v214
    %3515 = vmatprep.mubr.f32.mxu0 %v3057
    %3516 = vmatmul.mubr.f32.gmra.mrb[0].mxu0 %v3379
    %v3517 = vpop.f32.mrb[0].mxu0
    %v3518 = vadd.f32 %v218, %v3517
    %v3519 = vpop.f32.mrb[0].mxu0
    %v3520 = vadd.f32 %v219, %v3519
    %3521 = vdwg.mxu0
    %v3522 = vmul.f32 %v3447, 0.5
    %v3523 = vtanh.pop %v3522
    %v3524 = vadd.f32 %v3523, 1.0
    %v3525 = vmul.f32 %v3524, 0.5
    %v3526 = vmul.f32 %v3449, 0.5
    %v3527 = vtanh.pop %v3526
    %v3528 = vadd.f32 %v3527, 1.0
    %v3529 = vmul.f32 %v3528, 0.5
    %v3530 = vtanh.pop %v3518
    %v3531 = vmul.f32 %v3520, 0.5
    %v3532 = vtanh.pop %v3531
    %v3533 = vadd.f32 %v3532, 1.0
    %v3534 = vmul.f32 %v3533, 0.5
    %v3535 = vmul.f32 %v3529, %v3055
    %v3536 = vmul.f32 %v3525, %v3530
    %v3537 = vadd.f32 %v3535, %v3536
    %v3538 = vtanh.pop %v3537
    %v3539 = vmul.f32 %v3534, %v3538
    %3540 = vmatprep.subr.mxu0 %v382
    %3541 = vmatpush1.msra.mxu0 %v381
    %3542 = vmatprep.subr.mxu0 %v386
    %3543 = vmatpush1.msra.mxu0 %v385
    %3544 = vmatprep.subr.mxu0 %v390
    %3545 = vmatpush1.msra.mxu0 %v389
    %3546 = vmatprep.subr.mxu0 %v394
    %3547 = vmatpush1.msra.mxu0 %v393
    %3548 = vmatprep.subr.mxu0 %v398
    %3549 = vmatpush1.msra.mxu0 %v397
    %3550 = vmatprep.subr.mxu0 %v402
    %3551 = vmatpush1.msra.mxu0 %v401
    %3552 = vmatprep.subr.mxu0 %v406
    %3553 = vmatpush1.msra.mxu0 %v405
    %3554 = vmatprep.subr.mxu0 %v410
    %3555 = vmatpush1.msra.mxu0 %v409
    %3556 = vmatprep.subr.mxu0 %v414
    %3557 = vmatpush1.msra.mxu0 %v413
    %3558 = vmatprep.subr.mxu0 %v418
    %3559 = vmatpush1.msra.mxu0 %v417
    %3560 = vmatprep.subr.mxu0 %v422
    %3561 = vmatpush1.msra.mxu0 %v421
    %3562 = vmatprep.subr.mxu0 %v426
    %3563 = vmatpush1.msra.mxu0 %v425
    %3564 = vmatprep.subr.mxu0 %v430
    %3565 = vmatpush1.msra.mxu0 %v429
    %3566 = vmatprep.subr.mxu0 %v434
    %3567 = vmatpush1.msra.mxu0 %v433
    %3568 = vmatprep.subr.mxu0 %v438
    %3569 = vmatpush1.msra.mxu0 %v437
    %3570 = vmatprep.subr.mxu0 %v442
    %3571 = vmatpush1.msra.mxu0 %v441
    %3572 = vmatprep.subr.mxu0 %v446
    %3573 = vmatpush1.msra.mxu0 %v445
    %3574 = vmatprep.subr.mxu0 %v450
    %3575 = vmatpush1.msra.mxu0 %v449
    %3576 = vmatprep.subr.mxu0 %v454
    %3577 = vmatpush1.msra.mxu0 %v453
    %3578 = vmatprep.subr.mxu0 %v458
    %3579 = vmatpush1.msra.mxu0 %v457
    %3580 = vmatprep.subr.mxu0 %v462
    %3581 = vmatpush1.msra.mxu0 %v461
    %3582 = vmatprep.subr.mxu0 %v466
    %3583 = vmatpush1.msra.mxu0 %v465
    %3584 = vmatprep.subr.mxu0 %v470
    %3585 = vmatpush1.msra.mxu0 %v469
    %3586 = vmatprep.subr.mxu0 %v474
    %3587 = vmatpush1.msra.mxu0 %v473
    %3588 = vmatprep.subr.mxu0 %v478
    %3589 = vmatpush1.msra.mxu0 %v477
    %3590 = vmatprep.subr.mxu0 %v482
    %3591 = vmatpush1.msra.mxu0 %v481
    %3592 = vmatprep.subr.mxu0 %v486
    %3593 = vmatpush1.msra.mxu0 %v485
    %3594 = vmatprep.subr.mxu0 %v490
    %3595 = vmatpush1.msra.mxu0 %v489
    %3596 = vmatprep.subr.mxu0 %v494
    %3597 = vmatpush1.msra.mxu0 %v493
    %3598 = vmatprep.subr.mxu0 %v498
    %3599 = vmatpush1.msra.mxu0 %v497
    %3600 = vmatprep.subr.mxu0 %v502
    %3601 = vmatpush1.msra.mxu0 %v501
    %3602 = vmatprep.subr.mxu0 %v506
    %3603 = vmatpush1.msra.mxu0 %v505
    %3604 = vmatprep.mubr.f32.mxu0 %v3217
    %3605 = vmatmul.mubr.f32.gmra.mrb[0].mxu0 %v3539
    %v3606 = vpop.f32.mrb[0].mxu0
    %v3607 = vadd.f32 %v510, %v3606
    %v3608 = vpop.f32.mrb[0].mxu0
    %v3609 = vadd.f32 %v511, %v3608
    %3610 = vdwg.mxu0
    %3611 = vmatprep.subr.mxu0 %v384
    %3612 = vmatpush1.msra.mxu0 %v383
    %3613 = vmatprep.subr.mxu0 %v388
    %3614 = vmatpush1.msra.mxu0 %v387
    %3615 = vmatprep.subr.mxu0 %v392
    %3616 = vmatpush1.msra.mxu0 %v391
    %3617 = vmatprep.subr.mxu0 %v396
    %3618 = vmatpush1.msra.mxu0 %v395
    %3619 = vmatprep.subr.mxu0 %v400
    %3620 = vmatpush1.msra.mxu0 %v399
    %3621 = vmatprep.subr.mxu0 %v404
    %3622 = vmatpush1.msra.mxu0 %v403
    %3623 = vmatprep.subr.mxu0 %v408
    %3624 = vmatpush1.msra.mxu0 %v407
    %3625 = vmatprep.subr.mxu0 %v412
    %3626 = vmatpush1.msra.mxu0 %v411
    %3627 = vmatprep.subr.mxu0 %v416
    %3628 = vmatpush1.msra.mxu0 %v415
    %3629 = vmatprep.subr.mxu0 %v420
    %3630 = vmatpush1.msra.mxu0 %v419
    %3631 = vmatprep.subr.mxu0 %v424
    %3632 = vmatpush1.msra.mxu0 %v423
    %3633 = vmatprep.subr.mxu0 %v428
    %3634 = vmatpush1.msra.mxu0 %v427
    %3635 = vmatprep.subr.mxu0 %v432
    %3636 = vmatpush1.msra.mxu0 %v431
    %3637 = vmatprep.subr.mxu0 %v436
    %3638 = vmatpush1.msra.mxu0 %v435
    %3639 = vmatprep.subr.mxu0 %v440
    %3640 = vmatpush1.msra.mxu0 %v439
    %3641 = vmatprep.subr.mxu0 %v444
    %3642 = vmatpush1.msra.mxu0 %v443
    %3643 = vmatprep.subr.mxu0 %v448
    %3644 = vmatpush1.msra.mxu0 %v447
    %3645 = vmatprep.subr.mxu0 %v452
    %3646 = vmatpush1.msra.mxu0 %v451
    %3647 = vmatprep.subr.mxu0 %v456
    %3648 = vmatpush1.msra.mxu0 %v455
    %3649 = vmatprep.subr.mxu0 %v460
    %3650 = vmatpush1.msra.mxu0 %v459
    %3651 = vmatprep.subr.mxu0 %v464
    %3652 = vmatpush1.msra.mxu0 %v463
    %3653 = vmatprep.subr.mxu0 %v468
    %3654 = vmatpush1.msra.mxu0 %v467
    %3655 = vmatprep.subr.mxu0 %v472
    %3656 = vmatpush1.msra.mxu0 %v471
    %3657 = vmatprep.subr.mxu0 %v476
    %3658 = vmatpush1.msra.mxu0 %v475
    %3659 = vmatprep.subr.mxu0 %v480
    %3660 = vmatpush1.msra.mxu0 %v479
    %3661 = vmatprep.subr.mxu0 %v484
    %3662 = vmatpush1.msra.mxu0 %v483
    %3663 = vmatprep.subr.mxu0 %v488
    %3664 = vmatpush1.msra.mxu0 %v487
    %3665 = vmatprep.subr.mxu0 %v492
    %3666 = vmatpush1.msra.mxu0 %v491
    %3667 = vmatprep.subr.mxu0 %v496
    %3668 = vmatpush1.msra.mxu0 %v495
    %3669 = vmatprep.subr.mxu0 %v500
    %3670 = vmatpush1.msra.mxu0 %v499
    %3671 = vmatprep.subr.mxu0 %v504
    %3672 = vmatpush1.msra.mxu0 %v503
    %3673 = vmatprep.subr.mxu0 %v508
    %3674 = vmatpush1.msra.mxu0 %v507
    %3675 = vmatprep.mubr.f32.mxu0 %v3217
    %3676 = vmatmul.mubr.f32.gmra.mrb[0].mxu0 %v3539
    %v3677 = vpop.f32.mrb[0].mxu0
    %v3678 = vadd.f32 %v512, %v3677
    %v3679 = vpop.f32.mrb[0].mxu0
    %v3680 = vadd.f32 %v513, %v3679
    %3681 = vdwg.mxu0
    %v3682 = vmul.f32 %v3607, 0.5
    %v3683 = vtanh.pop %v3682
    %v3684 = vadd.f32 %v3683, 1.0
    %v3685 = vmul.f32 %v3684, 0.5
    %v3686 = vmul.f32 %v3609, 0.5
    %v3687 = vtanh.pop %v3686
    %v3688 = vadd.f32 %v3687, 1.0
    %v3689 = vmul.f32 %v3688, 0.5
    %v3690 = vtanh.pop %v3678
    %v3691 = vmul.f32 %v3680, 0.5
    %v3692 = vtanh.pop %v3691
    %v3693 = vadd.f32 %v3692, 1.0
    %v3694 = vmul.f32 %v3693, 0.5
    %v3695 = vmul.f32 %v3689, %v3215
    %v3696 = vmul.f32 %v3685, %v3690
    %v3697 = vadd.f32 %v3695, %v3696
    %v3698 = vtanh.pop %v3697
    %v3699 = vmul.f32 %v3694, %v3698
    %3700 = vmatprep.subr.mxu0 %v676
    %3701 = vmatpush1.msra.mxu0 %v675
    %3702 = vmatprep.subr.mxu0 %v680
    %3703 = vmatpush1.msra.mxu0 %v679
    %3704 = vmatprep.subr.mxu0 %v684
    %3705 = vmatpush1.msra.mxu0 %v683
    %3706 = vmatprep.subr.mxu0 %v688
    %3707 = vmatpush1.msra.mxu0 %v687
    %3708 = vmatprep.subr.mxu0 %v692
    %3709 = vmatpush1.msra.mxu0 %v691
    %3710 = vmatprep.subr.mxu0 %v696
    %3711 = vmatpush1.msra.mxu0 %v695
    %3712 = vmatprep.subr.mxu0 %v700
    %3713 = vmatpush1.msra.mxu0 %v699
    %3714 = vmatprep.subr.mxu0 %v704
    %3715 = vmatpush1.msra.mxu0 %v703
    %3716 = vmatprep.subr.mxu0 %v708
    %3717 = vmatpush1.msra.mxu0 %v707
    %3718 = vmatprep.subr.mxu0 %v712
    %3719 = vmatpush1.msra.mxu0 %v711
    %3720 = vmatprep.subr.mxu0 %v716
    %3721 = vmatpush1.msra.mxu0 %v715
    %3722 = vmatprep.subr.mxu0 %v720
    %3723 = vmatpush1.msra.mxu0 %v719
    %3724 = vmatprep.subr.mxu0 %v724
    %3725 = vmatpush1.msra.mxu0 %v723
    %3726 = vmatprep.subr.mxu0 %v728
    %3727 = vmatpush1.msra.mxu0 %v727
    %3728 = vmatprep.subr.mxu0 %v732
    %3729 = vmatpush1.msra.mxu0 %v731
    %3730 = vmatprep.subr.mxu0 %v736
    %3731 = vmatpush1.msra.mxu0 %v735
    %3732 = vmatprep.subr.mxu0 %v740
    %3733 = vmatpush1.msra.mxu0 %v739
    %3734 = vmatprep.subr.mxu0 %v744
    %3735 = vmatpush1.msra.mxu0 %v743
    %3736 = vmatprep.subr.mxu0 %v748
    %3737 = vmatpush1.msra.mxu0 %v747
    %3738 = vmatprep.subr.mxu0 %v752
    %3739 = vmatpush1.msra.mxu0 %v751
    %3740 = vmatprep.subr.mxu0 %v756
    %3741 = vmatpush1.msra.mxu0 %v755
    %3742 = vmatprep.subr.mxu0 %v760
    %3743 = vmatpush1.msra.mxu0 %v759
    %3744 = vmatprep.subr.mxu0 %v764
    %3745 = vmatpush1.msra.mxu0 %v763
    %3746 = vmatprep.subr.mxu0 %v768
    %3747 = vmatpush1.msra.mxu0 %v767
    %3748 = vmatprep.subr.mxu0 %v772
    %3749 = vmatpush1.msra.mxu0 %v771
    %3750 = vmatprep.subr.mxu0 %v776
    %3751 = vmatpush1.msra.mxu0 %v775
    %3752 = vmatprep.subr.mxu0 %v780
    %3753 = vmatpush1.msra.mxu0 %v779
    %3754 = vmatprep.subr.mxu0 %v784
    %3755 = vmatpush1.msra.mxu0 %v783
    %3756 = vmatprep.subr.mxu0 %v788
    %3757 = vmatpush1.msra.mxu0 %v787
    %3758 = vmatprep.subr.mxu0 %v792
    %3759 = vmatpush1.msra.mxu0 %v791
    %3760 = vmatprep.subr.mxu0 %v796
    %3761 = vmatpush1.msra.mxu0 %v795
    %3762 = vmatprep.subr.mxu0 %v800
    %3763 = vmatpush1.msra.mxu0 %v799
    %3764 = vmatprep.mubr.f32.mxu0 %v3377
    %3765 = vmatmul.mubr.f32.gmra.mrb[0].mxu0 %v3699
    %v3766 = vpop.f32.mrb[0].mxu0
    %v3767 = vadd.f32 %v804, %v3766
    %v3768 = vpop.f32.mrb[0].mxu0
    %v3769 = vadd.f32 %v805, %v3768
    %3770 = vdwg.mxu0
    %3771 = vmatprep.subr.mxu0 %v678
    %3772 = vmatpush1.msra.mxu0 %v677
    %3773 = vmatprep.subr.mxu0 %v682
    %3774 = vmatpush1.msra.mxu0 %v681
    %3775 = vmatprep.subr.mxu0 %v686
    %3776 = vmatpush1.msra.mxu0 %v685
    %3777 = vmatprep.subr.mxu0 %v690
    %3778 = vmatpush1.msra.mxu0 %v689
    %3779 = vmatprep.subr.mxu0 %v694
    %3780 = vmatpush1.msra.mxu0 %v693
    %3781 = vmatprep.subr.mxu0 %v698
    %3782 = vmatpush1.msra.mxu0 %v697
    %3783 = vmatprep.subr.mxu0 %v702
    %3784 = vmatpush1.msra.mxu0 %v701
    %3785 = vmatprep.subr.mxu0 %v706
    %3786 = vmatpush1.msra.mxu0 %v705
    %3787 = vmatprep.subr.mxu0 %v710
    %3788 = vmatpush1.msra.mxu0 %v709
    %3789 = vmatprep.subr.mxu0 %v714
    %3790 = vmatpush1.msra.mxu0 %v713
    %3791 = vmatprep.subr.mxu0 %v718
    %3792 = vmatpush1.msra.mxu0 %v717
    %3793 = vmatprep.subr.mxu0 %v722
    %3794 = vmatpush1.msra.mxu0 %v721
    %3795 = vmatprep.subr.mxu0 %v726
    %3796 = vmatpush1.msra.mxu0 %v725
    %3797 = vmatprep.subr.mxu0 %v730
    %3798 = vmatpush1.msra.mxu0 %v729
    %3799 = vmatprep.subr.mxu0 %v734
    %3800 = vmatpush1.msra.mxu0 %v733
    %3801 = vmatprep.subr.mxu0 %v738
    %3802 = vmatpush1.msra.mxu0 %v737
    %3803 = vmatprep.subr.mxu0 %v742
    %3804 = vmatpush1.msra.mxu0 %v741
    %3805 = vmatprep.subr.mxu0 %v746
    %3806 = vmatpush1.msra.mxu0 %v745
    %3807 = vmatprep.subr.mxu0 %v750
    %3808 = vmatpush1.msra.mxu0 %v749
    %3809 = vmatprep.subr.mxu0 %v754
    %3810 = vmatpush1.msra.mxu0 %v753
    %3811 = vmatprep.subr.mxu0 %v758
    %3812 = vmatpush1.msra.mxu0 %v757
    %3813 = vmatprep.subr.mxu0 %v762
    %3814 = vmatpush1.msra.mxu0 %v761
    %3815 = vmatprep.subr.mxu0 %v766
    %3816 = vmatpush1.msra.mxu0 %v765
    %3817 = vmatprep.subr.mxu0 %v770
    %3818 = vmatpush1.msra.mxu0 %v769
    %3819 = vmatprep.subr.mxu0 %v774
    %3820 = vmatpush1.msra.mxu0 %v773
    %3821 = vmatprep.subr.mxu0 %v778
    %3822 = vmatpush1.msra.mxu0 %v777
    %3823 = vmatprep.subr.mxu0 %v782
    %3824 = vmatpush1.msra.mxu0 %v781
    %3825 = vmatprep.subr.mxu0 %v786
    %3826 = vmatpush1.msra.mxu0 %v785
    %3827 = vmatprep.subr.mxu0 %v790
    %3828 = vmatpush1.msra.mxu0 %v789
    %3829 = vmatprep.subr.mxu0 %v794
    %3830 = vmatpush1.msra.mxu0 %v793
    %3831 = vmatprep.subr.mxu0 %v798
    %3832 = vmatpush1.msra.mxu0 %v797
    %3833 = vmatprep.subr.mxu0 %v802
    %3834 = vmatpush1.msra.mxu0 %v801
    %3835 = vmatprep.mubr.f32.mxu0 %v3377
    %3836 = vmatmul.mubr.f32.gmra.mrb[0].mxu0 %v3699
    %v3837 = vpop.f32.mrb[0].mxu0
    %v3838 = vadd.f32 %v806, %v3837
    %v3839 = vpop.f32.mrb[0].mxu0
    %v3840 = vadd.f32 %v807, %v3839
    %3841 = vdwg.mxu0
    %v3842 = vmul.f32 %v3767, 0.5
    %v3843 = vtanh.pop %v3842
    %v3844 = vadd.f32 %v3843, 1.0
    %v3845 = vmul.f32 %v3844, 0.5
    %v3846 = vmul.f32 %v3769, 0.5
    %v3847 = vtanh.pop %v3846
    %v3848 = vadd.f32 %v3847, 1.0
    %v3849 = vmul.f32 %v3848, 0.5
    %v3850 = vtanh.pop %v3838
    %v3851 = vmul.f32 %v3840, 0.5
    %v3852 = vtanh.pop %v3851
    %v3853 = vadd.f32 %v3852, 1.0
    %v3854 = vmul.f32 %v3853, 0.5
    %v3855 = vmul.f32 %v3849, %v3375
    %v3856 = vmul.f32 %v3845, %v3850
    %v3857 = vadd.f32 %v3855, %v3856
    %v3858 = vtanh.pop %v3857
    %v3859 = vmul.f32 %v3854, %v3858
    %s3860 = scalar_lea.vmem [#allocation2], 56
    %v3861 = vld [vmem:[%s3860] sm:$0xff]
    %3862 = vmatprep.subr.mxu0 %v89
    %3863 = vmatpush1.msra.mxu0 %v88
    %3864 = vmatprep.subr.mxu0 %v93
    %3865 = vmatpush1.msra.mxu0 %v92
    %3866 = vmatprep.subr.mxu0 %v97
    %3867 = vmatpush1.msra.mxu0 %v96
    %3868 = vmatprep.subr.mxu0 %v101
    %3869 = vmatpush1.msra.mxu0 %v100
    %3870 = vmatprep.subr.mxu0 %v105
    %3871 = vmatpush1.msra.mxu0 %v104
    %3872 = vmatprep.subr.mxu0 %v109
    %3873 = vmatpush1.msra.mxu0 %v108
    %3874 = vmatprep.subr.mxu0 %v113
    %3875 = vmatpush1.msra.mxu0 %v112
    %3876 = vmatprep.subr.mxu0 %v117
    %3877 = vmatpush1.msra.mxu0 %v116
    %3878 = vmatprep.subr.mxu0 %v121
    %3879 = vmatpush1.msra.mxu0 %v120
    %3880 = vmatprep.subr.mxu0 %v125
    %3881 = vmatpush1.msra.mxu0 %v124
    %3882 = vmatprep.subr.mxu0 %v129
    %3883 = vmatpush1.msra.mxu0 %v128
    %3884 = vmatprep.subr.mxu0 %v133
    %3885 = vmatpush1.msra.mxu0 %v132
    %3886 = vmatprep.subr.mxu0 %v137
    %3887 = vmatpush1.msra.mxu0 %v136
    %3888 = vmatprep.subr.mxu0 %v141
    %3889 = vmatpush1.msra.mxu0 %v140
    %3890 = vmatprep.subr.mxu0 %v145
    %3891 = vmatpush1.msra.mxu0 %v144
    %3892 = vmatprep.subr.mxu0 %v149
    %3893 = vmatpush1.msra.mxu0 %v148
    %3894 = vmatprep.subr.mxu0 %v153
    %3895 = vmatpush1.msra.mxu0 %v152
    %3896 = vmatprep.subr.mxu0 %v157
    %3897 = vmatpush1.msra.mxu0 %v156
    %3898 = vmatprep.subr.mxu0 %v161
    %3899 = vmatpush1.msra.mxu0 %v160
    %3900 = vmatprep.subr.mxu0 %v165
    %3901 = vmatpush1.msra.mxu0 %v164
    %3902 = vmatprep.subr.mxu0 %v169
    %3903 = vmatpush1.msra.mxu0 %v168
    %3904 = vmatprep.subr.mxu0 %v173
    %3905 = vmatpush1.msra.mxu0 %v172
    %3906 = vmatprep.subr.mxu0 %v177
    %3907 = vmatpush1.msra.mxu0 %v176
    %3908 = vmatprep.subr.mxu0 %v181
    %3909 = vmatpush1.msra.mxu0 %v180
    %3910 = vmatprep.subr.mxu0 %v185
    %3911 = vmatpush1.msra.mxu0 %v184
    %3912 = vmatprep.subr.mxu0 %v189
    %3913 = vmatpush1.msra.mxu0 %v188
    %3914 = vmatprep.subr.mxu0 %v193
    %3915 = vmatpush1.msra.mxu0 %v192
    %3916 = vmatprep.subr.mxu0 %v197
    %3917 = vmatpush1.msra.mxu0 %v196
    %3918 = vmatprep.subr.mxu0 %v201
    %3919 = vmatpush1.msra.mxu0 %v200
    %3920 = vmatprep.subr.mxu0 %v205
    %3921 = vmatpush1.msra.mxu0 %v204
    %3922 = vmatprep.subr.mxu0 %v209
    %3923 = vmatpush1.msra.mxu0 %v208
    %3924 = vmatprep.subr.mxu0 %v213
    %3925 = vmatpush1.msra.mxu0 %v212
    %3926 = vmatprep.mubr.f32.mxu0 %v3539
    %3927 = vmatmul.mubr.f32.gmra.mrb[0].mxu0 %v3861
    %v3928 = vpop.f32.mrb[0].mxu0
    %v3929 = vadd.f32 %v216, %v3928
    %v3930 = vpop.f32.mrb[0].mxu0
    %v3931 = vadd.f32 %v217, %v3930
    %3932 = vdwg.mxu0
    %3933 = vmatprep.subr.mxu0 %v91
    %3934 = vmatpush1.msra.mxu0 %v90
    %3935 = vmatprep.subr.mxu0 %v95
    %3936 = vmatpush1.msra.mxu0 %v94
    %3937 = vmatprep.subr.mxu0 %v99
    %3938 = vmatpush1.msra.mxu0 %v98
    %3939 = vmatprep.subr.mxu0 %v103
    %3940 = vmatpush1.msra.mxu0 %v102
    %3941 = vmatprep.subr.mxu0 %v107
    %3942 = vmatpush1.msra.mxu0 %v106
    %3943 = vmatprep.subr.mxu0 %v111
    %3944 = vmatpush1.msra.mxu0 %v110
    %3945 = vmatprep.subr.mxu0 %v115
    %3946 = vmatpush1.msra.mxu0 %v114
    %3947 = vmatprep.subr.mxu0 %v119
    %3948 = vmatpush1.msra.mxu0 %v118
    %3949 = vmatprep.subr.mxu0 %v123
    %3950 = vmatpush1.msra.mxu0 %v122
    %3951 = vmatprep.subr.mxu0 %v127
    %3952 = vmatpush1.msra.mxu0 %v126
    %3953 = vmatprep.subr.mxu0 %v131
    %3954 = vmatpush1.msra.mxu0 %v130
    %3955 = vmatprep.subr.mxu0 %v135
    %3956 = vmatpush1.msra.mxu0 %v134
    %3957 = vmatprep.subr.mxu0 %v139
    %3958 = vmatpush1.msra.mxu0 %v138
    %3959 = vmatprep.subr.mxu0 %v143
    %3960 = vmatpush1.msra.mxu0 %v142
    %3961 = vmatprep.subr.mxu0 %v147
    %3962 = vmatpush1.msra.mxu0 %v146
    %3963 = vmatprep.subr.mxu0 %v151
    %3964 = vmatpush1.msra.mxu0 %v150
    %3965 = vmatprep.subr.mxu0 %v155
    %3966 = vmatpush1.msra.mxu0 %v154
    %3967 = vmatprep.subr.mxu0 %v159
    %3968 = vmatpush1.msra.mxu0 %v158
    %3969 = vmatprep.subr.mxu0 %v163
    %3970 = vmatpush1.msra.mxu0 %v162
    %3971 = vmatprep.subr.mxu0 %v167
    %3972 = vmatpush1.msra.mxu0 %v166
    %3973 = vmatprep.subr.mxu0 %v171
    %3974 = vmatpush1.msra.mxu0 %v170
    %3975 = vmatprep.subr.mxu0 %v175
    %3976 = vmatpush1.msra.mxu0 %v174
    %3977 = vmatprep.subr.mxu0 %v179
    %3978 = vmatpush1.msra.mxu0 %v178
    %3979 = vmatprep.subr.mxu0 %v183
    %3980 = vmatpush1.msra.mxu0 %v182
    %3981 = vmatprep.subr.mxu0 %v187
    %3982 = vmatpush1.msra.mxu0 %v186
    %3983 = vmatprep.subr.mxu0 %v191
    %3984 = vmatpush1.msra.mxu0 %v190
    %3985 = vmatprep.subr.mxu0 %v195
    %3986 = vmatpush1.msra.mxu0 %v194
    %3987 = vmatprep.subr.mxu0 %v199
    %3988 = vmatpush1.msra.mxu0 %v198
    %3989 = vmatprep.subr.mxu0 %v203
    %3990 = vmatpush1.msra.mxu0 %v202
    %3991 = vmatprep.subr.mxu0 %v207
    %3992 = vmatpush1.msra.mxu0 %v206
    %3993 = vmatprep.subr.mxu0 %v211
    %3994 = vmatpush1.msra.mxu0 %v210
    %3995 = vmatprep.subr.mxu0 %v215
    %3996 = vmatpush1.msra.mxu0 %v214
    %3997 = vmatprep.mubr.f32.mxu0 %v3539
    %3998 = vmatmul.mubr.f32.gmra.mrb[0].mxu0 %v3861
    %v3999 = vpop.f32.mrb[0].mxu0
    %v4000 = vadd.f32 %v218, %v3999
    %v4001 = vpop.f32.mrb[0].mxu0
    %v4002 = vadd.f32 %v219, %v4001
    %4003 = vdwg.mxu0
    %v4004 = vmul.f32 %v3929, 0.5
    %v4005 = vtanh.pop %v4004
    %v4006 = vadd.f32 %v4005, 1.0
    %v4007 = vmul.f32 %v4006, 0.5
    %v4008 = vmul.f32 %v3931, 0.5
    %v4009 = vtanh.pop %v4008
    %v4010 = vadd.f32 %v4009, 1.0
    %v4011 = vmul.f32 %v4010, 0.5
    %v4012 = vtanh.pop %v4000
    %v4013 = vmul.f32 %v4002, 0.5
    %v4014 = vtanh.pop %v4013
    %v4015 = vadd.f32 %v4014, 1.0
    %v4016 = vmul.f32 %v4015, 0.5
    %v4017 = vmul.f32 %v4011, %v3537
    %v4018 = vmul.f32 %v4007, %v4012
    %v4019 = vadd.f32 %v4017, %v4018
    %v4020 = vtanh.pop %v4019
    %v4021 = vmul.f32 %v4016, %v4020
    %4022 = vmatprep.subr.mxu0 %v382
    %4023 = vmatpush1.msra.mxu0 %v381
    %4024 = vmatprep.subr.mxu0 %v386
    %4025 = vmatpush1.msra.mxu0 %v385
    %4026 = vmatprep.subr.mxu0 %v390
    %4027 = vmatpush1.msra.mxu0 %v389
    %4028 = vmatprep.subr.mxu0 %v394
    %4029 = vmatpush1.msra.mxu0 %v393
    %4030 = vmatprep.subr.mxu0 %v398
    %4031 = vmatpush1.msra.mxu0 %v397
    %4032 = vmatprep.subr.mxu0 %v402
    %4033 = vmatpush1.msra.mxu0 %v401
    %4034 = vmatprep.subr.mxu0 %v406
    %4035 = vmatpush1.msra.mxu0 %v405
    %4036 = vmatprep.subr.mxu0 %v410
    %4037 = vmatpush1.msra.mxu0 %v409
    %4038 = vmatprep.subr.mxu0 %v414
    %4039 = vmatpush1.msra.mxu0 %v413
    %4040 = vmatprep.subr.mxu0 %v418
    %4041 = vmatpush1.msra.mxu0 %v417
    %4042 = vmatprep.subr.mxu0 %v422
    %4043 = vmatpush1.msra.mxu0 %v421
    %4044 = vmatprep.subr.mxu0 %v426
    %4045 = vmatpush1.msra.mxu0 %v425
    %4046 = vmatprep.subr.mxu0 %v430
    %4047 = vmatpush1.msra.mxu0 %v429
    %4048 = vmatprep.subr.mxu0 %v434
    %4049 = vmatpush1.msra.mxu0 %v433
    %4050 = vmatprep.subr.mxu0 %v438
    %4051 = vmatpush1.msra.mxu0 %v437
    %4052 = vmatprep.subr.mxu0 %v442
    %4053 = vmatpush1.msra.mxu0 %v441
    %4054 = vmatprep.subr.mxu0 %v446
    %4055 = vmatpush1.msra.mxu0 %v445
    %4056 = vmatprep.subr.mxu0 %v450
    %4057 = vmatpush1.msra.mxu0 %v449
    %4058 = vmatprep.subr.mxu0 %v454
    %4059 = vmatpush1.msra.mxu0 %v453
    %4060 = vmatprep.subr.mxu0 %v458
    %4061 = vmatpush1.msra.mxu0 %v457
    %4062 = vmatprep.subr.mxu0 %v462
    %4063 = vmatpush1.msra.mxu0 %v461
    %4064 = vmatprep.subr.mxu0 %v466
    %4065 = vmatpush1.msra.mxu0 %v465
    %4066 = vmatprep.subr.mxu0 %v470
    %4067 = vmatpush1.msra.mxu0 %v469
    %4068 = vmatprep.subr.mxu0 %v474
    %4069 = vmatpush1.msra.mxu0 %v473
    %4070 = vmatprep.subr.mxu0 %v478
    %4071 = vmatpush1.msra.mxu0 %v477
    %4072 = vmatprep.subr.mxu0 %v482
    %4073 = vmatpush1.msra.mxu0 %v481
    %4074 = vmatprep.subr.mxu0 %v486
    %4075 = vmatpush1.msra.mxu0 %v485
    %4076 = vmatprep.subr.mxu0 %v490
    %4077 = vmatpush1.msra.mxu0 %v489
    %4078 = vmatprep.subr.mxu0 %v494
    %4079 = vmatpush1.msra.mxu0 %v493
    %4080 = vmatprep.subr.mxu0 %v498
    %4081 = vmatpush1.msra.mxu0 %v497
    %4082 = vmatprep.subr.mxu0 %v502
    %4083 = vmatpush1.msra.mxu0 %v501
    %4084 = vmatprep.subr.mxu0 %v506
    %4085 = vmatpush1.msra.mxu0 %v505
    %4086 = vmatprep.mubr.f32.mxu0 %v3699
    %4087 = vmatmul.mubr.f32.gmra.mrb[0].mxu0 %v4021
    %v4088 = vpop.f32.mrb[0].mxu0
    %v4089 = vadd.f32 %v510, %v4088
    %v4090 = vpop.f32.mrb[0].mxu0
    %v4091 = vadd.f32 %v511, %v4090
    %4092 = vdwg.mxu0
    %4093 = vmatprep.subr.mxu0 %v384
    %4094 = vmatpush1.msra.mxu0 %v383
    %4095 = vmatprep.subr.mxu0 %v388
    %4096 = vmatpush1.msra.mxu0 %v387
    %4097 = vmatprep.subr.mxu0 %v392
    %4098 = vmatpush1.msra.mxu0 %v391
    %4099 = vmatprep.subr.mxu0 %v396
    %4100 = vmatpush1.msra.mxu0 %v395
    %4101 = vmatprep.subr.mxu0 %v400
    %4102 = vmatpush1.msra.mxu0 %v399
    %4103 = vmatprep.subr.mxu0 %v404
    %4104 = vmatpush1.msra.mxu0 %v403
    %4105 = vmatprep.subr.mxu0 %v408
    %4106 = vmatpush1.msra.mxu0 %v407
    %4107 = vmatprep.subr.mxu0 %v412
    %4108 = vmatpush1.msra.mxu0 %v411
    %4109 = vmatprep.subr.mxu0 %v416
    %4110 = vmatpush1.msra.mxu0 %v415
    %4111 = vmatprep.subr.mxu0 %v420
    %4112 = vmatpush1.msra.mxu0 %v419
    %4113 = vmatprep.subr.mxu0 %v424
    %4114 = vmatpush1.msra.mxu0 %v423
    %4115 = vmatprep.subr.mxu0 %v428
    %4116 = vmatpush1.msra.mxu0 %v427
    %4117 = vmatprep.subr.mxu0 %v432
    %4118 = vmatpush1.msra.mxu0 %v431
    %4119 = vmatprep.subr.mxu0 %v436
    %4120 = vmatpush1.msra.mxu0 %v435
    %4121 = vmatprep.subr.mxu0 %v440
    %4122 = vmatpush1.msra.mxu0 %v439
    %4123 = vmatprep.subr.mxu0 %v444
    %4124 = vmatpush1.msra.mxu0 %v443
    %4125 = vmatprep.subr.mxu0 %v448
    %4126 = vmatpush1.msra.mxu0 %v447
    %4127 = vmatprep.subr.mxu0 %v452
    %4128 = vmatpush1.msra.mxu0 %v451
    %4129 = vmatprep.subr.mxu0 %v456
    %4130 = vmatpush1.msra.mxu0 %v455
    %4131 = vmatprep.subr.mxu0 %v460
    %4132 = vmatpush1.msra.mxu0 %v459
    %4133 = vmatprep.subr.mxu0 %v464
    %4134 = vmatpush1.msra.mxu0 %v463
    %4135 = vmatprep.subr.mxu0 %v468
    %4136 = vmatpush1.msra.mxu0 %v467
    %4137 = vmatprep.subr.mxu0 %v472
    %4138 = vmatpush1.msra.mxu0 %v471
    %4139 = vmatprep.subr.mxu0 %v476
    %4140 = vmatpush1.msra.mxu0 %v475
    %4141 = vmatprep.subr.mxu0 %v480
    %4142 = vmatpush1.msra.mxu0 %v479
    %4143 = vmatprep.subr.mxu0 %v484
    %4144 = vmatpush1.msra.mxu0 %v483
    %4145 = vmatprep.subr.mxu0 %v488
    %4146 = vmatpush1.msra.mxu0 %v487
    %4147 = vmatprep.subr.mxu0 %v492
    %4148 = vmatpush1.msra.mxu0 %v491
    %4149 = vmatprep.subr.mxu0 %v496
    %4150 = vmatpush1.msra.mxu0 %v495
    %4151 = vmatprep.subr.mxu0 %v500
    %4152 = vmatpush1.msra.mxu0 %v499
    %4153 = vmatprep.subr.mxu0 %v504
    %4154 = vmatpush1.msra.mxu0 %v503
    %4155 = vmatprep.subr.mxu0 %v508
    %4156 = vmatpush1.msra.mxu0 %v507
    %4157 = vmatprep.mubr.f32.mxu0 %v3699
    %4158 = vmatmul.mubr.f32.gmra.mrb[0].mxu0 %v4021
    %v4159 = vpop.f32.mrb[0].mxu0
    %v4160 = vadd.f32 %v512, %v4159
    %v4161 = vpop.f32.mrb[0].mxu0
    %v4162 = vadd.f32 %v513, %v4161
    %4163 = vdwg.mxu0
    %v4164 = vmul.f32 %v4089, 0.5
    %v4165 = vtanh.pop %v4164
    %v4166 = vadd.f32 %v4165, 1.0
    %v4167 = vmul.f32 %v4166, 0.5
    %v4168 = vmul.f32 %v4091, 0.5
    %v4169 = vtanh.pop %v4168
    %v4170 = vadd.f32 %v4169, 1.0
    %v4171 = vmul.f32 %v4170, 0.5
    %v4172 = vtanh.pop %v4160
    %v4173 = vmul.f32 %v4162, 0.5
    %v4174 = vtanh.pop %v4173
    %v4175 = vadd.f32 %v4174, 1.0
    %v4176 = vmul.f32 %v4175, 0.5
    %v4177 = vmul.f32 %v4171, %v3697
    %v4178 = vmul.f32 %v4167, %v4172
    %v4179 = vadd.f32 %v4177, %v4178
    %v4180 = vtanh.pop %v4179
    %v4181 = vmul.f32 %v4176, %v4180
    %4182 = vmatprep.subr.mxu0 %v676
    %4183 = vmatpush1.msra.mxu0 %v675
    %4184 = vmatprep.subr.mxu0 %v680
    %4185 = vmatpush1.msra.mxu0 %v679
    %4186 = vmatprep.subr.mxu0 %v684
    %4187 = vmatpush1.msra.mxu0 %v683
    %4188 = vmatprep.subr.mxu0 %v688
    %4189 = vmatpush1.msra.mxu0 %v687
    %4190 = vmatprep.subr.mxu0 %v692
    %4191 = vmatpush1.msra.mxu0 %v691
    %4192 = vmatprep.subr.mxu0 %v696
    %4193 = vmatpush1.msra.mxu0 %v695
    %4194 = vmatprep.subr.mxu0 %v700
    %4195 = vmatpush1.msra.mxu0 %v699
    %4196 = vmatprep.subr.mxu0 %v704
    %4197 = vmatpush1.msra.mxu0 %v703
    %4198 = vmatprep.subr.mxu0 %v708
    %4199 = vmatpush1.msra.mxu0 %v707
    %4200 = vmatprep.subr.mxu0 %v712
    %4201 = vmatpush1.msra.mxu0 %v711
    %4202 = vmatprep.subr.mxu0 %v716
    %4203 = vmatpush1.msra.mxu0 %v715
    %4204 = vmatprep.subr.mxu0 %v720
    %4205 = vmatpush1.msra.mxu0 %v719
    %4206 = vmatprep.subr.mxu0 %v724
    %4207 = vmatpush1.msra.mxu0 %v723
    %4208 = vmatprep.subr.mxu0 %v728
    %4209 = vmatpush1.msra.mxu0 %v727
    %4210 = vmatprep.subr.mxu0 %v732
    %4211 = vmatpush1.msra.mxu0 %v731
    %4212 = vmatprep.subr.mxu0 %v736
    %4213 = vmatpush1.msra.mxu0 %v735
    %4214 = vmatprep.subr.mxu0 %v740
    %4215 = vmatpush1.msra.mxu0 %v739
    %4216 = vmatprep.subr.mxu0 %v744
    %4217 = vmatpush1.msra.mxu0 %v743
    %4218 = vmatprep.subr.mxu0 %v748
    %4219 = vmatpush1.msra.mxu0 %v747
    %4220 = vmatprep.subr.mxu0 %v752
    %4221 = vmatpush1.msra.mxu0 %v751
    %4222 = vmatprep.subr.mxu0 %v756
    %4223 = vmatpush1.msra.mxu0 %v755
    %4224 = vmatprep.subr.mxu0 %v760
    %4225 = vmatpush1.msra.mxu0 %v759
    %4226 = vmatprep.subr.mxu0 %v764
    %4227 = vmatpush1.msra.mxu0 %v763
    %4228 = vmatprep.subr.mxu0 %v768
    %4229 = vmatpush1.msra.mxu0 %v767
    %4230 = vmatprep.subr.mxu0 %v772
    %4231 = vmatpush1.msra.mxu0 %v771
    %4232 = vmatprep.subr.mxu0 %v776
    %4233 = vmatpush1.msra.mxu0 %v775
    %4234 = vmatprep.subr.mxu0 %v780
    %4235 = vmatpush1.msra.mxu0 %v779
    %4236 = vmatprep.subr.mxu0 %v784
    %4237 = vmatpush1.msra.mxu0 %v783
    %4238 = vmatprep.subr.mxu0 %v788
    %4239 = vmatpush1.msra.mxu0 %v787
    %4240 = vmatprep.subr.mxu0 %v792
    %4241 = vmatpush1.msra.mxu0 %v791
    %4242 = vmatprep.subr.mxu0 %v796
    %4243 = vmatpush1.msra.mxu0 %v795
    %4244 = vmatprep.subr.mxu0 %v800
    %4245 = vmatpush1.msra.mxu0 %v799
    %4246 = vmatprep.mubr.f32.mxu0 %v3859
    %4247 = vmatmul.mubr.f32.gmra.mrb[0].mxu0 %v4181
    %v4248 = vpop.f32.mrb[0].mxu0
    %v4249 = vadd.f32 %v804, %v4248
    %v4250 = vpop.f32.mrb[0].mxu0
    %v4251 = vadd.f32 %v805, %v4250
    %4252 = vdwg.mxu0
    %4253 = vmatprep.subr.mxu0 %v678
    %4254 = vmatpush1.msra.mxu0 %v677
    %4255 = vmatprep.subr.mxu0 %v682
    %4256 = vmatpush1.msra.mxu0 %v681
    %4257 = vmatprep.subr.mxu0 %v686
    %4258 = vmatpush1.msra.mxu0 %v685
    %4259 = vmatprep.subr.mxu0 %v690
    %4260 = vmatpush1.msra.mxu0 %v689
    %4261 = vmatprep.subr.mxu0 %v694
    %4262 = vmatpush1.msra.mxu0 %v693
    %4263 = vmatprep.subr.mxu0 %v698
    %4264 = vmatpush1.msra.mxu0 %v697
    %4265 = vmatprep.subr.mxu0 %v702
    %4266 = vmatpush1.msra.mxu0 %v701
    %4267 = vmatprep.subr.mxu0 %v706
    %4268 = vmatpush1.msra.mxu0 %v705
    %4269 = vmatprep.subr.mxu0 %v710
    %4270 = vmatpush1.msra.mxu0 %v709
    %4271 = vmatprep.subr.mxu0 %v714
    %4272 = vmatpush1.msra.mxu0 %v713
    %4273 = vmatprep.subr.mxu0 %v718
    %4274 = vmatpush1.msra.mxu0 %v717
    %4275 = vmatprep.subr.mxu0 %v722
    %4276 = vmatpush1.msra.mxu0 %v721
    %4277 = vmatprep.subr.mxu0 %v726
    %4278 = vmatpush1.msra.mxu0 %v725
    %4279 = vmatprep.subr.mxu0 %v730
    %4280 = vmatpush1.msra.mxu0 %v729
    %4281 = vmatprep.subr.mxu0 %v734
    %4282 = vmatpush1.msra.mxu0 %v733
    %4283 = vmatprep.subr.mxu0 %v738
    %4284 = vmatpush1.msra.mxu0 %v737
    %4285 = vmatprep.subr.mxu0 %v742
    %4286 = vmatpush1.msra.mxu0 %v741
    %4287 = vmatprep.subr.mxu0 %v746
    %4288 = vmatpush1.msra.mxu0 %v745
    %4289 = vmatprep.subr.mxu0 %v750
    %4290 = vmatpush1.msra.mxu0 %v749
    %4291 = vmatprep.subr.mxu0 %v754
    %4292 = vmatpush1.msra.mxu0 %v753
    %4293 = vmatprep.subr.mxu0 %v758
    %4294 = vmatpush1.msra.mxu0 %v757
    %4295 = vmatprep.subr.mxu0 %v762
    %4296 = vmatpush1.msra.mxu0 %v761
    %4297 = vmatprep.subr.mxu0 %v766
    %4298 = vmatpush1.msra.mxu0 %v765
    %4299 = vmatprep.subr.mxu0 %v770
    %4300 = vmatpush1.msra.mxu0 %v769
    %4301 = vmatprep.subr.mxu0 %v774
    %4302 = vmatpush1.msra.mxu0 %v773
    %4303 = vmatprep.subr.mxu0 %v778
    %4304 = vmatpush1.msra.mxu0 %v777
    %4305 = vmatprep.subr.mxu0 %v782
    %4306 = vmatpush1.msra.mxu0 %v781
    %4307 = vmatprep.subr.mxu0 %v786
    %4308 = vmatpush1.msra.mxu0 %v785
    %4309 = vmatprep.subr.mxu0 %v790
    %4310 = vmatpush1.msra.mxu0 %v789
    %4311 = vmatprep.subr.mxu0 %v794
    %4312 = vmatpush1.msra.mxu0 %v793
    %4313 = vmatprep.subr.mxu0 %v798
    %4314 = vmatpush1.msra.mxu0 %v797
    %4315 = vmatprep.subr.mxu0 %v802
    %4316 = vmatpush1.msra.mxu0 %v801
    %4317 = vmatprep.mubr.f32.mxu0 %v3859
    %4318 = vmatmul.mubr.f32.gmra.mrb[0].mxu0 %v4181
    %v4319 = vpop.f32.mrb[0].mxu0
    %v4320 = vadd.f32 %v806, %v4319
    %v4321 = vpop.f32.mrb[0].mxu0
    %v4322 = vadd.f32 %v807, %v4321
    %4323 = vdwg.mxu0
    %v4324 = vmul.f32 %v4249, 0.5
    %v4325 = vtanh.pop %v4324
    %v4326 = vadd.f32 %v4325, 1.0
    %v4327 = vmul.f32 %v4326, 0.5
    %v4328 = vmul.f32 %v4251, 0.5
    %v4329 = vtanh.pop %v4328
    %v4330 = vadd.f32 %v4329, 1.0
    %v4331 = vmul.f32 %v4330, 0.5
    %v4332 = vtanh.pop %v4320
    %v4333 = vmul.f32 %v4322, 0.5
    %v4334 = vtanh.pop %v4333
    %v4335 = vadd.f32 %v4334, 1.0
    %v4336 = vmul.f32 %v4335, 0.5
    %v4337 = vmul.f32 %v4331, %v3857
    %v4338 = vmul.f32 %v4327, %v4332
    %v4339 = vadd.f32 %v4337, %v4338
    %v4340 = vtanh.pop %v4339
    %v4341 = vmul.f32 %v4336, %v4340
    %v4342 = vld [vmem:[#allocation8] sm:$0xff]
    %v4343 = vld [vmem:[#allocation8 + $0x8] sm:$0xff]
    %v4344 = vld [vmem:[#allocation8 + $0x10] sm:$0xff]
    %v4345 = vld [vmem:[#allocation8 + $0x18] sm:$0xff]
    %v4346 = vld [vmem:[#allocation8 + $0x20] sm:$0xff]
    %v4347 = vld [vmem:[#allocation8 + $0x28] sm:$0xff]
    %v4348 = vld [vmem:[#allocation8 + $0x30] sm:$0xff]
    %v4349 = vld [vmem:[#allocation8 + $0x38] sm:$0xff]
    %v4350 = vld [vmem:[#allocation8 + $0x40] sm:$0xff]
    %v4351 = vld [vmem:[#allocation8 + $0x48] sm:$0xff]
    %v4352 = vld [vmem:[#allocation8 + $0x50] sm:$0xff]
    %v4353 = vld [vmem:[#allocation8 + $0x58] sm:$0xff]
    %v4354 = vld [vmem:[#allocation8 + $0x60] sm:$0xff]
    %v4355 = vld [vmem:[#allocation8 + $0x68] sm:$0xff]
    %v4356 = vld [vmem:[#allocation8 + $0x70] sm:$0xff]
    %v4357 = vld [vmem:[#allocation8 + $0x78] sm:$0xff]
    %v4358 = vld [vmem:[#allocation10] sm:$0xff]
    %4359 = vmatprep.subr.mxu0 0.0
    %4360 = vmatpush1.msra.mxu0 %v4342
    %4361 = vmatprep.subr.mxu0 0.0
    %4362 = vmatpush1.msra.mxu0 %v4343
    %4363 = vmatprep.subr.mxu0 0.0
    %4364 = vmatpush1.msra.mxu0 %v4344
    %4365 = vmatprep.subr.mxu0 0.0
    %4366 = vmatpush1.msra.mxu0 %v4345
    %4367 = vmatprep.subr.mxu0 0.0
    %4368 = vmatpush1.msra.mxu0 %v4346
    %4369 = vmatprep.subr.mxu0 0.0
    %4370 = vmatpush1.msra.mxu0 %v4347
    %4371 = vmatprep.subr.mxu0 0.0
    %4372 = vmatpush1.msra.mxu0 %v4348
    %4373 = vmatprep.subr.mxu0 0.0
    %4374 = vmatpush1.msra.mxu0 %v4349
    %4375 = vmatprep.subr.mxu0 0.0
    %4376 = vmatpush1.msra.mxu0 %v4350
    %4377 = vmatprep.subr.mxu0 0.0
    %4378 = vmatpush1.msra.mxu0 %v4351
    %4379 = vmatprep.subr.mxu0 0.0
    %4380 = vmatpush1.msra.mxu0 %v4352
    %4381 = vmatprep.subr.mxu0 0.0
    %4382 = vmatpush1.msra.mxu0 %v4353
    %4383 = vmatprep.subr.mxu0 0.0
    %4384 = vmatpush1.msra.mxu0 %v4354
    %4385 = vmatprep.subr.mxu0 0.0
    %4386 = vmatpush1.msra.mxu0 %v4355
    %4387 = vmatprep.subr.mxu0 0.0
    %4388 = vmatpush1.msra.mxu0 %v4356
    %4389 = vmatprep.subr.mxu0 0.0
    %4390 = vmatpush1.msra.mxu0 %v4357
    %4391 = vmatprep.subr.mxu0 0.0
    %4392 = vmatpush1.msra.mxu0 0.0
    %4393 = vmatprep.subr.mxu0 0.0
    %4394 = vmatpush1.msra.mxu0 0.0
    %4395 = vmatprep.subr.mxu0 0.0
    %4396 = vmatpush1.msra.mxu0 0.0
    %4397 = vmatprep.subr.mxu0 0.0
    %4398 = vmatpush1.msra.mxu0 0.0
    %4399 = vmatprep.subr.mxu0 0.0
    %4400 = vmatpush1.msra.mxu0 0.0
    %4401 = vmatprep.subr.mxu0 0.0
    %4402 = vmatpush1.msra.mxu0 0.0
    %4403 = vmatprep.subr.mxu0 0.0
    %4404 = vmatpush1.msra.mxu0 0.0
    %4405 = vmatprep.subr.mxu0 0.0
    %4406 = vmatpush1.msra.mxu0 0.0
    %4407 = vmatprep.subr.mxu0 0.0
    %4408 = vmatpush1.msra.mxu0 0.0
    %4409 = vmatprep.subr.mxu0 0.0
    %4410 = vmatpush1.msra.mxu0 0.0
    %4411 = vmatprep.subr.mxu0 0.0
    %4412 = vmatpush1.msra.mxu0 0.0
    %4413 = vmatprep.subr.mxu0 0.0
    %4414 = vmatpush1.msra.mxu0 0.0
    %4415 = vmatprep.subr.mxu0 0.0
    %4416 = vmatpush1.msra.mxu0 0.0
    %4417 = vmatprep.subr.mxu0 0.0
    %4418 = vmatpush1.msra.mxu0 0.0
    %4419 = vmatprep.subr.mxu0 0.0
    %4420 = vmatpush1.msra.mxu0 0.0
    %4421 = vmatprep.subr.mxu0 0.0
    %4422 = vmatpush1.msra.mxu0 0.0
    %4423 = vmatprep.mubr.f32.mxu0 0.0
    %4424 = vmatmul.mubr.f32.gmra.mrb[0].mxu0 %v4341
    %v4425 = vpop.f32.mrb[0].mxu0
    %v4426 = vadd.f32 %v4358, %v4425
    %v4427 = vpop.f32.mrb[0].mxu0
    %4428 = vdwg.mxu0
    %4429 = vst [vmem:[#allocation11] sm:$0xff] %v4426
    // Predicated region
    $region42: #{tpu_custom_call.1} parent=1 // pred_check
      _
    $region43: #{tpu_custom_call.1} parent=1 // pred_check_branch
      %4431 = sbr.rel (0) target = $region45
    $region44: #{tpu_custom_call.1} parent=1 // pred_region
      %s4433 = ssub.s32 128, 128
      %4434 = vsyncadd [#allocation4], %s4433
      %s4436 = sshll.u32 [#allocation11], 4
      %s4437 = int_to_ptr.vmem [resolvable:$true] %s4436
      %4439 = dma.vmem_to_hbm [thread:$0]  %s4437, 128, %s5, [#allocation4]
    $region45: #{tpu_custom_call.1} parent=1 // pred_fallthru
      _
    // Predicated region
    $region46: #{tpu_custom_call.1} parent=1 // pred_check
      _
    $region47: #{tpu_custom_call.1} parent=1 // pred_check_branch
      %4441 = sbr.rel (0) target = $region49
    $region48: #{tpu_custom_call.1} parent=1 // pred_region
      %4442 = dma.done [#allocation4], 128
    $region49: #{tpu_custom_call.1} parent=1 // pred_fallthru
      _
    %4443 = vsyncpa [#allocation3], 1
    %4444 = vsyncpa [#allocation6], 1
    %4445 = vsyncpa [#allocation9], 1
    %4446 = vsyncpa [#allocation4], 1

</llo_original>
